<compile_context>
chip_gen: v7x
topology: tpu7x:2x2x1
jax: 0.10.0
libtpu: 0.0.40
codegen_flags: <defaults>
</compile_context>

<pallas_src>
import functools

import numpy as np
import jax
import jax.numpy as jnp
from jax import lax
from jax.experimental import pallas as pl
from jax.experimental.pallas import tpu as pltpu


# --------------------------------------------------------------------------------------
# Pallas kernel: one batch element per grid step, fully fused.
# --------------------------------------------------------------------------------------
def resnet_block_kernel(x_ref, s1_ref, b1_ref, w1f_ref,
                        s2_ref, b2f_ref, w2f_ref,
                        wm_ref, bfin_ref,
                        o_ref,
                        pk1_ref, pk2_ref):
    _, H, W, Cin = x_ref.shape
    Cout = wm_ref.shape[1]
    HW = H * W

    x_bf = x_ref[0]                              # (H, W, Cin) bf16 (MXU operand dtype)
    x3 = x_bf.astype(jnp.float32)                # elementwise math in f32 (v5e: no bf16 VPU/EUP)

    # ---- normlize_1 (BatchNorm2d eval, folded to per-channel scale/shift) + SiLU ----
    h1 = x3 * s1_ref[...] + b1_ref[...]          # (1, Cin) broadcasts over (H, W, Cin)
    h1 = h1 * jax.nn.sigmoid(h1)                 # SiLU

    def build_kw_folded(a3, pk_ref):
        """Store a3 (H, W, C) into pk_ref ((H+2)*W, 3C) with kw folded onto lanes.

        pk row q = r*W + w (r = padded-row index in [0, H+2)); lanes [kw*C:(kw+1)*C]
        hold a3[r-1, w+kw-1, :], zero where out of range.  Only two aligned border-row
        stores; the kw=+/-1 shifts are built in the value domain (zero-column concat --
        pltpu.roll on the sublane axis would be an equivalent XLU-side alternative).
        """
        C = a3.shape[-1]
        zc = jnp.zeros((H, 1, C), a3.dtype)
        left = jnp.concatenate([zc, a3[:, :W - 1, :]], axis=1)     # a3[:, w-1, :]
        right = jnp.concatenate([a3[:, 1:, :], zc], axis=1)        # a3[:, w+1, :]
        flat = jnp.concatenate([left, a3, right], axis=2)          # (H, W, 3C)
        flat = flat.astype(pk_ref.dtype).reshape(HW, 3 * C)        # leading-dim merge only
        zrow = jnp.zeros((W, 3 * C), pk_ref.dtype)
        pk_ref[0:W, :] = zrow                                       # padded row 0
        pk_ref[(H + 1) * W:(H + 2) * W, :] = zrow                   # padded row H+1
        pk_ref[W:(H + 1) * W, :] = flat                             # padded rows 1..H
        return flat

    def conv3x3(pk_ref, mid_flat, wf_ref):
        """3x3 'same' conv as 3 matmuls with K = 3C; partial sums stay in vregs."""
        acc = jnp.dot(mid_flat, wf_ref[1], preferred_element_type=jnp.float32)
        acc = acc + jnp.dot(pk_ref[0:HW, :], wf_ref[0],
                            preferred_element_type=jnp.float32)
        acc = acc + jnp.dot(pk_ref[2 * W:(H + 2) * W, :], wf_ref[2],
                            preferred_element_type=jnp.float32)
        return acc                                                  # (H*W, Cout) f32

    # ---- conv_1 (its bias is folded into BN2's shift, so none added here) ----
    mid1 = build_kw_folded(h1, pk1_ref)
    c1 = conv3x3(pk1_ref, mid1, w1f_ref)

    # ---- normlize_2 (folded BN + folded conv_1 bias) + SiLU ----
    h2 = c1 * s2_ref[...] + b2f_ref[...]          # (H*W, Cout) * / + (1, Cout)
    h2 = h2 * jax.nn.sigmoid(h2)
    # Dropout2d(p) is identity in eval mode.
    # TODO(synk): training-mode Dropout2d (per-channel Bernoulli mask) not implemented.

    # ---- conv_2 ----
    mid2 = build_kw_folded(h2.reshape(H, W, Cout), pk2_ref)
    c2 = conv3x3(pk2_ref, mid2, w2f_ref)

    # ---- shortcut: match_input = 1x1 conv on the ORIGINAL x; single fused bias add ----
    sc = jnp.dot(x_bf.reshape(HW, Cin), wm_ref[...],
                 preferred_element_type=jnp.float32)
    out = c2 + sc + bfin_ref[...]                 # bfin = conv_2 bias + match bias

    # attention is nn.Identity() for apply_attention=False (module default).
    # TODO(synk): AttentionBlock (GroupNorm + MHSA) for apply_attention=True not implemented.

    # ---- lane-dense output store: (H*W, Cout) -> (1, H, W*Cout) ----
    # Built from per-column lane concats (guaranteed to lower; a direct reshape would be
    # a sublane->lane relayout).  Final stores are W*Cout lanes wide instead of Cout-lane
    # masked stores.  For Cout >= 128 this packing could be skipped.
    out3 = out.reshape(H, W, Cout)                # leading-dim split only
    out_dense = jnp.concatenate([out3[:, w, :] for w in range(W)], axis=-1)
    o_ref[...] = out_dense.reshape(1, H, W * Cout)


# --------------------------------------------------------------------------------------
# Wrapper: NCHW <-> NHWC plumbing, weight reshapes / bf16 casts, bias folding, pallas_call.
# --------------------------------------------------------------------------------------
def _vmem_limit_bytes():
    """~3/4 of physical VMEM: ~48 MiB on v7x (64 MiB/TC), ~96 MiB on v5e/v6e (128 MiB)."""
    try:
        cap = int(pltpu.get_tpu_info().vmem_capacity_bytes)
    except Exception:
        cap = 64 * 1024 * 1024
    return (3 * cap) // 4


def resnet_block_forward(x_nchw, params):
    B, Cin, H, W = x_nchw.shape
    Cout = params["w1"].shape[-1]

    # MXU operands (x, conv / match weights) as bf16; BN scale/shift and folded biases
    # stay f32; all elementwise math in the kernel is f32.
    x = jnp.transpose(x_nchw, (0, 2, 3, 1)).astype(jnp.bfloat16)   # NHWC

    # kw folded into the contraction: (3, 3, C, Co) -> (3, 3C, Co).
    w1f = params["w1"].astype(jnp.bfloat16).reshape(3, 3 * Cin, Cout)
    w2f = params["w2"].astype(jnp.bfloat16).reshape(3, 3 * Cout, Cout)
    wm = params["wm"].astype(jnp.bfloat16)

    # Bias folding: conv_1 bias into BN2's shift; conv_2 + match biases into one add.
    b2f = params["b2"] + params["s2"] * params["cb1"]
    bfin = params["cb2"] + params["bm"]

    def full_spec(shape):
        return pl.BlockSpec(shape, lambda b, _n=len(shape): (0,) * _n)

    in_specs = [
        pl.BlockSpec((1, H, W, Cin), lambda b: (b, 0, 0, 0)),    # x (bf16)
        full_spec((1, Cin)), full_spec((1, Cin)),                # BN1 scale / shift (f32)
        full_spec((3, 3 * Cin, Cout)),                           # conv_1 weight, kw-folded (bf16)
        full_spec((1, Cout)), full_spec((1, Cout)),              # BN2 scale / shift(+cb1) (f32)
        full_spec((3, 3 * Cout, Cout)),                          # conv_2 weight, kw-folded (bf16)
        full_spec((Cin, Cout)), full_spec((1, Cout)),            # match weight (bf16) / final bias
    ]

    out_flat = pl.pallas_call(
        resnet_block_kernel,
        out_shape=jax.ShapeDtypeStruct((B, H, W * Cout), jnp.float32),
        grid=(B,),
        in_specs=in_specs,
        out_specs=pl.BlockSpec((1, H, W * Cout), lambda b: (b, 0, 0)),
        scratch_shapes=[
            pltpu.VMEM(((H + 2) * W, 3 * Cin), jnp.bfloat16),    # kw-folded pad slab, conv_1
            pltpu.VMEM(((H + 2) * W, 3 * Cout), jnp.bfloat16),   # kw-folded pad slab, conv_2
        ],
        compiler_params=pltpu.CompilerParams(
            dimension_semantics=("parallel",),
            vmem_limit_bytes=_vmem_limit_bytes(),
        ),
        # TODO(synk): for large images on v7x, add an H-band grid axis with a 2-row input
        # halo (manual DMA) so the pad slabs shrink and each image gets >1 pipeline step;
        # then pl.Buffered(3) on the x spec if the input DMA is still exposed.
    )(x, params["s1"], params["b1"], w1f, params["s2"], b2f, w2f, wm, bfin)

    # (B, H, W*Cout) -> NHWC is a pure metadata reshape; then back to NCHW like PyTorch.
    out_nhwc = out_flat.reshape(B, H, W, Cout)
    return jnp.transpose(out_nhwc, (0, 3, 1, 2))


# --------------------------------------------------------------------------------------
# Deterministic synthetic parameters (shapes from ResnetBlock.__init__), inference-mode
# BatchNorm folded to per-channel scale/shift.
# --------------------------------------------------------------------------------------
def init_params(key, c_in, c_out, eps=1e-5):
    ks = jax.random.split(key, 14)

    def fold_bn(kg, kb, km, kv, c):
        gamma = 1.0 + 0.1 * jax.random.normal(kg, (c,), jnp.float32)
        beta = 0.1 * jax.random.normal(kb, (c,), jnp.float32)
        mean = 0.1 * jax.random.normal(km, (c,), jnp.float32)
        var = jnp.abs(1.0 + 0.1 * jax.random.normal(kv, (c,), jnp.float32))
        scale = gamma / jnp.sqrt(var + eps)
        shift = beta - mean * scale
        return scale.reshape(1, c), shift.reshape(1, c)

    if c_in > 1:
        s1, b1 = fold_bn(ks[0], ks[1], ks[2], ks[3], c_in)
    else:   # normlize_1 = nn.Identity() when in_channels == 1
        s1, b1 = jnp.ones((1, c_in), jnp.float32), jnp.zeros((1, c_in), jnp.float32)
    s2, b2 = fold_bn(ks[4], ks[5], ks[6], ks[7], c_out)

    w1 = jax.random.normal(ks[8], (3, 3, c_in, c_out), jnp.float32) / np.sqrt(9 * c_in)
    cb1 = 0.1 * jax.random.normal(ks[9], (1, c_out), jnp.float32)
    w2 = jax.random.normal(ks[10], (3, 3, c_out, c_out), jnp.float32) / np.sqrt(9 * c_out)
    cb2 = 0.1 * jax.random.normal(ks[11], (1, c_out), jnp.float32)
    if c_in != c_out:
        wm = jax.random.normal(ks[12], (c_in, c_out), jnp.float32) / np.sqrt(c_in)
        bm = 0.1 * jax.random.normal(ks[13], (1, c_out), jnp.float32)
    else:   # match_input = nn.Identity(): identity 1x1 weight reproduces x exactly
        wm = jnp.eye(c_in, dtype=jnp.float32)
        bm = jnp.zeros((1, c_out), jnp.float32)

    return dict(s1=s1, b1=b1, w1=w1, cb1=cb1,
                s2=s2, b2=b2, w2=w2, cb2=cb2,
                wm=wm, bm=bm)


# Pure-JAX reference mirroring the kernel's precision choices (bf16 MXU inputs, f32
# accumulation, f32 elementwise) for a correctness check.
def reference_forward(x_nchw, params):
    x_bf = jnp.transpose(x_nchw, (0, 2, 3, 1)).astype(jnp.bfloat16)   # NHWC, bf16-rounded
    x = x_bf.astype(jnp.float32)
    w1 = params["w1"].astype(jnp.bfloat16)
    w2 = params["w2"].astype(jnp.bfloat16)
    wm = params["wm"].astype(jnp.bfloat16)

    h = x * params["s1"] + params["b1"]
    h = h * jax.nn.sigmoid(h)
    h = lax.conv_general_dilated(h.astype(jnp.bfloat16), w1, (1, 1), "SAME",
                                 dimension_numbers=("NHWC", "HWIO", "NHWC"),
                                 preferred_element_type=jnp.float32) + params["cb1"]
    h = h * params["s2"] + params["b2"]
    h = h * jax.nn.sigmoid(h)
    h = lax.conv_general_dilated(h.astype(jnp.bfloat16), w2, (1, 1), "SAME",
                                 dimension_numbers=("NHWC", "HWIO", "NHWC"),
                                 preferred_element_type=jnp.float32) + params["cb2"]
    sc = jnp.einsum("bhwc,cd->bhwd", x_bf, wm,
                    preferred_element_type=jnp.float32) + params["bm"]
    out = h + sc
    return jnp.transpose(out, (0, 3, 1, 2))


if __name__ == "__main__":
    key = jax.random.PRNGKey(0)
    kx, kp = jax.random.split(key)

    B, C_IN, C_OUT, H, W = 2, 4, 8, 16, 16
    x = jax.random.normal(kx, (B, C_IN, H, W), jnp.float32)   # NCHW, like PyTorch
    params = init_params(kp, C_IN, C_OUT)

    fwd = jax.jit(functools.partial(resnet_block_forward, params=params))
    out = jax.block_until_ready(fwd(x))

    ref = jax.block_until_ready(reference_forward(x, params))
    np.testing.assert_allclose(np.asarray(out), np.asarray(ref), rtol=1e-2, atol=1e-2)

    print("KERNEL_OK")
</pallas_src>

<mosaic_0001>
module attributes {stable_mosaic.version = 11 : i64} {
  func.func @resnet_block_kernel(%arg0: i32, %arg1: memref<1x16x16x4xbf16, #tpu.memory_space<vmem>>, %arg2: memref<1x4xf32, #tpu.memory_space<vmem>>, %arg3: memref<1x4xf32, #tpu.memory_space<vmem>>, %arg4: memref<3x12x8xbf16, #tpu.memory_space<vmem>>, %arg5: memref<1x8xf32, #tpu.memory_space<vmem>>, %arg6: memref<1x8xf32, #tpu.memory_space<vmem>>, %arg7: memref<3x24x8xbf16, #tpu.memory_space<vmem>>, %arg8: memref<4x8xbf16, #tpu.memory_space<vmem>>, %arg9: memref<1x8xf32, #tpu.memory_space<vmem>>, %arg10: memref<1x16x128xf32, #tpu.memory_space<vmem>>, %arg11: memref<288x12xbf16, #tpu.memory_space<vmem>>, %arg12: memref<288x24xbf16, #tpu.memory_space<vmem>>) attributes {dimension_semantics = [#tpu.dimension_semantics<parallel>], iteration_bounds = array<i64: 2>, scalar_prefetch = 0 : i64, scratch_operands = 2 : i64, tpu.core_type = #tpu.core_type<tc>, window_params = [{transform_indices = @transform_0, window_bounds = array<i64: 1, 16, 16, 4>}, {pipeline_mode = #tpu.pipeline_mode<synchronous>, transform_indices = @transform_1, window_bounds = array<i64: 1, 4>}, {pipeline_mode = #tpu.pipeline_mode<synchronous>, transform_indices = @transform_2, window_bounds = array<i64: 1, 4>}, {pipeline_mode = #tpu.pipeline_mode<synchronous>, transform_indices = @transform_3, window_bounds = array<i64: 3, 12, 8>}, {pipeline_mode = #tpu.pipeline_mode<synchronous>, transform_indices = @transform_4, window_bounds = array<i64: 1, 8>}, {pipeline_mode = #tpu.pipeline_mode<synchronous>, transform_indices = @transform_5, window_bounds = array<i64: 1, 8>}, {pipeline_mode = #tpu.pipeline_mode<synchronous>, transform_indices = @transform_6, window_bounds = array<i64: 3, 24, 8>}, {pipeline_mode = #tpu.pipeline_mode<synchronous>, transform_indices = @transform_7, window_bounds = array<i64: 4, 8>}, {pipeline_mode = #tpu.pipeline_mode<synchronous>, transform_indices = @transform_8, window_bounds = array<i64: 1, 8>}, {transform_indices = @transform_9, window_bounds = array<i64: 1, 16, 128>}]} {
    %c0 = arith.constant 0 : index
    %c0_0 = arith.constant 0 : index
    %c0_1 = arith.constant 0 : index
    %c0_2 = arith.constant 0 : index
    %0 = vector.load %arg1[%c0, %c0_0, %c0_1, %c0_2] : memref<1x16x16x4xbf16, #tpu.memory_space<vmem>>, vector<1x16x16x4xbf16>
    %1 = vector.shape_cast %0 : vector<1x16x16x4xbf16> to vector<16x16x4xbf16>
    %2 = arith.extf %1 : vector<16x16x4xbf16> to vector<16x16x4xf32>
    %c0_3 = arith.constant 0 : index
    %c0_4 = arith.constant 0 : index
    %3 = vector.load %arg2[%c0_3, %c0_4] : memref<1x4xf32, #tpu.memory_space<vmem>>, vector<1x4xf32>
    %4 = vector.shape_cast %3 : vector<1x4xf32> to vector<1x1x4xf32>
    %5 = vector.broadcast %4 : vector<1x1x4xf32> to vector<16x16x4xf32>
    %6 = arith.mulf %2, %5 : vector<16x16x4xf32>
    %c0_5 = arith.constant 0 : index
    %c0_6 = arith.constant 0 : index
    %7 = vector.load %arg3[%c0_5, %c0_6] : memref<1x4xf32, #tpu.memory_space<vmem>>, vector<1x4xf32>
    %8 = vector.shape_cast %7 : vector<1x4xf32> to vector<1x1x4xf32>
    %9 = vector.broadcast %8 : vector<1x1x4xf32> to vector<16x16x4xf32>
    %10 = arith.addf %6, %9 : vector<16x16x4xf32>
    %11 = arith.negf %10 : vector<16x16x4xf32>
    %12 = math.exp %11 : vector<16x16x4xf32>
    %cst = arith.constant 1.000000e+00 : f32
    %13 = vector.broadcast %cst : f32 to vector<16x16x4xf32>
    %14 = arith.addf %13, %12 : vector<16x16x4xf32>
    %15 = arith.divf %13, %14 : vector<16x16x4xf32>
    %16 = arith.mulf %10, %15 : vector<16x16x4xf32>
    %cst_7 = arith.constant 0.000000e+00 : f32
    %17 = vector.broadcast %cst_7 : f32 to vector<16x1x4xf32>
    %18 = vector.extract_strided_slice %16 {offsets = [0, 0, 0], sizes = [16, 15, 4], strides = [1, 1, 1]} : vector<16x16x4xf32> to vector<16x15x4xf32>
    %19 = tpu.concatenate %17, %18 in 1 : vector<16x1x4xf32>, vector<16x15x4xf32> -> vector<16x16x4xf32>
    %20 = vector.extract_strided_slice %16 {offsets = [0, 1, 0], sizes = [16, 15, 4], strides = [1, 1, 1]} : vector<16x16x4xf32> to vector<16x15x4xf32>
    %21 = tpu.concatenate %20, %17 in 1 : vector<16x15x4xf32>, vector<16x1x4xf32> -> vector<16x16x4xf32>
    %22 = tpu.concatenate %19, %16, %21 in 2 : vector<16x16x4xf32>, vector<16x16x4xf32>, vector<16x16x4xf32> -> vector<16x16x12xf32>
    %23 = arith.truncf %22 : vector<16x16x12xf32> to vector<16x16x12xbf16>
    %24 = vector.shape_cast %23 : vector<16x16x12xbf16> to vector<256x12xbf16>
    %cst_8 = arith.constant 0.000000e+00 : bf16
    %25 = vector.broadcast %cst_8 : bf16 to vector<16x12xbf16>
    %c0_9 = arith.constant 0 : index
    %c0_10 = arith.constant 0 : index
    %26 = vector.load %arg11[%c0_9, %c0_10] : memref<288x12xbf16, #tpu.memory_space<vmem>>, vector<16x12xbf16>
    tpu.vector_store %arg11[%c0_9, %c0_10], %25 {strides = array<i32>} : memref<288x12xbf16, #tpu.memory_space<vmem>>, vector<16x12xbf16>,
    %c272 = arith.constant 272 : index
    %c0_11 = arith.constant 0 : index
    %27 = vector.load %arg11[%c272, %c0_11] : memref<288x12xbf16, #tpu.memory_space<vmem>>, vector<16x12xbf16>
    tpu.vector_store %arg11[%c272, %c0_11], %25 {strides = array<i32>} : memref<288x12xbf16, #tpu.memory_space<vmem>>, vector<16x12xbf16>,
    %c16 = arith.constant 16 : index
    %c0_12 = arith.constant 0 : index
    %28 = vector.load %arg11[%c16, %c0_12] : memref<288x12xbf16, #tpu.memory_space<vmem>>, vector<256x12xbf16>
    tpu.vector_store %arg11[%c16, %c0_12], %24 {strides = array<i32>} : memref<288x12xbf16, #tpu.memory_space<vmem>>, vector<256x12xbf16>,
    %c1 = arith.constant 1 : index
    %c0_13 = arith.constant 0 : index
    %c0_14 = arith.constant 0 : index
    %29 = vector.load %arg4[%c1, %c0_13, %c0_14] : memref<3x12x8xbf16, #tpu.memory_space<vmem>>, vector<1x12x8xbf16>
    %30 = vector.shape_cast %29 : vector<1x12x8xbf16> to vector<12x8xbf16>
    %cst_15 = arith.constant dense<0.000000e+00> : vector<256x8xf32>
    %31 = tpu.matmul %24, %30, %cst_15 {dimension_numbers = #tpu.dot_dimension_numbers<[1], [0], [0], [1], [0, 0, 1, 1], [], []>} : vector<256x12xbf16>, vector<12x8xbf16>, vector<256x8xf32> -> vector<256x8xf32>
    %c0_16 = arith.constant 0 : index
    %c0_17 = arith.constant 0 : index
    %32 = vector.load %arg11[%c0_16, %c0_17] : memref<288x12xbf16, #tpu.memory_space<vmem>>, vector<256x12xbf16>
    %c0_18 = arith.constant 0 : index
    %c0_19 = arith.constant 0 : index
    %c0_20 = arith.constant 0 : index
    %33 = vector.load %arg4[%c0_18, %c0_19, %c0_20] : memref<3x12x8xbf16, #tpu.memory_space<vmem>>, vector<1x12x8xbf16>
    %34 = vector.shape_cast %33 : vector<1x12x8xbf16> to vector<12x8xbf16>
    %cst_21 = arith.constant dense<0.000000e+00> : vector<256x8xf32>
    %35 = tpu.matmul %32, %34, %cst_21 {dimension_numbers = #tpu.dot_dimension_numbers<[1], [0], [0], [1], [0, 0, 1, 1], [], []>} : vector<256x12xbf16>, vector<12x8xbf16>, vector<256x8xf32> -> vector<256x8xf32>
    %36 = arith.addf %31, %35 : vector<256x8xf32>
    %c32 = arith.constant 32 : index
    %c0_22 = arith.constant 0 : index
    %37 = vector.load %arg11[%c32, %c0_22] : memref<288x12xbf16, #tpu.memory_space<vmem>>, vector<256x12xbf16>
    %c2 = arith.constant 2 : index
    %c0_23 = arith.constant 0 : index
    %c0_24 = arith.constant 0 : index
    %38 = vector.load %arg4[%c2, %c0_23, %c0_24] : memref<3x12x8xbf16, #tpu.memory_space<vmem>>, vector<1x12x8xbf16>
    %39 = vector.shape_cast %38 : vector<1x12x8xbf16> to vector<12x8xbf16>
    %cst_25 = arith.constant dense<0.000000e+00> : vector<256x8xf32>
    %40 = tpu.matmul %37, %39, %cst_25 {dimension_numbers = #tpu.dot_dimension_numbers<[1], [0], [0], [1], [0, 0, 1, 1], [], []>} : vector<256x12xbf16>, vector<12x8xbf16>, vector<256x8xf32> -> vector<256x8xf32>
    %41 = arith.addf %36, %40 : vector<256x8xf32>
    %c0_26 = arith.constant 0 : index
    %c0_27 = arith.constant 0 : index
    %42 = vector.load %arg5[%c0_26, %c0_27] : memref<1x8xf32, #tpu.memory_space<vmem>>, vector<1x8xf32>
    %43 = vector.broadcast %42 : vector<1x8xf32> to vector<256x8xf32>
    %44 = arith.mulf %41, %43 : vector<256x8xf32>
    %c0_28 = arith.constant 0 : index
    %c0_29 = arith.constant 0 : index
    %45 = vector.load %arg6[%c0_28, %c0_29] : memref<1x8xf32, #tpu.memory_space<vmem>>, vector<1x8xf32>
    %46 = vector.broadcast %45 : vector<1x8xf32> to vector<256x8xf32>
    %47 = arith.addf %44, %46 : vector<256x8xf32>
    %48 = arith.negf %47 : vector<256x8xf32>
    %49 = math.exp %48 : vector<256x8xf32>
    %cst_30 = arith.constant 1.000000e+00 : f32
    %50 = vector.broadcast %cst_30 : f32 to vector<256x8xf32>
    %51 = arith.addf %50, %49 : vector<256x8xf32>
    %52 = arith.divf %50, %51 : vector<256x8xf32>
    %53 = arith.mulf %47, %52 : vector<256x8xf32>
    %54 = vector.shape_cast %53 : vector<256x8xf32> to vector<16x16x8xf32>
    %cst_31 = arith.constant 0.000000e+00 : f32
    %55 = vector.broadcast %cst_31 : f32 to vector<16x1x8xf32>
    %56 = vector.extract_strided_slice %54 {offsets = [0, 0, 0], sizes = [16, 15, 8], strides = [1, 1, 1]} : vector<16x16x8xf32> to vector<16x15x8xf32>
    %57 = tpu.concatenate %55, %56 in 1 : vector<16x1x8xf32>, vector<16x15x8xf32> -> vector<16x16x8xf32>
    %58 = vector.extract_strided_slice %54 {offsets = [0, 1, 0], sizes = [16, 15, 8], strides = [1, 1, 1]} : vector<16x16x8xf32> to vector<16x15x8xf32>
    %59 = tpu.concatenate %58, %55 in 1 : vector<16x15x8xf32>, vector<16x1x8xf32> -> vector<16x16x8xf32>
    %60 = tpu.concatenate %57, %54, %59 in 2 : vector<16x16x8xf32>, vector<16x16x8xf32>, vector<16x16x8xf32> -> vector<16x16x24xf32>
    %61 = arith.truncf %60 : vector<16x16x24xf32> to vector<16x16x24xbf16>
    %62 = vector.shape_cast %61 : vector<16x16x24xbf16> to vector<256x24xbf16>
    %cst_32 = arith.constant 0.000000e+00 : bf16
    %63 = vector.broadcast %cst_32 : bf16 to vector<16x24xbf16>
    %c0_33 = arith.constant 0 : index
    %c0_34 = arith.constant 0 : index
    %64 = vector.load %arg12[%c0_33, %c0_34] : memref<288x24xbf16, #tpu.memory_space<vmem>>, vector<16x24xbf16>
    tpu.vector_store %arg12[%c0_33, %c0_34], %63 {strides = array<i32>} : memref<288x24xbf16, #tpu.memory_space<vmem>>, vector<16x24xbf16>,
    %c272_35 = arith.constant 272 : index
    %c0_36 = arith.constant 0 : index
    %65 = vector.load %arg12[%c272_35, %c0_36] : memref<288x24xbf16, #tpu.memory_space<vmem>>, vector<16x24xbf16>
    tpu.vector_store %arg12[%c272_35, %c0_36], %63 {strides = array<i32>} : memref<288x24xbf16, #tpu.memory_space<vmem>>, vector<16x24xbf16>,
    %c16_37 = arith.constant 16 : index
    %c0_38 = arith.constant 0 : index
    %66 = vector.load %arg12[%c16_37, %c0_38] : memref<288x24xbf16, #tpu.memory_space<vmem>>, vector<256x24xbf16>
    tpu.vector_store %arg12[%c16_37, %c0_38], %62 {strides = array<i32>} : memref<288x24xbf16, #tpu.memory_space<vmem>>, vector<256x24xbf16>,
    %c1_39 = arith.constant 1 : index
    %c0_40 = arith.constant 0 : index
    %c0_41 = arith.constant 0 : index
    %67 = vector.load %arg7[%c1_39, %c0_40, %c0_41] : memref<3x24x8xbf16, #tpu.memory_space<vmem>>, vector<1x24x8xbf16>
    %68 = vector.shape_cast %67 : vector<1x24x8xbf16> to vector<24x8xbf16>
    %cst_42 = arith.constant dense<0.000000e+00> : vector<256x8xf32>
    %69 = tpu.matmul %62, %68, %cst_42 {dimension_numbers = #tpu.dot_dimension_numbers<[1], [0], [0], [1], [0, 0, 1, 1], [], []>} : vector<256x24xbf16>, vector<24x8xbf16>, vector<256x8xf32> -> vector<256x8xf32>
    %c0_43 = arith.constant 0 : index
    %c0_44 = arith.constant 0 : index
    %70 = vector.load %arg12[%c0_43, %c0_44] : memref<288x24xbf16, #tpu.memory_space<vmem>>, vector<256x24xbf16>
    %c0_45 = arith.constant 0 : index
    %c0_46 = arith.constant 0 : index
    %c0_47 = arith.constant 0 : index
    %71 = vector.load %arg7[%c0_45, %c0_46, %c0_47] : memref<3x24x8xbf16, #tpu.memory_space<vmem>>, vector<1x24x8xbf16>
    %72 = vector.shape_cast %71 : vector<1x24x8xbf16> to vector<24x8xbf16>
    %cst_48 = arith.constant dense<0.000000e+00> : vector<256x8xf32>
    %73 = tpu.matmul %70, %72, %cst_48 {dimension_numbers = #tpu.dot_dimension_numbers<[1], [0], [0], [1], [0, 0, 1, 1], [], []>} : vector<256x24xbf16>, vector<24x8xbf16>, vector<256x8xf32> -> vector<256x8xf32>
    %74 = arith.addf %69, %73 : vector<256x8xf32>
    %c32_49 = arith.constant 32 : index
    %c0_50 = arith.constant 0 : index
    %75 = vector.load %arg12[%c32_49, %c0_50] : memref<288x24xbf16, #tpu.memory_space<vmem>>, vector<256x24xbf16>
    %c2_51 = arith.constant 2 : index
    %c0_52 = arith.constant 0 : index
    %c0_53 = arith.constant 0 : index
    %76 = vector.load %arg7[%c2_51, %c0_52, %c0_53] : memref<3x24x8xbf16, #tpu.memory_space<vmem>>, vector<1x24x8xbf16>
    %77 = vector.shape_cast %76 : vector<1x24x8xbf16> to vector<24x8xbf16>
    %cst_54 = arith.constant dense<0.000000e+00> : vector<256x8xf32>
    %78 = tpu.matmul %75, %77, %cst_54 {dimension_numbers = #tpu.dot_dimension_numbers<[1], [0], [0], [1], [0, 0, 1, 1], [], []>} : vector<256x24xbf16>, vector<24x8xbf16>, vector<256x8xf32> -> vector<256x8xf32>
    %79 = arith.addf %74, %78 : vector<256x8xf32>
    %80 = vector.shape_cast %1 : vector<16x16x4xbf16> to vector<256x4xbf16>
    %c0_55 = arith.constant 0 : index
    %c0_56 = arith.constant 0 : index
    %81 = vector.load %arg8[%c0_55, %c0_56] : memref<4x8xbf16, #tpu.memory_space<vmem>>, vector<4x8xbf16>
    %cst_57 = arith.constant dense<0.000000e+00> : vector<256x8xf32>
    %82 = tpu.matmul %80, %81, %cst_57 {dimension_numbers = #tpu.dot_dimension_numbers<[1], [0], [0], [1], [0, 0, 1, 1], [], []>} : vector<256x4xbf16>, vector<4x8xbf16>, vector<256x8xf32> -> vector<256x8xf32>
    %83 = arith.addf %79, %82 : vector<256x8xf32>
    %c0_58 = arith.constant 0 : index
    %c0_59 = arith.constant 0 : index
    %84 = vector.load %arg9[%c0_58, %c0_59] : memref<1x8xf32, #tpu.memory_space<vmem>>, vector<1x8xf32>
    %85 = vector.broadcast %84 : vector<1x8xf32> to vector<256x8xf32>
    %86 = arith.addf %83, %85 : vector<256x8xf32>
    %87 = vector.shape_cast %86 : vector<256x8xf32> to vector<16x16x8xf32>
    %88 = vector.extract_strided_slice %87 {offsets = [0, 0, 0], sizes = [16, 1, 8], strides = [1, 1, 1]} : vector<16x16x8xf32> to vector<16x1x8xf32>
    %89 = vector.shape_cast %88 : vector<16x1x8xf32> to vector<16x8xf32>
    %90 = vector.extract_strided_slice %87 {offsets = [0, 1, 0], sizes = [16, 1, 8], strides = [1, 1, 1]} : vector<16x16x8xf32> to vector<16x1x8xf32>
    %91 = vector.shape_cast %90 : vector<16x1x8xf32> to vector<16x8xf32>
    %92 = vector.extract_strided_slice %87 {offsets = [0, 2, 0], sizes = [16, 1, 8], strides = [1, 1, 1]} : vector<16x16x8xf32> to vector<16x1x8xf32>
    %93 = vector.shape_cast %92 : vector<16x1x8xf32> to vector<16x8xf32>
    %94 = vector.extract_strided_slice %87 {offsets = [0, 3, 0], sizes = [16, 1, 8], strides = [1, 1, 1]} : vector<16x16x8xf32> to vector<16x1x8xf32>
    %95 = vector.shape_cast %94 : vector<16x1x8xf32> to vector<16x8xf32>
    %96 = vector.extract_strided_slice %87 {offsets = [0, 4, 0], sizes = [16, 1, 8], strides = [1, 1, 1]} : vector<16x16x8xf32> to vector<16x1x8xf32>
    %97 = vector.shape_cast %96 : vector<16x1x8xf32> to vector<16x8xf32>
    %98 = vector.extract_strided_slice %87 {offsets = [0, 5, 0], sizes = [16, 1, 8], strides = [1, 1, 1]} : vector<16x16x8xf32> to vector<16x1x8xf32>
    %99 = vector.shape_cast %98 : vector<16x1x8xf32> to vector<16x8xf32>
    %100 = vector.extract_strided_slice %87 {offsets = [0, 6, 0], sizes = [16, 1, 8], strides = [1, 1, 1]} : vector<16x16x8xf32> to vector<16x1x8xf32>
    %101 = vector.shape_cast %100 : vector<16x1x8xf32> to vector<16x8xf32>
    %102 = vector.extract_strided_slice %87 {offsets = [0, 7, 0], sizes = [16, 1, 8], strides = [1, 1, 1]} : vector<16x16x8xf32> to vector<16x1x8xf32>
    %103 = vector.shape_cast %102 : vector<16x1x8xf32> to vector<16x8xf32>
    %104 = vector.extract_strided_slice %87 {offsets = [0, 8, 0], sizes = [16, 1, 8], strides = [1, 1, 1]} : vector<16x16x8xf32> to vector<16x1x8xf32>
    %105 = vector.shape_cast %104 : vector<16x1x8xf32> to vector<16x8xf32>
    %106 = vector.extract_strided_slice %87 {offsets = [0, 9, 0], sizes = [16, 1, 8], strides = [1, 1, 1]} : vector<16x16x8xf32> to vector<16x1x8xf32>
    %107 = vector.shape_cast %106 : vector<16x1x8xf32> to vector<16x8xf32>
    %108 = vector.extract_strided_slice %87 {offsets = [0, 10, 0], sizes = [16, 1, 8], strides = [1, 1, 1]} : vector<16x16x8xf32> to vector<16x1x8xf32>
    %109 = vector.shape_cast %108 : vector<16x1x8xf32> to vector<16x8xf32>
    %110 = vector.extract_strided_slice %87 {offsets = [0, 11, 0], sizes = [16, 1, 8], strides = [1, 1, 1]} : vector<16x16x8xf32> to vector<16x1x8xf32>
    %111 = vector.shape_cast %110 : vector<16x1x8xf32> to vector<16x8xf32>
    %112 = vector.extract_strided_slice %87 {offsets = [0, 12, 0], sizes = [16, 1, 8], strides = [1, 1, 1]} : vector<16x16x8xf32> to vector<16x1x8xf32>
    %113 = vector.shape_cast %112 : vector<16x1x8xf32> to vector<16x8xf32>
    %114 = vector.extract_strided_slice %87 {offsets = [0, 13, 0], sizes = [16, 1, 8], strides = [1, 1, 1]} : vector<16x16x8xf32> to vector<16x1x8xf32>
    %115 = vector.shape_cast %114 : vector<16x1x8xf32> to vector<16x8xf32>
    %116 = vector.extract_strided_slice %87 {offsets = [0, 14, 0], sizes = [16, 1, 8], strides = [1, 1, 1]} : vector<16x16x8xf32> to vector<16x1x8xf32>
    %117 = vector.shape_cast %116 : vector<16x1x8xf32> to vector<16x8xf32>
    %118 = vector.extract_strided_slice %87 {offsets = [0, 15, 0], sizes = [16, 1, 8], strides = [1, 1, 1]} : vector<16x16x8xf32> to vector<16x1x8xf32>
    %119 = vector.shape_cast %118 : vector<16x1x8xf32> to vector<16x8xf32>
    %120 = tpu.concatenate %89, %91, %93, %95, %97, %99, %101, %103, %105, %107, %109, %111, %113, %115, %117, %119 in 1 : vector<16x8xf32>, vector<16x8xf32>, vector<16x8xf32>, vector<16x8xf32>, vector<16x8xf32>, vector<16x8xf32>, vector<16x8xf32>, vector<16x8xf32>, vector<16x8xf32>, vector<16x8xf32>, vector<16x8xf32>, vector<16x8xf32>, vector<16x8xf32>, vector<16x8xf32>, vector<16x8xf32>, vector<16x8xf32> -> vector<16x128xf32>
    %121 = vector.shape_cast %120 : vector<16x128xf32> to vector<1x16x128xf32>
    %c0_60 = arith.constant 0 : index
    %c0_61 = arith.constant 0 : index
    %c0_62 = arith.constant 0 : index
    %122 = vector.load %arg10[%c0_60, %c0_61, %c0_62] : memref<1x16x128xf32, #tpu.memory_space<vmem>>, vector<1x16x128xf32>
    tpu.vector_store %arg10[%c0_60, %c0_61, %c0_62], %121 {strides = array<i32>} : memref<1x16x128xf32, #tpu.memory_space<vmem>>, vector<1x16x128xf32>,
    return
  }
  func.func @transform_0(%arg0: i32) -> (i32, i32, i32, i32) {
    %c0_i32 = arith.constant 0 : i32
    %c0_i32_0 = arith.constant 0 : i32
    %c0_i32_1 = arith.constant 0 : i32
    %c0_i32_2 = arith.constant 0 : i32
    return %arg0, %c0_i32, %c0_i32_0, %c0_i32_1 : i32, i32, i32, i32
  }
  func.func @transform_1(%arg0: i32) -> (i32, i32) {
    %c0_i32 = arith.constant 0 : i32
    %c0_i32_0 = arith.constant 0 : i32
    %c0_i32_1 = arith.constant 0 : i32
    return %c0_i32, %c0_i32_0 : i32, i32
  }
  func.func @transform_2(%arg0: i32) -> (i32, i32) {
    %c0_i32 = arith.constant 0 : i32
    %c0_i32_0 = arith.constant 0 : i32
    %c0_i32_1 = arith.constant 0 : i32
    return %c0_i32, %c0_i32_0 : i32, i32
  }
  func.func @transform_3(%arg0: i32) -> (i32, i32, i32) {
    %c0_i32 = arith.constant 0 : i32
    %c0_i32_0 = arith.constant 0 : i32
    %c0_i32_1 = arith.constant 0 : i32
    %c0_i32_2 = arith.constant 0 : i32
    return %c0_i32, %c0_i32_0, %c0_i32_1 : i32, i32, i32
  }
  func.func @transform_4(%arg0: i32) -> (i32, i32) {
    %c0_i32 = arith.constant 0 : i32
    %c0_i32_0 = arith.constant 0 : i32
    %c0_i32_1 = arith.constant 0 : i32
    return %c0_i32, %c0_i32_0 : i32, i32
  }
  func.func @transform_5(%arg0: i32) -> (i32, i32) {
    %c0_i32 = arith.constant 0 : i32
    %c0_i32_0 = arith.constant 0 : i32
    %c0_i32_1 = arith.constant 0 : i32
    return %c0_i32, %c0_i32_0 : i32, i32
  }
  func.func @transform_6(%arg0: i32) -> (i32, i32, i32) {
    %c0_i32 = arith.constant 0 : i32
    %c0_i32_0 = arith.constant 0 : i32
    %c0_i32_1 = arith.constant 0 : i32
    %c0_i32_2 = arith.constant 0 : i32
    return %c0_i32, %c0_i32_0, %c0_i32_1 : i32, i32, i32
  }
  func.func @transform_7(%arg0: i32) -> (i32, i32) {
    %c0_i32 = arith.constant 0 : i32
    %c0_i32_0 = arith.constant 0 : i32
    %c0_i32_1 = arith.constant 0 : i32
    return %c0_i32, %c0_i32_0 : i32, i32
  }
  func.func @transform_8(%arg0: i32) -> (i32, i32) {
    %c0_i32 = arith.constant 0 : i32
    %c0_i32_0 = arith.constant 0 : i32
    %c0_i32_1 = arith.constant 0 : i32
    return %c0_i32, %c0_i32_0 : i32, i32
  }
  func.func @transform_9(%arg0: i32) -> (i32, i32, i32) {
    %c0_i32 = arith.constant 0 : i32
    %c0_i32_0 = arith.constant 0 : i32
    %c0_i32_1 = arith.constant 0 : i32
    return %arg0, %c0_i32, %c0_i32_0 : i32, i32, i32
  }
}

</mosaic_0001>

<llo_original>
// kernel: resnet_block_forward.1
$region0: #{resnet_block_forward.1}
  #allocation0 [shape = 'u32[]', space=smem, size = 0x4, offset = 0x4, fixed_abs, tag = 'smem constant byte address 0x4 - core index']
  #allocation1 [shape = 'u32[144,128]{1,0:T(1,128)}', space=vmem, size = 0x12000, scoped, tag = 'internal scratch']
  #allocation2 [shape = 'bf16[288,12]{1,0:T(16,128)(2,1)}', space=vmem, size = 0x12000, scoped, tag = 'scratch operand']
  #allocation3 [shape = 'bf16[288,24]{1,0:T(16,128)(2,1)}', space=vmem, size = 0x12000, scoped, tag = 'scratch operand']
  %s0 = inlined_call_operand.vmem [shape: bf16[2,16,16,4], index: 0, kind: input, shape index: {}]
  %s1 = inlined_call_operand.vmem [shape: f32[1,4], index: 1, kind: input, shape index: {}]
  %s2 = inlined_call_operand.vmem [shape: f32[1,4], index: 2, kind: input, shape index: {}]
  %s3 = inlined_call_operand.vmem [shape: bf16[3,12,8], index: 3, kind: input, shape index: {}]
  %s4 = inlined_call_operand.vmem [shape: f32[1,8], index: 4, kind: input, shape index: {}]
  %s5 = inlined_call_operand.vmem [shape: f32[1,8], index: 5, kind: input, shape index: {}]
  %s6 = inlined_call_operand.vmem [shape: bf16[3,24,8], index: 6, kind: input, shape index: {}]
  %s7 = inlined_call_operand.vmem [shape: bf16[4,8], index: 7, kind: input, shape index: {}]
  %s8 = inlined_call_operand.vmem [shape: f32[1,8], index: 8, kind: input, shape index: {}]
  %s9 = inlined_call_operand.vmem [shape: f32[2,16,128], index: 9, kind: output, shape index: {}]
  %s10 = sld [smem:[#allocation0]]
  $region69: #{resnet_block_forward.1} parent=0
    _
  %s12 = ssub.s32 1, %s10
  %s13 = scalar_select 0, %s12, %s10
  loop: start=0, step=1, limit=4
  $region2: #{resnet_block_forward.1} parent=0 // loop_pre_header
    _
  $region3: #{resnet_block_forward.1} parent=0 // loop_header
    %s15 = sphi 0, %s19
    %p16 = scmp.ge.s32.totalorder %s15, 4
    %s25 = sphi 0, %s27
    %s28 = sphi 0, %s25
    %s29 = sphi 0, %s28
    %s45 = sphi 0, %s29
    %s49 = sphi 0, %s49
    %s51 = sphi 0, %s49
    %s52 = sphi 0, %s51
    %s66 = sphi 0, %s52
    %s70 = sphi 0, %s70
    %s72 = sphi 0, %s70
    %s73 = sphi 0, %s72
    %s87 = sphi 0, %s73
    %s91 = sphi 0, %s91
    %s93 = sphi 0, %s91
    %s94 = sphi 0, %s93
    %s108 = sphi 0, %s94
    %s112 = sphi 0, %s112
    %s114 = sphi 0, %s112
    %s115 = sphi 0, %s114
    %s129 = sphi 0, %s115
    %s133 = sphi 0, %s133
    %s135 = sphi 0, %s133
    %s136 = sphi 0, %s135
    %s150 = sphi 0, %s136
    %s154 = sphi 0, %s154
    %s156 = sphi 0, %s154
    %s157 = sphi 0, %s156
    %s171 = sphi 0, %s157
    %s175 = sphi 0, %s175
    %s177 = sphi 0, %s175
    %s178 = sphi 0, %s177
    %s192 = sphi 0, %s178
    %s196 = sphi 0, %s196
    %s198 = sphi 0, %s196
    %s199 = sphi 0, %s198
    %s213 = sphi 0, %s199
    %s219 = sphi 0, %s221
    %s222 = sphi 0, %s219
    %s223 = sphi 0, %s222
    %s239 = sphi 0, %s223
  $region4: #{resnet_block_forward.1} parent=0 // loop_header_branch
    %18 = sbr.rel (%p16) target = $region8
  $region5: #{resnet_block_forward.1} parent=0 // loop_body
    %s20 = ssub.s32 %s15, 1
    %s21 = ssub.s32 %s15, 2
    %s22 = sadd.s32 %s15, 1
    %s23 = ssub.s32 %s15, %s22
    %p24 = scmp.eq.s32.totalorder %s23, 0
    %s26 = sadd.s32 %s25, 1
    %s27 = scalar_select %p24, %s25, %s26
    %p30 = pneg %p24
    %p31 = scmp.eq.s32.totalorder %s15, 1
    %p32 = por %p30, %p31
    %p33 = scmp.ne.s32.totalorder %s25, %s28
    %p34 = scmp.eq.s32.totalorder %s15, 0
    %p35 = por %p33, %p34
    %p36 = scmp.ne.s32.totalorder %s25, %s28
    %p37 = scmp.eq.s32.totalorder %s20, 1
    %p38 = por %p36, %p37
    %p39 = scmp.ne.s32.totalorder %s28, %s29
    %p40 = scmp.eq.s32.totalorder %s20, 0
    %p41 = por %p39, %p40
    %p42 = scmp.ne.s32.totalorder %s28, %s29
    %p43 = scmp.eq.s32.totalorder %s21, 1
    %p44 = por %p42, %p43
    %p46 = scmp.ne.s32.totalorder %s29, %s45
    %p47 = scmp.eq.s32.totalorder %s21, 0
    %p48 = por %p46, %p47
    %s50 = sadd.s32 %s49, 1
    %p53 = scmp.eq.s32.totalorder %s15, 1
    %p54 = scmp.ne.s32.totalorder %s49, %s51
    %p55 = scmp.eq.s32.totalorder %s15, 0
    %p56 = por %p54, %p55
    %p57 = scmp.ne.s32.totalorder %s49, %s51
    %p58 = scmp.eq.s32.totalorder %s20, 1
    %p59 = por %p57, %p58
    %p60 = scmp.ne.s32.totalorder %s51, %s52
    %p61 = scmp.eq.s32.totalorder %s20, 0
    %p62 = por %p60, %p61
    %p63 = scmp.ne.s32.totalorder %s51, %s52
    %p64 = scmp.eq.s32.totalorder %s21, 1
    %p65 = por %p63, %p64
    %p67 = scmp.ne.s32.totalorder %s52, %s66
    %p68 = scmp.eq.s32.totalorder %s21, 0
    %p69 = por %p67, %p68
    %s71 = sadd.s32 %s70, 1
    %p74 = scmp.eq.s32.totalorder %s15, 1
    %p75 = scmp.ne.s32.totalorder %s70, %s72
    %p76 = scmp.eq.s32.totalorder %s15, 0
    %p77 = por %p75, %p76
    %p78 = scmp.ne.s32.totalorder %s70, %s72
    %p79 = scmp.eq.s32.totalorder %s20, 1
    %p80 = por %p78, %p79
    %p81 = scmp.ne.s32.totalorder %s72, %s73
    %p82 = scmp.eq.s32.totalorder %s20, 0
    %p83 = por %p81, %p82
    %p84 = scmp.ne.s32.totalorder %s72, %s73
    %p85 = scmp.eq.s32.totalorder %s21, 1
    %p86 = por %p84, %p85
    %p88 = scmp.ne.s32.totalorder %s73, %s87
    %p89 = scmp.eq.s32.totalorder %s21, 0
    %p90 = por %p88, %p89
    %s92 = sadd.s32 %s91, 1
    %p95 = scmp.eq.s32.totalorder %s15, 1
    %p96 = scmp.ne.s32.totalorder %s91, %s93
    %p97 = scmp.eq.s32.totalorder %s15, 0
    %p98 = por %p96, %p97
    %p99 = scmp.ne.s32.totalorder %s91, %s93
    %p100 = scmp.eq.s32.totalorder %s20, 1
    %p101 = por %p99, %p100
    %p102 = scmp.ne.s32.totalorder %s93, %s94
    %p103 = scmp.eq.s32.totalorder %s20, 0
    %p104 = por %p102, %p103
    %p105 = scmp.ne.s32.totalorder %s93, %s94
    %p106 = scmp.eq.s32.totalorder %s21, 1
    %p107 = por %p105, %p106
    %p109 = scmp.ne.s32.totalorder %s94, %s108
    %p110 = scmp.eq.s32.totalorder %s21, 0
    %p111 = por %p109, %p110
    %s113 = sadd.s32 %s112, 1
    %p116 = scmp.eq.s32.totalorder %s15, 1
    %p117 = scmp.ne.s32.totalorder %s112, %s114
    %p118 = scmp.eq.s32.totalorder %s15, 0
    %p119 = por %p117, %p118
    %p120 = scmp.ne.s32.totalorder %s112, %s114
    %p121 = scmp.eq.s32.totalorder %s20, 1
    %p122 = por %p120, %p121
    %p123 = scmp.ne.s32.totalorder %s114, %s115
    %p124 = scmp.eq.s32.totalorder %s20, 0
    %p125 = por %p123, %p124
    %p126 = scmp.ne.s32.totalorder %s114, %s115
    %p127 = scmp.eq.s32.totalorder %s21, 1
    %p128 = por %p126, %p127
    %p130 = scmp.ne.s32.totalorder %s115, %s129
    %p131 = scmp.eq.s32.totalorder %s21, 0
    %p132 = por %p130, %p131
    %s134 = sadd.s32 %s133, 1
    %p137 = scmp.eq.s32.totalorder %s15, 1
    %p138 = scmp.ne.s32.totalorder %s133, %s135
    %p139 = scmp.eq.s32.totalorder %s15, 0
    %p140 = por %p138, %p139
    %p141 = scmp.ne.s32.totalorder %s133, %s135
    %p142 = scmp.eq.s32.totalorder %s20, 1
    %p143 = por %p141, %p142
    %p144 = scmp.ne.s32.totalorder %s135, %s136
    %p145 = scmp.eq.s32.totalorder %s20, 0
    %p146 = por %p144, %p145
    %p147 = scmp.ne.s32.totalorder %s135, %s136
    %p148 = scmp.eq.s32.totalorder %s21, 1
    %p149 = por %p147, %p148
    %p151 = scmp.ne.s32.totalorder %s136, %s150
    %p152 = scmp.eq.s32.totalorder %s21, 0
    %p153 = por %p151, %p152
    %s155 = sadd.s32 %s154, 1
    %p158 = scmp.eq.s32.totalorder %s15, 1
    %p159 = scmp.ne.s32.totalorder %s154, %s156
    %p160 = scmp.eq.s32.totalorder %s15, 0
    %p161 = por %p159, %p160
    %p162 = scmp.ne.s32.totalorder %s154, %s156
    %p163 = scmp.eq.s32.totalorder %s20, 1
    %p164 = por %p162, %p163
    %p165 = scmp.ne.s32.totalorder %s156, %s157
    %p166 = scmp.eq.s32.totalorder %s20, 0
    %p167 = por %p165, %p166
    %p168 = scmp.ne.s32.totalorder %s156, %s157
    %p169 = scmp.eq.s32.totalorder %s21, 1
    %p170 = por %p168, %p169
    %p172 = scmp.ne.s32.totalorder %s157, %s171
    %p173 = scmp.eq.s32.totalorder %s21, 0
    %p174 = por %p172, %p173
    %s176 = sadd.s32 %s175, 1
    %p179 = scmp.eq.s32.totalorder %s15, 1
    %p180 = scmp.ne.s32.totalorder %s175, %s177
    %p181 = scmp.eq.s32.totalorder %s15, 0
    %p182 = por %p180, %p181
    %p183 = scmp.ne.s32.totalorder %s175, %s177
    %p184 = scmp.eq.s32.totalorder %s20, 1
    %p185 = por %p183, %p184
    %p186 = scmp.ne.s32.totalorder %s177, %s178
    %p187 = scmp.eq.s32.totalorder %s20, 0
    %p188 = por %p186, %p187
    %p189 = scmp.ne.s32.totalorder %s177, %s178
    %p190 = scmp.eq.s32.totalorder %s21, 1
    %p191 = por %p189, %p190
    %p193 = scmp.ne.s32.totalorder %s178, %s192
    %p194 = scmp.eq.s32.totalorder %s21, 0
    %p195 = por %p193, %p194
    %s197 = sadd.s32 %s196, 1
    %p200 = scmp.eq.s32.totalorder %s15, 1
    %p201 = scmp.ne.s32.totalorder %s196, %s198
    %p202 = scmp.eq.s32.totalorder %s15, 0
    %p203 = por %p201, %p202
    %p204 = scmp.ne.s32.totalorder %s196, %s198
    %p205 = scmp.eq.s32.totalorder %s20, 1
    %p206 = por %p204, %p205
    %p207 = scmp.ne.s32.totalorder %s198, %s199
    %p208 = scmp.eq.s32.totalorder %s20, 0
    %p209 = por %p207, %p208
    %p210 = scmp.ne.s32.totalorder %s198, %s199
    %p211 = scmp.eq.s32.totalorder %s21, 1
    %p212 = por %p210, %p211
    %p214 = scmp.ne.s32.totalorder %s199, %s213
    %p215 = scmp.eq.s32.totalorder %s21, 0
    %p216 = por %p214, %p215
    %s217 = ssub.s32 %s15, %s22
    %p218 = scmp.eq.s32.totalorder %s217, 0
    %s220 = sadd.s32 %s219, 1
    %s221 = scalar_select %p218, %s219, %s220
    %p224 = pneg %p218
    %p225 = scmp.eq.s32.totalorder %s15, 1
    %p226 = por %p224, %p225
    %p227 = scmp.ne.s32.totalorder %s219, %s222
    %p228 = scmp.eq.s32.totalorder %s15, 0
    %p229 = por %p227, %p228
    %p230 = scmp.ne.s32.totalorder %s219, %s222
    %p231 = scmp.eq.s32.totalorder %s20, 1
    %p232 = por %p230, %p231
    %p233 = scmp.ne.s32.totalorder %s222, %s223
    %p234 = scmp.eq.s32.totalorder %s20, 0
    %p235 = por %p233, %p234
    %p236 = scmp.ne.s32.totalorder %s222, %s223
    %p237 = scmp.eq.s32.totalorder %s21, 1
    %p238 = por %p236, %p237
    %p240 = scmp.ne.s32.totalorder %s223, %s239
    %p241 = scmp.eq.s32.totalorder %s21, 0
    %p242 = por %p240, %p241
    %p243 = scmp.le.s32.totalorder 1, %s15
    %p244 = scmp.lt.s32.totalorder %s15, 3
    %p245 = pnand %p243, %p244
    %p246 = pneg %p245
    // Predicated region
    $region9: #{resnet_block_forward.1} parent=5 // pred_check
      _
    $region10: #{resnet_block_forward.1} parent=5 // pred_check_branch
      %248 = sbr.rel (%p245) target = $region12
    $region11: #{resnet_block_forward.1} parent=5 // pred_region
      %s249 = ssub.s32 %s15, 1
      // Predicated region
      $region13: #{resnet_block_forward.1} parent=11 // pred_check
        %p250 = pneg %p62
      $region14: #{resnet_block_forward.1} parent=11 // pred_check_branch
        %252 = sbr.rel (%p250) target = $region16
      $region15: #{resnet_block_forward.1} parent=11 // pred_region
        _
      $region16: #{resnet_block_forward.1} parent=11 // pred_fallthru
        _
      // Predicated region
      $region17: #{resnet_block_forward.1} parent=11 // pred_check
        %p253 = pneg %p83
      $region18: #{resnet_block_forward.1} parent=11 // pred_check_branch
        %255 = sbr.rel (%p253) target = $region20
      $region19: #{resnet_block_forward.1} parent=11 // pred_region
        _
      $region20: #{resnet_block_forward.1} parent=11 // pred_fallthru
        _
      // Predicated region
      $region21: #{resnet_block_forward.1} parent=11 // pred_check
        %p256 = pneg %p104
      $region22: #{resnet_block_forward.1} parent=11 // pred_check_branch
        %258 = sbr.rel (%p256) target = $region24
      $region23: #{resnet_block_forward.1} parent=11 // pred_region
        _
      $region24: #{resnet_block_forward.1} parent=11 // pred_fallthru
        _
      // Predicated region
      $region25: #{resnet_block_forward.1} parent=11 // pred_check
        %p259 = pneg %p125
      $region26: #{resnet_block_forward.1} parent=11 // pred_check_branch
        %261 = sbr.rel (%p259) target = $region28
      $region27: #{resnet_block_forward.1} parent=11 // pred_region
        _
      $region28: #{resnet_block_forward.1} parent=11 // pred_fallthru
        _
      // Predicated region
      $region29: #{resnet_block_forward.1} parent=11 // pred_check
        %p262 = pneg %p146
      $region30: #{resnet_block_forward.1} parent=11 // pred_check_branch
        %264 = sbr.rel (%p262) target = $region32
      $region31: #{resnet_block_forward.1} parent=11 // pred_region
        _
      $region32: #{resnet_block_forward.1} parent=11 // pred_fallthru
        _
      // Predicated region
      $region33: #{resnet_block_forward.1} parent=11 // pred_check
        %p265 = pneg %p167
      $region34: #{resnet_block_forward.1} parent=11 // pred_check_branch
        %267 = sbr.rel (%p265) target = $region36
      $region35: #{resnet_block_forward.1} parent=11 // pred_region
        _
      $region36: #{resnet_block_forward.1} parent=11 // pred_fallthru
        _
      // Predicated region
      $region37: #{resnet_block_forward.1} parent=11 // pred_check
        %p268 = pneg %p188
      $region38: #{resnet_block_forward.1} parent=11 // pred_check_branch
        %270 = sbr.rel (%p268) target = $region40
      $region39: #{resnet_block_forward.1} parent=11 // pred_region
        _
      $region40: #{resnet_block_forward.1} parent=11 // pred_fallthru
        _
      // Predicated region
      $region41: #{resnet_block_forward.1} parent=11 // pred_check
        %p271 = pneg %p209
      $region42: #{resnet_block_forward.1} parent=11 // pred_check_branch
        %273 = sbr.rel (%p271) target = $region44
      $region43: #{resnet_block_forward.1} parent=11 // pred_region
        _
      $region44: #{resnet_block_forward.1} parent=11 // pred_fallthru
        _
    $region12: #{resnet_block_forward.1} parent=5 // pred_fallthru
      _
    %p274 = scmp.lt.s32.totalorder %s15, 2
    // Predicated region
    $region45: #{resnet_block_forward.1} parent=5 // pred_check
      %p275 = pneg %p274
    $region46: #{resnet_block_forward.1} parent=5 // pred_check_branch
      %277 = sbr.rel (%p275) target = $region48
    $region47: #{resnet_block_forward.1} parent=5 // pred_region
      // Predicated region
      $region49: #{resnet_block_forward.1} parent=47 // pred_check
        %p278 = pneg %p35
      $region50: #{resnet_block_forward.1} parent=47 // pred_check_branch
        %280 = sbr.rel (%p278) target = $region52
      $region51: #{resnet_block_forward.1} parent=47 // pred_region
        %p281 = scmp.lt.s32.totalorder %s15, 1
        %s282 = scalar_select %p281, %s15, 1
        %s283 = smul.addr %s282, 32
        %s284 = smul.addr %s283, 4
        %s285 = scalar_lea.vmem %s0, %s284
      $region52: #{resnet_block_forward.1} parent=47 // pred_fallthru
        _
    $region48: #{resnet_block_forward.1} parent=5 // pred_fallthru
      _
    %p286 = scmp.le.s32.totalorder 1, %s15
    %p287 = scmp.lt.s32.totalorder %s15, 3
    %p288 = pnand %p286, %p287
    %p289 = pneg %p288
    // Predicated region
    $region53: #{resnet_block_forward.1} parent=5 // pred_check
      _
    $region54: #{resnet_block_forward.1} parent=5 // pred_check_branch
      %291 = sbr.rel (%p288) target = $region56
    $region55: #{resnet_block_forward.1} parent=5 // pred_region
      %s292 = ssub.s32 %s15, 1
      %p293 = scmp.lt.s32.totalorder %s20, 1
      %s294 = scalar_select %p293, %s20, 1
      %s295 = smul.addr %s294, 32
      %s296 = smul.addr %s295, 4
      %s297 = scalar_lea.vmem %s0, %s296
      %p298 = pneg %p41
      %p299 = pneg %p38
      %p300 = pneg %p62
      %p301 = pneg %p59
      %p302 = pneg %p83
      %p303 = pneg %p80
      %p304 = pneg %p104
      %p305 = pneg %p101
      %p306 = pneg %p125
      %p307 = pneg %p122
      %p308 = pneg %p146
      %p309 = pneg %p143
      %p310 = pneg %p167
      %p311 = pneg %p164
      %p312 = pneg %p188
      %p313 = pneg %p185
      %p314 = pneg %p209
      %p315 = pneg %p206
      %p316 = pneg %p235
      %p317 = pneg %p232
      %p318 = scmp.lt.s32.totalorder %s20, 1
      %s319 = scalar_select %p318, %s20, 1
      %s320 = smul.addr %s319, 2
      %s321 = smul.addr %s320, 8
      %s322 = scalar_lea.vmem %s9, %s321
      %p323 = scmp.lt.s32.totalorder %s20, 1
      %s324 = scalar_select %p323, %s20, 1
      %s325 = smul.addr %s324, 32
      %s326 = smul.addr %s325, 4
      %s327 = scalar_lea.vmem %s0, %s326
      %p328 = scmp.lt.s32.totalorder %s20, 1
      %s329 = scalar_select %p328, %s20, 1
      %s330 = smul.addr %s329, 2
      %s331 = smul.addr %s330, 8
      %s332 = scalar_lea.vmem %s9, %s331
      %v334 = vld [vmem:[%s327] sm:$0xf]
      %v335 = vld [vmem:[%s327 + $0x4] sm:$0xf]
      %v336 = vld [vmem:[%s327 + $0x8] sm:$0xf]
      %v337 = vld [vmem:[%s327 + $0xc] sm:$0xf]
      %v338 = vld [vmem:[%s327 + $0x10] sm:$0xf]
      %v339 = vld [vmem:[%s327 + $0x14] sm:$0xf]
      %v340 = vld [vmem:[%s327 + $0x18] sm:$0xf]
      %v341 = vld [vmem:[%s327 + $0x1c] sm:$0xf]
      %v342 = vld [vmem:[%s327 + $0x20] sm:$0xf]
      %v343 = vld [vmem:[%s327 + $0x24] sm:$0xf]
      %v344 = vld [vmem:[%s327 + $0x28] sm:$0xf]
      %v345 = vld [vmem:[%s327 + $0x2c] sm:$0xf]
      %v346 = vld [vmem:[%s327 + $0x30] sm:$0xf]
      %v347 = vld [vmem:[%s327 + $0x34] sm:$0xf]
      %v348 = vld [vmem:[%s327 + $0x38] sm:$0xf]
      %v349 = vld [vmem:[%s327 + $0x3c] sm:$0xf]
      %v350 = vld [vmem:[%s327 + $0x40] sm:$0xf]
      %v351 = vld [vmem:[%s327 + $0x44] sm:$0xf]
      %v352 = vld [vmem:[%s327 + $0x48] sm:$0xf]
      %v353 = vld [vmem:[%s327 + $0x4c] sm:$0xf]
      %v354 = vld [vmem:[%s327 + $0x50] sm:$0xf]
      %v355 = vld [vmem:[%s327 + $0x54] sm:$0xf]
      %v356 = vld [vmem:[%s327 + $0x58] sm:$0xf]
      %v357 = vld [vmem:[%s327 + $0x5c] sm:$0xf]
      %v358 = vld [vmem:[%s327 + $0x60] sm:$0xf]
      %v359 = vld [vmem:[%s327 + $0x64] sm:$0xf]
      %v360 = vld [vmem:[%s327 + $0x68] sm:$0xf]
      %v361 = vld [vmem:[%s327 + $0x6c] sm:$0xf]
      %v362 = vld [vmem:[%s327 + $0x70] sm:$0xf]
      %v363 = vld [vmem:[%s327 + $0x74] sm:$0xf]
      %v364 = vld [vmem:[%s327 + $0x78] sm:$0xf]
      %v365 = vld [vmem:[%s327 + $0x7c] sm:$0xf]
      %v366 = vunpack.c.l.bf16 %v334
      %v367 = vunpack.c.l.bf16 %v335
      %v368 = vunpack.c.l.bf16 %v336
      %v369 = vunpack.c.l.bf16 %v337
      %v370 = vunpack.c.l.bf16 %v338
      %v371 = vunpack.c.l.bf16 %v339
      %v372 = vunpack.c.l.bf16 %v340
      %v373 = vunpack.c.l.bf16 %v341
      %v374 = vunpack.c.l.bf16 %v342
      %v375 = vunpack.c.l.bf16 %v343
      %v376 = vunpack.c.l.bf16 %v344
      %v377 = vunpack.c.l.bf16 %v345
      %v378 = vunpack.c.l.bf16 %v346
      %v379 = vunpack.c.l.bf16 %v347
      %v380 = vunpack.c.l.bf16 %v348
      %v381 = vunpack.c.l.bf16 %v349
      %v382 = vunpack.c.l.bf16 %v350
      %v383 = vunpack.c.l.bf16 %v351
      %v384 = vunpack.c.l.bf16 %v352
      %v385 = vunpack.c.l.bf16 %v353
      %v386 = vunpack.c.l.bf16 %v354
      %v387 = vunpack.c.l.bf16 %v355
      %v388 = vunpack.c.l.bf16 %v356
      %v389 = vunpack.c.l.bf16 %v357
      %v390 = vunpack.c.l.bf16 %v358
      %v391 = vunpack.c.l.bf16 %v359
      %v392 = vunpack.c.l.bf16 %v360
      %v393 = vunpack.c.l.bf16 %v361
      %v394 = vunpack.c.l.bf16 %v362
      %v395 = vunpack.c.l.bf16 %v363
      %v396 = vunpack.c.l.bf16 %v364
      %v397 = vunpack.c.l.bf16 %v365
      %v398 = vld [vmem:[%s1] sm:$0x1]
      %v400 = vlaneseq
      %v401 = vshrl.u32 %v400, 7
      %v402 = vsub.s32 0, %v401
      %v403 = vrot.slane %v398, %v402
      %v405 = vmul.f32 %v366, %v403
      %v406 = vmul.f32 %v367, %v403
      %v407 = vmul.f32 %v368, %v403
      %v408 = vmul.f32 %v369, %v403
      %v409 = vmul.f32 %v370, %v403
      %v410 = vmul.f32 %v371, %v403
      %v411 = vmul.f32 %v372, %v403
      %v412 = vmul.f32 %v373, %v403
      %v413 = vmul.f32 %v374, %v403
      %v414 = vmul.f32 %v375, %v403
      %v415 = vmul.f32 %v376, %v403
      %v416 = vmul.f32 %v377, %v403
      %v417 = vmul.f32 %v378, %v403
      %v418 = vmul.f32 %v379, %v403
      %v419 = vmul.f32 %v380, %v403
      %v420 = vmul.f32 %v381, %v403
      %v421 = vmul.f32 %v382, %v403
      %v422 = vmul.f32 %v383, %v403
      %v423 = vmul.f32 %v384, %v403
      %v424 = vmul.f32 %v385, %v403
      %v425 = vmul.f32 %v386, %v403
      %v426 = vmul.f32 %v387, %v403
      %v427 = vmul.f32 %v388, %v403
      %v428 = vmul.f32 %v389, %v403
      %v429 = vmul.f32 %v390, %v403
      %v430 = vmul.f32 %v391, %v403
      %v431 = vmul.f32 %v392, %v403
      %v432 = vmul.f32 %v393, %v403
      %v433 = vmul.f32 %v394, %v403
      %v434 = vmul.f32 %v395, %v403
      %v435 = vmul.f32 %v396, %v403
      %v436 = vmul.f32 %v397, %v403
      %v437 = vld [vmem:[%s2] sm:$0x1]
      %v439 = vlaneseq
      %v440 = vshrl.u32 %v439, 7
      %v441 = vsub.s32 0, %v440
      %v442 = vrot.slane %v437, %v441
      %v444 = vadd.f32 %v405, %v442
      %v445 = vadd.f32 %v406, %v442
      %v446 = vadd.f32 %v407, %v442
      %v447 = vadd.f32 %v408, %v442
      %v448 = vadd.f32 %v409, %v442
      %v449 = vadd.f32 %v410, %v442
      %v450 = vadd.f32 %v411, %v442
      %v451 = vadd.f32 %v412, %v442
      %v452 = vadd.f32 %v413, %v442
      %v453 = vadd.f32 %v414, %v442
      %v454 = vadd.f32 %v415, %v442
      %v455 = vadd.f32 %v416, %v442
      %v456 = vadd.f32 %v417, %v442
      %v457 = vadd.f32 %v418, %v442
      %v458 = vadd.f32 %v419, %v442
      %v459 = vadd.f32 %v420, %v442
      %v460 = vadd.f32 %v421, %v442
      %v461 = vadd.f32 %v422, %v442
      %v462 = vadd.f32 %v423, %v442
      %v463 = vadd.f32 %v424, %v442
      %v464 = vadd.f32 %v425, %v442
      %v465 = vadd.f32 %v426, %v442
      %v466 = vadd.f32 %v427, %v442
      %v467 = vadd.f32 %v428, %v442
      %v468 = vadd.f32 %v429, %v442
      %v469 = vadd.f32 %v430, %v442
      %v470 = vadd.f32 %v431, %v442
      %v471 = vadd.f32 %v432, %v442
      %v472 = vadd.f32 %v433, %v442
      %v473 = vadd.f32 %v434, %v442
      %v474 = vadd.f32 %v435, %v442
      %v475 = vadd.f32 %v436, %v442
      %v476 = vxor.u32 %v444, 2147483648
      %v477 = vxor.u32 %v445, 2147483648
      %v478 = vxor.u32 %v446, 2147483648
      %v479 = vxor.u32 %v447, 2147483648
      %v480 = vxor.u32 %v448, 2147483648
      %v481 = vxor.u32 %v449, 2147483648
      %v482 = vxor.u32 %v450, 2147483648
      %v483 = vxor.u32 %v451, 2147483648
      %v484 = vxor.u32 %v452, 2147483648
      %v485 = vxor.u32 %v453, 2147483648
      %v486 = vxor.u32 %v454, 2147483648
      %v487 = vxor.u32 %v455, 2147483648
      %v488 = vxor.u32 %v456, 2147483648
      %v489 = vxor.u32 %v457, 2147483648
      %v490 = vxor.u32 %v458, 2147483648
      %v491 = vxor.u32 %v459, 2147483648
      %v492 = vxor.u32 %v460, 2147483648
      %v493 = vxor.u32 %v461, 2147483648
      %v494 = vxor.u32 %v462, 2147483648
      %v495 = vxor.u32 %v463, 2147483648
      %v496 = vxor.u32 %v464, 2147483648
      %v497 = vxor.u32 %v465, 2147483648
      %v498 = vxor.u32 %v466, 2147483648
      %v499 = vxor.u32 %v467, 2147483648
      %v500 = vxor.u32 %v468, 2147483648
      %v501 = vxor.u32 %v469, 2147483648
      %v502 = vxor.u32 %v470, 2147483648
      %v503 = vxor.u32 %v471, 2147483648
      %v504 = vxor.u32 %v472, 2147483648
      %v505 = vxor.u32 %v473, 2147483648
      %v506 = vxor.u32 %v474, 2147483648
      %v507 = vxor.u32 %v475, 2147483648
      %v508 = vmul.f32 %v476, 1.442695
      %v509 = vpow.pop %v508
      %v510 = vmul.f32 %v477, 1.442695
      %v511 = vpow.pop %v510
      %v512 = vmul.f32 %v478, 1.442695
      %v513 = vpow.pop %v512
      %v514 = vmul.f32 %v479, 1.442695
      %v515 = vpow.pop %v514
      %v516 = vmul.f32 %v480, 1.442695
      %v517 = vpow.pop %v516
      %v518 = vmul.f32 %v481, 1.442695
      %v519 = vpow.pop %v518
      %v520 = vmul.f32 %v482, 1.442695
      %v521 = vpow.pop %v520
      %v522 = vmul.f32 %v483, 1.442695
      %v523 = vpow.pop %v522
      %v524 = vmul.f32 %v484, 1.442695
      %v525 = vpow.pop %v524
      %v526 = vmul.f32 %v485, 1.442695
      %v527 = vpow.pop %v526
      %v528 = vmul.f32 %v486, 1.442695
      %v529 = vpow.pop %v528
      %v530 = vmul.f32 %v487, 1.442695
      %v531 = vpow.pop %v530
      %v532 = vmul.f32 %v488, 1.442695
      %v533 = vpow.pop %v532
      %v534 = vmul.f32 %v489, 1.442695
      %v535 = vpow.pop %v534
      %v536 = vmul.f32 %v490, 1.442695
      %v537 = vpow.pop %v536
      %v538 = vmul.f32 %v491, 1.442695
      %v539 = vpow.pop %v538
      %v540 = vmul.f32 %v492, 1.442695
      %v541 = vpow.pop %v540
      %v542 = vmul.f32 %v493, 1.442695
      %v543 = vpow.pop %v542
      %v544 = vmul.f32 %v494, 1.442695
      %v545 = vpow.pop %v544
      %v546 = vmul.f32 %v495, 1.442695
      %v547 = vpow.pop %v546
      %v548 = vmul.f32 %v496, 1.442695
      %v549 = vpow.pop %v548
      %v550 = vmul.f32 %v497, 1.442695
      %v551 = vpow.pop %v550
      %v552 = vmul.f32 %v498, 1.442695
      %v553 = vpow.pop %v552
      %v554 = vmul.f32 %v499, 1.442695
      %v555 = vpow.pop %v554
      %v556 = vmul.f32 %v500, 1.442695
      %v557 = vpow.pop %v556
      %v558 = vmul.f32 %v501, 1.442695
      %v559 = vpow.pop %v558
      %v560 = vmul.f32 %v502, 1.442695
      %v561 = vpow.pop %v560
      %v562 = vmul.f32 %v503, 1.442695
      %v563 = vpow.pop %v562
      %v564 = vmul.f32 %v504, 1.442695
      %v565 = vpow.pop %v564
      %v566 = vmul.f32 %v505, 1.442695
      %v567 = vpow.pop %v566
      %v568 = vmul.f32 %v506, 1.442695
      %v569 = vpow.pop %v568
      %v570 = vmul.f32 %v507, 1.442695
      %v571 = vpow.pop %v570
      %v572 = vadd.f32 %v509, 1.0
      %v573 = vadd.f32 %v511, 1.0
      %v574 = vadd.f32 %v513, 1.0
      %v575 = vadd.f32 %v515, 1.0
      %v576 = vadd.f32 %v517, 1.0
      %v577 = vadd.f32 %v519, 1.0
      %v578 = vadd.f32 %v521, 1.0
      %v579 = vadd.f32 %v523, 1.0
      %v580 = vadd.f32 %v525, 1.0
      %v581 = vadd.f32 %v527, 1.0
      %v582 = vadd.f32 %v529, 1.0
      %v583 = vadd.f32 %v531, 1.0
      %v584 = vadd.f32 %v533, 1.0
      %v585 = vadd.f32 %v535, 1.0
      %v586 = vadd.f32 %v537, 1.0
      %v587 = vadd.f32 %v539, 1.0
      %v588 = vadd.f32 %v541, 1.0
      %v589 = vadd.f32 %v543, 1.0
      %v590 = vadd.f32 %v545, 1.0
      %v591 = vadd.f32 %v547, 1.0
      %v592 = vadd.f32 %v549, 1.0
      %v593 = vadd.f32 %v551, 1.0
      %v594 = vadd.f32 %v553, 1.0
      %v595 = vadd.f32 %v555, 1.0
      %v596 = vadd.f32 %v557, 1.0
      %v597 = vadd.f32 %v559, 1.0
      %v598 = vadd.f32 %v561, 1.0
      %v599 = vadd.f32 %v563, 1.0
      %v600 = vadd.f32 %v565, 1.0
      %v601 = vadd.f32 %v567, 1.0
      %v602 = vadd.f32 %v569, 1.0
      %v603 = vadd.f32 %v571, 1.0
      %v604 = vrcp.pop %v572
      %v605 = vmul.f32 1.0, %v604
      %v606 = vrcp.pop %v573
      %v607 = vmul.f32 1.0, %v606
      %v608 = vrcp.pop %v574
      %v609 = vmul.f32 1.0, %v608
      %v610 = vrcp.pop %v575
      %v611 = vmul.f32 1.0, %v610
      %v612 = vrcp.pop %v576
      %v613 = vmul.f32 1.0, %v612
      %v614 = vrcp.pop %v577
      %v615 = vmul.f32 1.0, %v614
      %v616 = vrcp.pop %v578
      %v617 = vmul.f32 1.0, %v616
      %v618 = vrcp.pop %v579
      %v619 = vmul.f32 1.0, %v618
      %v620 = vrcp.pop %v580
      %v621 = vmul.f32 1.0, %v620
      %v622 = vrcp.pop %v581
      %v623 = vmul.f32 1.0, %v622
      %v624 = vrcp.pop %v582
      %v625 = vmul.f32 1.0, %v624
      %v626 = vrcp.pop %v583
      %v627 = vmul.f32 1.0, %v626
      %v628 = vrcp.pop %v584
      %v629 = vmul.f32 1.0, %v628
      %v630 = vrcp.pop %v585
      %v631 = vmul.f32 1.0, %v630
      %v632 = vrcp.pop %v586
      %v633 = vmul.f32 1.0, %v632
      %v634 = vrcp.pop %v587
      %v635 = vmul.f32 1.0, %v634
      %v636 = vrcp.pop %v588
      %v637 = vmul.f32 1.0, %v636
      %v638 = vrcp.pop %v589
      %v639 = vmul.f32 1.0, %v638
      %v640 = vrcp.pop %v590
      %v641 = vmul.f32 1.0, %v640
      %v642 = vrcp.pop %v591
      %v643 = vmul.f32 1.0, %v642
      %v644 = vrcp.pop %v592
      %v645 = vmul.f32 1.0, %v644
      %v646 = vrcp.pop %v593
      %v647 = vmul.f32 1.0, %v646
      %v648 = vrcp.pop %v594
      %v649 = vmul.f32 1.0, %v648
      %v650 = vrcp.pop %v595
      %v651 = vmul.f32 1.0, %v650
      %v652 = vrcp.pop %v596
      %v653 = vmul.f32 1.0, %v652
      %v654 = vrcp.pop %v597
      %v655 = vmul.f32 1.0, %v654
      %v656 = vrcp.pop %v598
      %v657 = vmul.f32 1.0, %v656
      %v658 = vrcp.pop %v599
      %v659 = vmul.f32 1.0, %v658
      %v660 = vrcp.pop %v600
      %v661 = vmul.f32 1.0, %v660
      %v662 = vrcp.pop %v601
      %v663 = vmul.f32 1.0, %v662
      %v664 = vrcp.pop %v602
      %v665 = vmul.f32 1.0, %v664
      %v666 = vrcp.pop %v603
      %v667 = vmul.f32 1.0, %v666
      %v668 = vmul.f32 %v444, %v605
      %v669 = vmul.f32 %v445, %v607
      %v670 = vmul.f32 %v446, %v609
      %v671 = vmul.f32 %v447, %v611
      %v672 = vmul.f32 %v448, %v613
      %v673 = vmul.f32 %v449, %v615
      %v674 = vmul.f32 %v450, %v617
      %v675 = vmul.f32 %v451, %v619
      %v676 = vmul.f32 %v452, %v621
      %v677 = vmul.f32 %v453, %v623
      %v678 = vmul.f32 %v454, %v625
      %v679 = vmul.f32 %v455, %v627
      %v680 = vmul.f32 %v456, %v629
      %v681 = vmul.f32 %v457, %v631
      %v682 = vmul.f32 %v458, %v633
      %v683 = vmul.f32 %v459, %v635
      %v684 = vmul.f32 %v460, %v637
      %v685 = vmul.f32 %v461, %v639
      %v686 = vmul.f32 %v462, %v641
      %v687 = vmul.f32 %v463, %v643
      %v688 = vmul.f32 %v464, %v645
      %v689 = vmul.f32 %v465, %v647
      %v690 = vmul.f32 %v466, %v649
      %v691 = vmul.f32 %v467, %v651
      %v692 = vmul.f32 %v468, %v653
      %v693 = vmul.f32 %v469, %v655
      %v694 = vmul.f32 %v470, %v657
      %v695 = vmul.f32 %v471, %v659
      %v696 = vmul.f32 %v472, %v661
      %v697 = vmul.f32 %v473, %v663
      %v698 = vmul.f32 %v474, %v665
      %v699 = vmul.f32 %v475, %v667
      %vm732 = vcmask 1040384
      %v733 = vrot.slane %v668, 7
      %v734 = vrot.slane %v669, 7
      %v735 = vsel %vm732, %v733, %v734
      %v736 = vrot.slane %v670, 7
      %v737 = vrot.slane %v671, 7
      %v738 = vsel %vm732, %v736, %v737
      %v739 = vrot.slane %v672, 7
      %v740 = vrot.slane %v673, 7
      %v741 = vsel %vm732, %v739, %v740
      %v742 = vrot.slane %v674, 7
      %v743 = vrot.slane %v675, 7
      %v744 = vsel %vm732, %v742, %v743
      %v745 = vrot.slane %v676, 7
      %v746 = vrot.slane %v677, 7
      %v747 = vsel %vm732, %v745, %v746
      %v748 = vrot.slane %v678, 7
      %v749 = vrot.slane %v679, 7
      %v750 = vsel %vm732, %v748, %v749
      %v751 = vrot.slane %v680, 7
      %v752 = vrot.slane %v681, 7
      %v753 = vsel %vm732, %v751, %v752
      %v754 = vrot.slane %v682, 7
      %v755 = vrot.slane %v683, 7
      %v756 = vsel %vm732, %v754, %v755
      %v757 = vrot.slane %v684, 7
      %v758 = vrot.slane %v685, 7
      %v759 = vsel %vm732, %v757, %v758
      %v760 = vrot.slane %v686, 7
      %v761 = vrot.slane %v687, 7
      %v762 = vsel %vm732, %v760, %v761
      %v763 = vrot.slane %v688, 7
      %v764 = vrot.slane %v689, 7
      %v765 = vsel %vm732, %v763, %v764
      %v766 = vrot.slane %v690, 7
      %v767 = vrot.slane %v691, 7
      %v768 = vsel %vm732, %v766, %v767
      %v769 = vrot.slane %v692, 7
      %v770 = vrot.slane %v693, 7
      %v771 = vsel %vm732, %v769, %v770
      %v772 = vrot.slane %v694, 7
      %v773 = vrot.slane %v695, 7
      %v774 = vsel %vm732, %v772, %v773
      %v775 = vrot.slane %v696, 7
      %v776 = vrot.slane %v697, 7
      %v777 = vsel %vm732, %v775, %v776
      %v778 = vrot.slane %v698, 7
      %v779 = vrot.slane %v699, 7
      %v780 = vsel %vm732, %v778, %v779
      %v813 = vsel %vm732, 0.0, %v733
      %v814 = vsel %vm732, 0.0, %v736
      %v815 = vsel %vm732, 0.0, %v739
      %v816 = vsel %vm732, 0.0, %v742
      %v817 = vsel %vm732, 0.0, %v745
      %v818 = vsel %vm732, 0.0, %v748
      %v819 = vsel %vm732, 0.0, %v751
      %v820 = vsel %vm732, 0.0, %v754
      %v821 = vsel %vm732, 0.0, %v757
      %v822 = vsel %vm732, 0.0, %v760
      %v823 = vsel %vm732, 0.0, %v763
      %v824 = vsel %vm732, 0.0, %v766
      %v825 = vsel %vm732, 0.0, %v769
      %v826 = vsel %vm732, 0.0, %v772
      %v827 = vsel %vm732, 0.0, %v775
      %v828 = vsel %vm732, 0.0, %v778
      %vm829 = vcmask 1046528
      %v830 = vrot.slane %v668, 1
      %v831 = vrot.slane %v669, 1
      %v832 = vsel %vm829, %v830, %v831
      %v833 = vrot.slane %v670, 1
      %v834 = vrot.slane %v671, 1
      %v835 = vsel %vm829, %v833, %v834
      %v836 = vrot.slane %v672, 1
      %v837 = vrot.slane %v673, 1
      %v838 = vsel %vm829, %v836, %v837
      %v839 = vrot.slane %v674, 1
      %v840 = vrot.slane %v675, 1
      %v841 = vsel %vm829, %v839, %v840
      %v842 = vrot.slane %v676, 1
      %v843 = vrot.slane %v677, 1
      %v844 = vsel %vm829, %v842, %v843
      %v845 = vrot.slane %v678, 1
      %v846 = vrot.slane %v679, 1
      %v847 = vsel %vm829, %v845, %v846
      %v848 = vrot.slane %v680, 1
      %v849 = vrot.slane %v681, 1
      %v850 = vsel %vm829, %v848, %v849
      %v851 = vrot.slane %v682, 1
      %v852 = vrot.slane %v683, 1
      %v853 = vsel %vm829, %v851, %v852
      %v854 = vrot.slane %v684, 1
      %v855 = vrot.slane %v685, 1
      %v856 = vsel %vm829, %v854, %v855
      %v857 = vrot.slane %v686, 1
      %v858 = vrot.slane %v687, 1
      %v859 = vsel %vm829, %v857, %v858
      %v860 = vrot.slane %v688, 1
      %v861 = vrot.slane %v689, 1
      %v862 = vsel %vm829, %v860, %v861
      %v863 = vrot.slane %v690, 1
      %v864 = vrot.slane %v691, 1
      %v865 = vsel %vm829, %v863, %v864
      %v866 = vrot.slane %v692, 1
      %v867 = vrot.slane %v693, 1
      %v868 = vsel %vm829, %v866, %v867
      %v869 = vrot.slane %v694, 1
      %v870 = vrot.slane %v695, 1
      %v871 = vsel %vm829, %v869, %v870
      %v872 = vrot.slane %v696, 1
      %v873 = vrot.slane %v697, 1
      %v874 = vsel %vm829, %v872, %v873
      %v875 = vrot.slane %v698, 1
      %v876 = vrot.slane %v699, 1
      %v877 = vsel %vm829, %v875, %v876
      %v894 = vsel %vm829, %v831, 0.0
      %v895 = vsel %vm829, %v834, 0.0
      %v896 = vsel %vm829, %v837, 0.0
      %v897 = vsel %vm829, %v840, 0.0
      %v898 = vsel %vm829, %v843, 0.0
      %v899 = vsel %vm829, %v846, 0.0
      %v900 = vsel %vm829, %v849, 0.0
      %v901 = vsel %vm829, %v852, 0.0
      %v902 = vsel %vm829, %v855, 0.0
      %v903 = vsel %vm829, %v858, 0.0
      %v904 = vsel %vm829, %v861, 0.0
      %v905 = vsel %vm829, %v864, 0.0
      %v906 = vsel %vm829, %v867, 0.0
      %v907 = vsel %vm829, %v870, 0.0
      %v908 = vsel %vm829, %v873, 0.0
      %v909 = vsel %vm829, %v876, 0.0
      %910 = vrot.lane.b32.xlu0 %v668, 4
      %v911 = vpop.permute.xlu0 %910
      %912 = vrot.lane.b32.xlu0 %v669, 4
      %v913 = vpop.permute.xlu0 %912
      %914 = vrot.lane.b32.xlu0 %v670, 4
      %v915 = vpop.permute.xlu0 %914
      %916 = vrot.lane.b32.xlu0 %v671, 4
      %v917 = vpop.permute.xlu0 %916
      %918 = vrot.lane.b32.xlu0 %v672, 4
      %v919 = vpop.permute.xlu0 %918
      %920 = vrot.lane.b32.xlu0 %v673, 4
      %v921 = vpop.permute.xlu0 %920
      %922 = vrot.lane.b32.xlu0 %v674, 4
      %v923 = vpop.permute.xlu0 %922
      %924 = vrot.lane.b32.xlu0 %v675, 4
      %v925 = vpop.permute.xlu0 %924
      %926 = vrot.lane.b32.xlu0 %v676, 4
      %v927 = vpop.permute.xlu0 %926
      %928 = vrot.lane.b32.xlu0 %v677, 4
      %v929 = vpop.permute.xlu0 %928
      %930 = vrot.lane.b32.xlu0 %v678, 4
      %v931 = vpop.permute.xlu0 %930
      %932 = vrot.lane.b32.xlu0 %v679, 4
      %v933 = vpop.permute.xlu0 %932
      %934 = vrot.lane.b32.xlu0 %v680, 4
      %v935 = vpop.permute.xlu0 %934
      %936 = vrot.lane.b32.xlu0 %v681, 4
      %v937 = vpop.permute.xlu0 %936
      %938 = vrot.lane.b32.xlu0 %v682, 4
      %v939 = vpop.permute.xlu0 %938
      %940 = vrot.lane.b32.xlu0 %v683, 4
      %v941 = vpop.permute.xlu0 %940
      %942 = vrot.lane.b32.xlu0 %v684, 4
      %v943 = vpop.permute.xlu0 %942
      %944 = vrot.lane.b32.xlu0 %v685, 4
      %v945 = vpop.permute.xlu0 %944
      %946 = vrot.lane.b32.xlu0 %v686, 4
      %v947 = vpop.permute.xlu0 %946
      %948 = vrot.lane.b32.xlu0 %v687, 4
      %v949 = vpop.permute.xlu0 %948
      %950 = vrot.lane.b32.xlu0 %v688, 4
      %v951 = vpop.permute.xlu0 %950
      %952 = vrot.lane.b32.xlu0 %v689, 4
      %v953 = vpop.permute.xlu0 %952
      %954 = vrot.lane.b32.xlu0 %v690, 4
      %v955 = vpop.permute.xlu0 %954
      %956 = vrot.lane.b32.xlu0 %v691, 4
      %v957 = vpop.permute.xlu0 %956
      %958 = vrot.lane.b32.xlu0 %v692, 4
      %v959 = vpop.permute.xlu0 %958
      %960 = vrot.lane.b32.xlu0 %v693, 4
      %v961 = vpop.permute.xlu0 %960
      %962 = vrot.lane.b32.xlu0 %v694, 4
      %v963 = vpop.permute.xlu0 %962
      %964 = vrot.lane.b32.xlu0 %v695, 4
      %v965 = vpop.permute.xlu0 %964
      %966 = vrot.lane.b32.xlu0 %v696, 4
      %v967 = vpop.permute.xlu0 %966
      %968 = vrot.lane.b32.xlu0 %v697, 4
      %v969 = vpop.permute.xlu0 %968
      %970 = vrot.lane.b32.xlu0 %v698, 4
      %v971 = vpop.permute.xlu0 %970
      %972 = vrot.lane.b32.xlu0 %v699, 4
      %v973 = vpop.permute.xlu0 %972
      %1022 = vrot.lane.b32.xlu0 %v832, 8
      %v1023 = vpop.permute.xlu0 %1022
      %1024 = vrot.lane.b32.xlu0 %v894, 8
      %v1025 = vpop.permute.xlu0 %1024
      %1026 = vrot.lane.b32.xlu0 %v835, 8
      %v1027 = vpop.permute.xlu0 %1026
      %1028 = vrot.lane.b32.xlu0 %v895, 8
      %v1029 = vpop.permute.xlu0 %1028
      %1030 = vrot.lane.b32.xlu0 %v838, 8
      %v1031 = vpop.permute.xlu0 %1030
      %1032 = vrot.lane.b32.xlu0 %v896, 8
      %v1033 = vpop.permute.xlu0 %1032
      %1034 = vrot.lane.b32.xlu0 %v841, 8
      %v1035 = vpop.permute.xlu0 %1034
      %1036 = vrot.lane.b32.xlu0 %v897, 8
      %v1037 = vpop.permute.xlu0 %1036
      %1038 = vrot.lane.b32.xlu0 %v844, 8
      %v1039 = vpop.permute.xlu0 %1038
      %1040 = vrot.lane.b32.xlu0 %v898, 8
      %v1041 = vpop.permute.xlu0 %1040
      %1042 = vrot.lane.b32.xlu0 %v847, 8
      %v1043 = vpop.permute.xlu0 %1042
      %1044 = vrot.lane.b32.xlu0 %v899, 8
      %v1045 = vpop.permute.xlu0 %1044
      %1046 = vrot.lane.b32.xlu0 %v850, 8
      %v1047 = vpop.permute.xlu0 %1046
      %1048 = vrot.lane.b32.xlu0 %v900, 8
      %v1049 = vpop.permute.xlu0 %1048
      %1050 = vrot.lane.b32.xlu0 %v853, 8
      %v1051 = vpop.permute.xlu0 %1050
      %1052 = vrot.lane.b32.xlu0 %v901, 8
      %v1053 = vpop.permute.xlu0 %1052
      %1054 = vrot.lane.b32.xlu0 %v856, 8
      %v1055 = vpop.permute.xlu0 %1054
      %1056 = vrot.lane.b32.xlu0 %v902, 8
      %v1057 = vpop.permute.xlu0 %1056
      %1058 = vrot.lane.b32.xlu0 %v859, 8
      %v1059 = vpop.permute.xlu0 %1058
      %1060 = vrot.lane.b32.xlu0 %v903, 8
      %v1061 = vpop.permute.xlu0 %1060
      %1062 = vrot.lane.b32.xlu0 %v862, 8
      %v1063 = vpop.permute.xlu0 %1062
      %1064 = vrot.lane.b32.xlu0 %v904, 8
      %v1065 = vpop.permute.xlu0 %1064
      %1066 = vrot.lane.b32.xlu0 %v865, 8
      %v1067 = vpop.permute.xlu0 %1066
      %1068 = vrot.lane.b32.xlu0 %v905, 8
      %v1069 = vpop.permute.xlu0 %1068
      %1070 = vrot.lane.b32.xlu0 %v868, 8
      %v1071 = vpop.permute.xlu0 %1070
      %1072 = vrot.lane.b32.xlu0 %v906, 8
      %v1073 = vpop.permute.xlu0 %1072
      %1074 = vrot.lane.b32.xlu0 %v871, 8
      %v1075 = vpop.permute.xlu0 %1074
      %1076 = vrot.lane.b32.xlu0 %v907, 8
      %v1077 = vpop.permute.xlu0 %1076
      %1078 = vrot.lane.b32.xlu0 %v874, 8
      %v1079 = vpop.permute.xlu0 %1078
      %1080 = vrot.lane.b32.xlu0 %v908, 8
      %v1081 = vpop.permute.xlu0 %1080
      %1082 = vrot.lane.b32.xlu0 %v877, 8
      %v1083 = vpop.permute.xlu0 %1082
      %1084 = vrot.lane.b32.xlu0 %v909, 8
      %v1085 = vpop.permute.xlu0 %1084
      %vm1118 = vcmask 31744
      %v1119 = vsel %vm1118, %v813, %v911
      %v1120 = vsel %vm1118, %v735, %v913
      %v1121 = vsel %vm1118, %v814, %v915
      %v1122 = vsel %vm1118, %v738, %v917
      %v1123 = vsel %vm1118, %v815, %v919
      %v1124 = vsel %vm1118, %v741, %v921
      %v1125 = vsel %vm1118, %v816, %v923
      %v1126 = vsel %vm1118, %v744, %v925
      %v1127 = vsel %vm1118, %v817, %v927
      %v1128 = vsel %vm1118, %v747, %v929
      %v1129 = vsel %vm1118, %v818, %v931
      %v1130 = vsel %vm1118, %v750, %v933
      %v1131 = vsel %vm1118, %v819, %v935
      %v1132 = vsel %vm1118, %v753, %v937
      %v1133 = vsel %vm1118, %v820, %v939
      %v1134 = vsel %vm1118, %v756, %v941
      %v1135 = vsel %vm1118, %v821, %v943
      %v1136 = vsel %vm1118, %v759, %v945
      %v1137 = vsel %vm1118, %v822, %v947
      %v1138 = vsel %vm1118, %v762, %v949
      %v1139 = vsel %vm1118, %v823, %v951
      %v1140 = vsel %vm1118, %v765, %v953
      %v1141 = vsel %vm1118, %v824, %v955
      %v1142 = vsel %vm1118, %v768, %v957
      %v1143 = vsel %vm1118, %v825, %v959
      %v1144 = vsel %vm1118, %v771, %v961
      %v1145 = vsel %vm1118, %v826, %v963
      %v1146 = vsel %vm1118, %v774, %v965
      %v1147 = vsel %vm1118, %v827, %v967
      %v1148 = vsel %vm1118, %v777, %v969
      %v1149 = vsel %vm1118, %v828, %v971
      %v1150 = vsel %vm1118, %v780, %v973
      %vm1151 = vcmask 64512
      %v1152 = vsel %vm1151, %v1119, %v1023
      %v1153 = vsel %vm1151, %v1120, %v1025
      %v1154 = vsel %vm1151, %v1121, %v1027
      %v1155 = vsel %vm1151, %v1122, %v1029
      %v1156 = vsel %vm1151, %v1123, %v1031
      %v1157 = vsel %vm1151, %v1124, %v1033
      %v1158 = vsel %vm1151, %v1125, %v1035
      %v1159 = vsel %vm1151, %v1126, %v1037
      %v1160 = vsel %vm1151, %v1127, %v1039
      %v1161 = vsel %vm1151, %v1128, %v1041
      %v1162 = vsel %vm1151, %v1129, %v1043
      %v1163 = vsel %vm1151, %v1130, %v1045
      %v1164 = vsel %vm1151, %v1131, %v1047
      %v1165 = vsel %vm1151, %v1132, %v1049
      %v1166 = vsel %vm1151, %v1133, %v1051
      %v1167 = vsel %vm1151, %v1134, %v1053
      %v1168 = vsel %vm1151, %v1135, %v1055
      %v1169 = vsel %vm1151, %v1136, %v1057
      %v1170 = vsel %vm1151, %v1137, %v1059
      %v1171 = vsel %vm1151, %v1138, %v1061
      %v1172 = vsel %vm1151, %v1139, %v1063
      %v1173 = vsel %vm1151, %v1140, %v1065
      %v1174 = vsel %vm1151, %v1141, %v1067
      %v1175 = vsel %vm1151, %v1142, %v1069
      %v1176 = vsel %vm1151, %v1143, %v1071
      %v1177 = vsel %vm1151, %v1144, %v1073
      %v1178 = vsel %vm1151, %v1145, %v1075
      %v1179 = vsel %vm1151, %v1146, %v1077
      %v1180 = vsel %vm1151, %v1147, %v1079
      %v1181 = vsel %vm1151, %v1148, %v1081
      %v1182 = vsel %vm1151, %v1149, %v1083
      %v1183 = vsel %vm1151, %v1150, %v1085
      %v1184 = vpack.c.bf16 %v1153, %v1152
      %v1185 = vpack.c.bf16 %v1155, %v1154
      %v1186 = vpack.c.bf16 %v1157, %v1156
      %v1187 = vpack.c.bf16 %v1159, %v1158
      %v1188 = vpack.c.bf16 %v1161, %v1160
      %v1189 = vpack.c.bf16 %v1163, %v1162
      %v1190 = vpack.c.bf16 %v1165, %v1164
      %v1191 = vpack.c.bf16 %v1167, %v1166
      %v1192 = vpack.c.bf16 %v1169, %v1168
      %v1193 = vpack.c.bf16 %v1171, %v1170
      %v1194 = vpack.c.bf16 %v1173, %v1172
      %v1195 = vpack.c.bf16 %v1175, %v1174
      %v1196 = vpack.c.bf16 %v1177, %v1176
      %v1197 = vpack.c.bf16 %v1179, %v1178
      %v1198 = vpack.c.bf16 %v1181, %v1180
      %v1199 = vpack.c.bf16 %v1183, %v1182
      %vm1200 = vcmask 97280
      %1201 = vst.msk [vmem:[#allocation2] sm:$0xff] %vm1200, 0
      %1202 = vst.msk [vmem:[#allocation2 + $0x88] sm:$0xff] %vm1200, 0
      %1203 = vst.msk [vmem:[#allocation2 + $0x8] sm:$0xff] %vm1200, %v1184
      %1204 = vst.msk [vmem:[#allocation2 + $0x10] sm:$0xff] %vm1200, %v1185
      %1205 = vst.msk [vmem:[#allocation2 + $0x18] sm:$0xff] %vm1200, %v1186
      %1206 = vst.msk [vmem:[#allocation2 + $0x20] sm:$0xff] %vm1200, %v1187
      %1207 = vst.msk [vmem:[#allocation2 + $0x28] sm:$0xff] %vm1200, %v1188
      %1208 = vst.msk [vmem:[#allocation2 + $0x30] sm:$0xff] %vm1200, %v1189
      %1209 = vst.msk [vmem:[#allocation2 + $0x38] sm:$0xff] %vm1200, %v1190
      %1210 = vst.msk [vmem:[#allocation2 + $0x40] sm:$0xff] %vm1200, %v1191
      %1211 = vst.msk [vmem:[#allocation2 + $0x48] sm:$0xff] %vm1200, %v1192
      %1212 = vst.msk [vmem:[#allocation2 + $0x50] sm:$0xff] %vm1200, %v1193
      %1213 = vst.msk [vmem:[#allocation2 + $0x58] sm:$0xff] %vm1200, %v1194
      %1214 = vst.msk [vmem:[#allocation2 + $0x60] sm:$0xff] %vm1200, %v1195
      %1215 = vst.msk [vmem:[#allocation2 + $0x68] sm:$0xff] %vm1200, %v1196
      %1216 = vst.msk [vmem:[#allocation2 + $0x70] sm:$0xff] %vm1200, %v1197
      %1217 = vst.msk [vmem:[#allocation2 + $0x78] sm:$0xff] %vm1200, %v1198
      %1218 = vst.msk [vmem:[#allocation2 + $0x80] sm:$0xff] %vm1200, %v1199
      %s1219 = scalar_lea.vmem %s3, 8
      %v1220 = vld [vmem:[%s1219] sm:$0xf]
      %v1221 = vld [vmem:[%s1219 + $0x4] sm:$0x3]
      %v1222 = vld [vmem:[#allocation2] sm:$0xff]
      %v1223 = vld [vmem:[#allocation2 + $0x8] sm:$0xff]
      %v1224 = vld [vmem:[#allocation2 + $0x10] sm:$0xff]
      %v1225 = vld [vmem:[#allocation2 + $0x18] sm:$0xff]
      %v1226 = vld [vmem:[#allocation2 + $0x20] sm:$0xff]
      %v1227 = vld [vmem:[#allocation2 + $0x28] sm:$0xff]
      %v1228 = vld [vmem:[#allocation2 + $0x30] sm:$0xff]
      %v1229 = vld [vmem:[#allocation2 + $0x38] sm:$0xff]
      %v1230 = vld [vmem:[#allocation2 + $0x40] sm:$0xff]
      %v1231 = vld [vmem:[#allocation2 + $0x48] sm:$0xff]
      %v1232 = vld [vmem:[#allocation2 + $0x50] sm:$0xff]
      %v1233 = vld [vmem:[#allocation2 + $0x58] sm:$0xff]
      %v1234 = vld [vmem:[#allocation2 + $0x60] sm:$0xff]
      %v1235 = vld [vmem:[#allocation2 + $0x68] sm:$0xff]
      %v1236 = vld [vmem:[#allocation2 + $0x70] sm:$0xff]
      %v1237 = vld [vmem:[#allocation2 + $0x78] sm:$0xff]
      %v1238 = vld [vmem:[%s3] sm:$0xf]
      %v1239 = vld [vmem:[%s3 + $0x4] sm:$0x3]
      %v1242 = vunpack.c.l.b16 %v1238
      %v1243 = vunpack.c.l.b16 %v1239
      %v1244 = vpack.c.b16 %v1243, %v1242
      %v1246 = vsel %vm1200, %v1222, 0
      %v1249 = vsel %vm1200, %v1223, 0
      %v1252 = vsel %vm1200, %v1224, 0
      %v1255 = vsel %vm1200, %v1225, 0
      %v1258 = vsel %vm1200, %v1226, 0
      %v1261 = vsel %vm1200, %v1227, 0
      %v1264 = vsel %vm1200, %v1228, 0
      %v1267 = vsel %vm1200, %v1229, 0
      %v1270 = vsel %vm1200, %v1230, 0
      %v1273 = vsel %vm1200, %v1231, 0
      %v1276 = vsel %vm1200, %v1232, 0
      %v1279 = vsel %vm1200, %v1233, 0
      %v1282 = vsel %vm1200, %v1234, 0
      %v1285 = vsel %vm1200, %v1235, 0
      %v1288 = vsel %vm1200, %v1236, 0
      %v1291 = vsel %vm1200, %v1237, 0
      %vm1293 = vcmask 1045504
      %v1295 = vsel %vm1293, %v1244, 0
      %1297 = vmatprep.subr.bf16.mxu0 0
      %1298 = vmatpush1.bf16.msra.mxu0 %v1295
      %1299 = vmatprep.subr.bf16.mxu0 0
      %1300 = vmatpush1.bf16.msra.mxu0 0
      %1301 = vmatprep.subr.bf16.mxu0 0
      %1302 = vmatpush1.bf16.msra.mxu0 0
      %1303 = vmatprep.subr.bf16.mxu0 0
      %1304 = vmatpush1.bf16.msra.mxu0 0
      %1305 = vmatprep.subr.bf16.mxu0 0
      %1306 = vmatpush1.bf16.msra.mxu0 0
      %1307 = vmatprep.subr.bf16.mxu0 0
      %1308 = vmatpush1.bf16.msra.mxu0 0
      %1309 = vmatprep.subr.bf16.mxu0 0
      %1310 = vmatpush1.bf16.msra.mxu0 0
      %1311 = vmatprep.subr.bf16.mxu0 0
      %1312 = vmatpush1.bf16.msra.mxu0 0
      %1313 = vmatprep.subr.bf16.mxu0 0
      %1314 = vmatpush1.bf16.msra.mxu0 0
      %1315 = vmatprep.subr.bf16.mxu0 0
      %1316 = vmatpush1.bf16.msra.mxu0 0
      %1317 = vmatprep.subr.bf16.mxu0 0
      %1318 = vmatpush1.bf16.msra.mxu0 0
      %1319 = vmatprep.subr.bf16.mxu0 0
      %1320 = vmatpush1.bf16.msra.mxu0 0
      %1321 = vmatprep.subr.bf16.mxu0 0
      %1322 = vmatpush1.bf16.msra.mxu0 0
      %1323 = vmatprep.subr.bf16.mxu0 0
      %1324 = vmatpush1.bf16.msra.mxu0 0
      %1325 = vmatprep.subr.bf16.mxu0 0
      %1326 = vmatpush1.bf16.msra.mxu0 0
      %1327 = vmatprep.subr.bf16.mxu0 0
      %1328 = vmatpush1.bf16.msra.mxu0 0
      %1329 = vmatprep.mubr.bf16.mxu0 0
      %1330 = vmatmul.mubr.bf16.gmra.mrb[0].mxu0 %v1246
      %v1331 = vpop.f32.mrb[0].mxu0
      %v1332 = vadd.f32 0.0, %v1331
      %v1333 = vpop.f32.mrb[0].mxu0
      %v1334 = vpop.f32.mrb[0].mxu0
      %v1335 = vadd.f32 0.0, %v1334
      %v1336 = vpop.f32.mrb[0].mxu0
      %1337 = vmatprep.mubr.bf16.mxu0 0
      %1338 = vmatmul.mubr.bf16.gmra.mrb[0].mxu0 %v1249
      %v1339 = vpop.f32.mrb[0].mxu0
      %v1340 = vadd.f32 0.0, %v1339
      %v1341 = vpop.f32.mrb[0].mxu0
      %v1342 = vpop.f32.mrb[0].mxu0
      %v1343 = vadd.f32 0.0, %v1342
      %v1344 = vpop.f32.mrb[0].mxu0
      %1345 = vmatprep.mubr.bf16.mxu0 0
      %1346 = vmatmul.mubr.bf16.gmra.mrb[0].mxu0 %v1252
      %v1347 = vpop.f32.mrb[0].mxu0
      %v1348 = vadd.f32 0.0, %v1347
      %v1349 = vpop.f32.mrb[0].mxu0
      %v1350 = vpop.f32.mrb[0].mxu0
      %v1351 = vadd.f32 0.0, %v1350
      %v1352 = vpop.f32.mrb[0].mxu0
      %1353 = vmatprep.mubr.bf16.mxu0 0
      %1354 = vmatmul.mubr.bf16.gmra.mrb[0].mxu0 %v1255
      %v1355 = vpop.f32.mrb[0].mxu0
      %v1356 = vadd.f32 0.0, %v1355
      %v1357 = vpop.f32.mrb[0].mxu0
      %v1358 = vpop.f32.mrb[0].mxu0
      %v1359 = vadd.f32 0.0, %v1358
      %v1360 = vpop.f32.mrb[0].mxu0
      %1361 = vmatprep.mubr.bf16.mxu0 0
      %1362 = vmatmul.mubr.bf16.gmra.mrb[0].mxu0 %v1258
      %v1363 = vpop.f32.mrb[0].mxu0
      %v1364 = vadd.f32 0.0, %v1363
      %v1365 = vpop.f32.mrb[0].mxu0
      %v1366 = vpop.f32.mrb[0].mxu0
      %v1367 = vadd.f32 0.0, %v1366
      %v1368 = vpop.f32.mrb[0].mxu0
      %1369 = vmatprep.mubr.bf16.mxu0 0
      %1370 = vmatmul.mubr.bf16.gmra.mrb[0].mxu0 %v1261
      %v1371 = vpop.f32.mrb[0].mxu0
      %v1372 = vadd.f32 0.0, %v1371
      %v1373 = vpop.f32.mrb[0].mxu0
      %v1374 = vpop.f32.mrb[0].mxu0
      %v1375 = vadd.f32 0.0, %v1374
      %v1376 = vpop.f32.mrb[0].mxu0
      %1377 = vmatprep.mubr.bf16.mxu0 0
      %1378 = vmatmul.mubr.bf16.gmra.mrb[0].mxu0 %v1264
      %v1379 = vpop.f32.mrb[0].mxu0
      %v1380 = vadd.f32 0.0, %v1379
      %v1381 = vpop.f32.mrb[0].mxu0
      %v1382 = vpop.f32.mrb[0].mxu0
      %v1383 = vadd.f32 0.0, %v1382
      %v1384 = vpop.f32.mrb[0].mxu0
      %1385 = vmatprep.mubr.bf16.mxu0 0
      %1386 = vmatmul.mubr.bf16.gmra.mrb[0].mxu0 %v1267
      %v1387 = vpop.f32.mrb[0].mxu0
      %v1388 = vadd.f32 0.0, %v1387
      %v1389 = vpop.f32.mrb[0].mxu0
      %v1390 = vpop.f32.mrb[0].mxu0
      %v1391 = vadd.f32 0.0, %v1390
      %v1392 = vpop.f32.mrb[0].mxu0
      %1393 = vmatprep.mubr.bf16.mxu0 0
      %1394 = vmatmul.mubr.bf16.gmra.mrb[0].mxu0 %v1270
      %v1395 = vpop.f32.mrb[0].mxu0
      %v1396 = vadd.f32 0.0, %v1395
      %v1397 = vpop.f32.mrb[0].mxu0
      %v1398 = vpop.f32.mrb[0].mxu0
      %v1399 = vadd.f32 0.0, %v1398
      %v1400 = vpop.f32.mrb[0].mxu0
      %1401 = vmatprep.mubr.bf16.mxu0 0
      %1402 = vmatmul.mubr.bf16.gmra.mrb[0].mxu0 %v1273
      %v1403 = vpop.f32.mrb[0].mxu0
      %v1404 = vadd.f32 0.0, %v1403
      %v1405 = vpop.f32.mrb[0].mxu0
      %v1406 = vpop.f32.mrb[0].mxu0
      %v1407 = vadd.f32 0.0, %v1406
      %v1408 = vpop.f32.mrb[0].mxu0
      %1409 = vmatprep.mubr.bf16.mxu0 0
      %1410 = vmatmul.mubr.bf16.gmra.mrb[0].mxu0 %v1276
      %v1411 = vpop.f32.mrb[0].mxu0
      %v1412 = vadd.f32 0.0, %v1411
      %v1413 = vpop.f32.mrb[0].mxu0
      %v1414 = vpop.f32.mrb[0].mxu0
      %v1415 = vadd.f32 0.0, %v1414
      %v1416 = vpop.f32.mrb[0].mxu0
      %1417 = vmatprep.mubr.bf16.mxu0 0
      %1418 = vmatmul.mubr.bf16.gmra.mrb[0].mxu0 %v1279
      %v1419 = vpop.f32.mrb[0].mxu0
      %v1420 = vadd.f32 0.0, %v1419
      %v1421 = vpop.f32.mrb[0].mxu0
      %v1422 = vpop.f32.mrb[0].mxu0
      %v1423 = vadd.f32 0.0, %v1422
      %v1424 = vpop.f32.mrb[0].mxu0
      %1425 = vmatprep.mubr.bf16.mxu0 0
      %1426 = vmatmul.mubr.bf16.gmra.mrb[0].mxu0 %v1282
      %v1427 = vpop.f32.mrb[0].mxu0
      %v1428 = vadd.f32 0.0, %v1427
      %v1429 = vpop.f32.mrb[0].mxu0
      %v1430 = vpop.f32.mrb[0].mxu0
      %v1431 = vadd.f32 0.0, %v1430
      %v1432 = vpop.f32.mrb[0].mxu0
      %1433 = vmatprep.mubr.bf16.mxu0 0
      %1434 = vmatmul.mubr.bf16.gmra.mrb[0].mxu0 %v1285
      %v1435 = vpop.f32.mrb[0].mxu0
      %v1436 = vadd.f32 0.0, %v1435
      %v1437 = vpop.f32.mrb[0].mxu0
      %v1438 = vpop.f32.mrb[0].mxu0
      %v1439 = vadd.f32 0.0, %v1438
      %v1440 = vpop.f32.mrb[0].mxu0
      %1441 = vmatprep.mubr.bf16.mxu0 0
      %1442 = vmatmul.mubr.bf16.gmra.mrb[0].mxu0 %v1288
      %v1443 = vpop.f32.mrb[0].mxu0
      %v1444 = vadd.f32 0.0, %v1443
      %v1445 = vpop.f32.mrb[0].mxu0
      %v1446 = vpop.f32.mrb[0].mxu0
      %v1447 = vadd.f32 0.0, %v1446
      %v1448 = vpop.f32.mrb[0].mxu0
      %1449 = vmatprep.mubr.bf16.mxu0 0
      %1450 = vmatmul.mubr.bf16.gmra.mrb[0].mxu0 %v1291
      %v1451 = vpop.f32.mrb[0].mxu0
      %v1452 = vadd.f32 0.0, %v1451
      %v1453 = vpop.f32.mrb[0].mxu0
      %v1454 = vpop.f32.mrb[0].mxu0
      %v1455 = vadd.f32 0.0, %v1454
      %v1456 = vpop.f32.mrb[0].mxu0
      %1457 = vdwg.mxu0
      %v1460 = vunpack.c.l.b16 %v1220
      %v1461 = vunpack.c.l.b16 %v1221
      %v1462 = vpack.c.b16 %v1461, %v1460
      %v1464 = vsel %vm1200, %v1184, 0
      %v1467 = vsel %vm1200, %v1185, 0
      %v1470 = vsel %vm1200, %v1186, 0
      %v1473 = vsel %vm1200, %v1187, 0
      %v1476 = vsel %vm1200, %v1188, 0
      %v1479 = vsel %vm1200, %v1189, 0
      %v1482 = vsel %vm1200, %v1190, 0
      %v1485 = vsel %vm1200, %v1191, 0
      %v1488 = vsel %vm1200, %v1192, 0
      %v1491 = vsel %vm1200, %v1193, 0
      %v1494 = vsel %vm1200, %v1194, 0
      %v1497 = vsel %vm1200, %v1195, 0
      %v1500 = vsel %vm1200, %v1196, 0
      %v1503 = vsel %vm1200, %v1197, 0
      %v1506 = vsel %vm1200, %v1198, 0
      %v1509 = vsel %vm1200, %v1199, 0
      %v1512 = vsel %vm1293, %v1462, 0
      %1514 = vmatprep.subr.bf16.mxu0 0
      %1515 = vmatpush1.bf16.msra.mxu0 %v1512
      %1516 = vmatprep.subr.bf16.mxu0 0
      %1517 = vmatpush1.bf16.msra.mxu0 0
      %1518 = vmatprep.subr.bf16.mxu0 0
      %1519 = vmatpush1.bf16.msra.mxu0 0
      %1520 = vmatprep.subr.bf16.mxu0 0
      %1521 = vmatpush1.bf16.msra.mxu0 0
      %1522 = vmatprep.subr.bf16.mxu0 0
      %1523 = vmatpush1.bf16.msra.mxu0 0
      %1524 = vmatprep.subr.bf16.mxu0 0
      %1525 = vmatpush1.bf16.msra.mxu0 0
      %1526 = vmatprep.subr.bf16.mxu0 0
      %1527 = vmatpush1.bf16.msra.mxu0 0
      %1528 = vmatprep.subr.bf16.mxu0 0
      %1529 = vmatpush1.bf16.msra.mxu0 0
      %1530 = vmatprep.subr.bf16.mxu0 0
      %1531 = vmatpush1.bf16.msra.mxu0 0
      %1532 = vmatprep.subr.bf16.mxu0 0
      %1533 = vmatpush1.bf16.msra.mxu0 0
      %1534 = vmatprep.subr.bf16.mxu0 0
      %1535 = vmatpush1.bf16.msra.mxu0 0
      %1536 = vmatprep.subr.bf16.mxu0 0
      %1537 = vmatpush1.bf16.msra.mxu0 0
      %1538 = vmatprep.subr.bf16.mxu0 0
      %1539 = vmatpush1.bf16.msra.mxu0 0
      %1540 = vmatprep.subr.bf16.mxu0 0
      %1541 = vmatpush1.bf16.msra.mxu0 0
      %1542 = vmatprep.subr.bf16.mxu0 0
      %1543 = vmatpush1.bf16.msra.mxu0 0
      %1544 = vmatprep.subr.bf16.mxu0 0
      %1545 = vmatpush1.bf16.msra.mxu0 0
      %1546 = vmatprep.mubr.bf16.mxu0 0
      %1547 = vmatmul.mubr.bf16.gmra.mrb[0].mxu0 %v1464
      %v1548 = vpop.f32.mrb[0].mxu0
      %v1549 = vadd.f32 %v1332, %v1548
      %v1550 = vpop.f32.mrb[0].mxu0
      %v1551 = vpop.f32.mrb[0].mxu0
      %v1552 = vadd.f32 %v1335, %v1551
      %v1553 = vpop.f32.mrb[0].mxu0
      %1554 = vmatprep.mubr.bf16.mxu0 0
      %1555 = vmatmul.mubr.bf16.gmra.mrb[0].mxu0 %v1467
      %v1556 = vpop.f32.mrb[0].mxu0
      %v1557 = vadd.f32 %v1340, %v1556
      %v1558 = vpop.f32.mrb[0].mxu0
      %v1559 = vpop.f32.mrb[0].mxu0
      %v1560 = vadd.f32 %v1343, %v1559
      %v1561 = vpop.f32.mrb[0].mxu0
      %1562 = vmatprep.mubr.bf16.mxu0 0
      %1563 = vmatmul.mubr.bf16.gmra.mrb[0].mxu0 %v1470
      %v1564 = vpop.f32.mrb[0].mxu0
      %v1565 = vadd.f32 %v1348, %v1564
      %v1566 = vpop.f32.mrb[0].mxu0
      %v1567 = vpop.f32.mrb[0].mxu0
      %v1568 = vadd.f32 %v1351, %v1567
      %v1569 = vpop.f32.mrb[0].mxu0
      %1570 = vmatprep.mubr.bf16.mxu0 0
      %1571 = vmatmul.mubr.bf16.gmra.mrb[0].mxu0 %v1473
      %v1572 = vpop.f32.mrb[0].mxu0
      %v1573 = vadd.f32 %v1356, %v1572
      %v1574 = vpop.f32.mrb[0].mxu0
      %v1575 = vpop.f32.mrb[0].mxu0
      %v1576 = vadd.f32 %v1359, %v1575
      %v1577 = vpop.f32.mrb[0].mxu0
      %1578 = vmatprep.mubr.bf16.mxu0 0
      %1579 = vmatmul.mubr.bf16.gmra.mrb[0].mxu0 %v1476
      %v1580 = vpop.f32.mrb[0].mxu0
      %v1581 = vadd.f32 %v1364, %v1580
      %v1582 = vpop.f32.mrb[0].mxu0
      %v1583 = vpop.f32.mrb[0].mxu0
      %v1584 = vadd.f32 %v1367, %v1583
      %v1585 = vpop.f32.mrb[0].mxu0
      %1586 = vmatprep.mubr.bf16.mxu0 0
      %1587 = vmatmul.mubr.bf16.gmra.mrb[0].mxu0 %v1479
      %v1588 = vpop.f32.mrb[0].mxu0
      %v1589 = vadd.f32 %v1372, %v1588
      %v1590 = vpop.f32.mrb[0].mxu0
      %v1591 = vpop.f32.mrb[0].mxu0
      %v1592 = vadd.f32 %v1375, %v1591
      %v1593 = vpop.f32.mrb[0].mxu0
      %1594 = vmatprep.mubr.bf16.mxu0 0
      %1595 = vmatmul.mubr.bf16.gmra.mrb[0].mxu0 %v1482
      %v1596 = vpop.f32.mrb[0].mxu0
      %v1597 = vadd.f32 %v1380, %v1596
      %v1598 = vpop.f32.mrb[0].mxu0
      %v1599 = vpop.f32.mrb[0].mxu0
      %v1600 = vadd.f32 %v1383, %v1599
      %v1601 = vpop.f32.mrb[0].mxu0
      %1602 = vmatprep.mubr.bf16.mxu0 0
      %1603 = vmatmul.mubr.bf16.gmra.mrb[0].mxu0 %v1485
      %v1604 = vpop.f32.mrb[0].mxu0
      %v1605 = vadd.f32 %v1388, %v1604
      %v1606 = vpop.f32.mrb[0].mxu0
      %v1607 = vpop.f32.mrb[0].mxu0
      %v1608 = vadd.f32 %v1391, %v1607
      %v1609 = vpop.f32.mrb[0].mxu0
      %1610 = vmatprep.mubr.bf16.mxu0 0
      %1611 = vmatmul.mubr.bf16.gmra.mrb[0].mxu0 %v1488
      %v1612 = vpop.f32.mrb[0].mxu0
      %v1613 = vadd.f32 %v1396, %v1612
      %v1614 = vpop.f32.mrb[0].mxu0
      %v1615 = vpop.f32.mrb[0].mxu0
      %v1616 = vadd.f32 %v1399, %v1615
      %v1617 = vpop.f32.mrb[0].mxu0
      %1618 = vmatprep.mubr.bf16.mxu0 0
      %1619 = vmatmul.mubr.bf16.gmra.mrb[0].mxu0 %v1491
      %v1620 = vpop.f32.mrb[0].mxu0
      %v1621 = vadd.f32 %v1404, %v1620
      %v1622 = vpop.f32.mrb[0].mxu0
      %v1623 = vpop.f32.mrb[0].mxu0
      %v1624 = vadd.f32 %v1407, %v1623
      %v1625 = vpop.f32.mrb[0].mxu0
      %1626 = vmatprep.mubr.bf16.mxu0 0
      %1627 = vmatmul.mubr.bf16.gmra.mrb[0].mxu0 %v1494
      %v1628 = vpop.f32.mrb[0].mxu0
      %v1629 = vadd.f32 %v1412, %v1628
      %v1630 = vpop.f32.mrb[0].mxu0
      %v1631 = vpop.f32.mrb[0].mxu0
      %v1632 = vadd.f32 %v1415, %v1631
      %v1633 = vpop.f32.mrb[0].mxu0
      %1634 = vmatprep.mubr.bf16.mxu0 0
      %1635 = vmatmul.mubr.bf16.gmra.mrb[0].mxu0 %v1497
      %v1636 = vpop.f32.mrb[0].mxu0
      %v1637 = vadd.f32 %v1420, %v1636
      %v1638 = vpop.f32.mrb[0].mxu0
      %v1639 = vpop.f32.mrb[0].mxu0
      %v1640 = vadd.f32 %v1423, %v1639
      %v1641 = vpop.f32.mrb[0].mxu0
      %1642 = vmatprep.mubr.bf16.mxu0 0
      %1643 = vmatmul.mubr.bf16.gmra.mrb[0].mxu0 %v1500
      %v1644 = vpop.f32.mrb[0].mxu0
      %v1645 = vadd.f32 %v1428, %v1644
      %v1646 = vpop.f32.mrb[0].mxu0
      %v1647 = vpop.f32.mrb[0].mxu0
      %v1648 = vadd.f32 %v1431, %v1647
      %v1649 = vpop.f32.mrb[0].mxu0
      %1650 = vmatprep.mubr.bf16.mxu0 0
      %1651 = vmatmul.mubr.bf16.gmra.mrb[0].mxu0 %v1503
      %v1652 = vpop.f32.mrb[0].mxu0
      %v1653 = vadd.f32 %v1436, %v1652
      %v1654 = vpop.f32.mrb[0].mxu0
      %v1655 = vpop.f32.mrb[0].mxu0
      %v1656 = vadd.f32 %v1439, %v1655
      %v1657 = vpop.f32.mrb[0].mxu0
      %1658 = vmatprep.mubr.bf16.mxu0 0
      %1659 = vmatmul.mubr.bf16.gmra.mrb[0].mxu0 %v1506
      %v1660 = vpop.f32.mrb[0].mxu0
      %v1661 = vadd.f32 %v1444, %v1660
      %v1662 = vpop.f32.mrb[0].mxu0
      %v1663 = vpop.f32.mrb[0].mxu0
      %v1664 = vadd.f32 %v1447, %v1663
      %v1665 = vpop.f32.mrb[0].mxu0
      %1666 = vmatprep.mubr.bf16.mxu0 0
      %1667 = vmatmul.mubr.bf16.gmra.mrb[0].mxu0 %v1509
      %v1668 = vpop.f32.mrb[0].mxu0
      %v1669 = vadd.f32 %v1452, %v1668
      %v1670 = vpop.f32.mrb[0].mxu0
      %v1671 = vpop.f32.mrb[0].mxu0
      %v1672 = vadd.f32 %v1455, %v1671
      %v1673 = vpop.f32.mrb[0].mxu0
      %1674 = vdwg.mxu0
      %v1675 = vld [vmem:[#allocation2 + $0x10] sm:$0xff]
      %v1676 = vld [vmem:[#allocation2 + $0x18] sm:$0xff]
      %v1677 = vld [vmem:[#allocation2 + $0x20] sm:$0xff]
      %v1678 = vld [vmem:[#allocation2 + $0x28] sm:$0xff]
      %v1679 = vld [vmem:[#allocation2 + $0x30] sm:$0xff]
      %v1680 = vld [vmem:[#allocation2 + $0x38] sm:$0xff]
      %v1681 = vld [vmem:[#allocation2 + $0x40] sm:$0xff]
      %v1682 = vld [vmem:[#allocation2 + $0x48] sm:$0xff]
      %v1683 = vld [vmem:[#allocation2 + $0x50] sm:$0xff]
      %v1684 = vld [vmem:[#allocation2 + $0x58] sm:$0xff]
      %v1685 = vld [vmem:[#allocation2 + $0x60] sm:$0xff]
      %v1686 = vld [vmem:[#allocation2 + $0x68] sm:$0xff]
      %v1687 = vld [vmem:[#allocation2 + $0x70] sm:$0xff]
      %v1688 = vld [vmem:[#allocation2 + $0x78] sm:$0xff]
      %v1689 = vld [vmem:[#allocation2 + $0x80] sm:$0xff]
      %v1690 = vld [vmem:[#allocation2 + $0x88] sm:$0xff]
      %s1691 = scalar_lea.vmem %s3, 16
      %v1692 = vld [vmem:[%s1691] sm:$0xf]
      %v1693 = vld [vmem:[%s1691 + $0x4] sm:$0x3]
      %v1696 = vunpack.c.l.b16 %v1692
      %v1697 = vunpack.c.l.b16 %v1693
      %v1698 = vpack.c.b16 %v1697, %v1696
      %v1700 = vsel %vm1200, %v1675, 0
      %v1703 = vsel %vm1200, %v1676, 0
      %v1706 = vsel %vm1200, %v1677, 0
      %v1709 = vsel %vm1200, %v1678, 0
      %v1712 = vsel %vm1200, %v1679, 0
      %v1715 = vsel %vm1200, %v1680, 0
      %v1718 = vsel %vm1200, %v1681, 0
      %v1721 = vsel %vm1200, %v1682, 0
      %v1724 = vsel %vm1200, %v1683, 0
      %v1727 = vsel %vm1200, %v1684, 0
      %v1730 = vsel %vm1200, %v1685, 0
      %v1733 = vsel %vm1200, %v1686, 0
      %v1736 = vsel %vm1200, %v1687, 0
      %v1739 = vsel %vm1200, %v1688, 0
      %v1742 = vsel %vm1200, %v1689, 0
      %v1745 = vsel %vm1200, %v1690, 0
      %v1748 = vsel %vm1293, %v1698, 0
      %1750 = vmatprep.subr.bf16.mxu0 0
      %1751 = vmatpush1.bf16.msra.mxu0 %v1748
      %1752 = vmatprep.subr.bf16.mxu0 0
      %1753 = vmatpush1.bf16.msra.mxu0 0
      %1754 = vmatprep.subr.bf16.mxu0 0
      %1755 = vmatpush1.bf16.msra.mxu0 0
      %1756 = vmatprep.subr.bf16.mxu0 0
      %1757 = vmatpush1.bf16.msra.mxu0 0
      %1758 = vmatprep.subr.bf16.mxu0 0
      %1759 = vmatpush1.bf16.msra.mxu0 0
      %1760 = vmatprep.subr.bf16.mxu0 0
      %1761 = vmatpush1.bf16.msra.mxu0 0
      %1762 = vmatprep.subr.bf16.mxu0 0
      %1763 = vmatpush1.bf16.msra.mxu0 0
      %1764 = vmatprep.subr.bf16.mxu0 0
      %1765 = vmatpush1.bf16.msra.mxu0 0
      %1766 = vmatprep.subr.bf16.mxu0 0
      %1767 = vmatpush1.bf16.msra.mxu0 0
      %1768 = vmatprep.subr.bf16.mxu0 0
      %1769 = vmatpush1.bf16.msra.mxu0 0
      %1770 = vmatprep.subr.bf16.mxu0 0
      %1771 = vmatpush1.bf16.msra.mxu0 0
      %1772 = vmatprep.subr.bf16.mxu0 0
      %1773 = vmatpush1.bf16.msra.mxu0 0
      %1774 = vmatprep.subr.bf16.mxu0 0
      %1775 = vmatpush1.bf16.msra.mxu0 0
      %1776 = vmatprep.subr.bf16.mxu0 0
      %1777 = vmatpush1.bf16.msra.mxu0 0
      %1778 = vmatprep.subr.bf16.mxu0 0
      %1779 = vmatpush1.bf16.msra.mxu0 0
      %1780 = vmatprep.subr.bf16.mxu0 0
      %1781 = vmatpush1.bf16.msra.mxu0 0
      %1782 = vmatprep.mubr.bf16.mxu0 0
      %1783 = vmatmul.mubr.bf16.gmra.mrb[0].mxu0 %v1700
      %v1784 = vpop.f32.mrb[0].mxu0
      %v1785 = vadd.f32 0.0, %v1784
      %v1786 = vpop.f32.mrb[0].mxu0
      %v1787 = vpop.f32.mrb[0].mxu0
      %v1788 = vadd.f32 0.0, %v1787
      %v1789 = vpop.f32.mrb[0].mxu0
      %1790 = vmatprep.mubr.bf16.mxu0 0
      %1791 = vmatmul.mubr.bf16.gmra.mrb[0].mxu0 %v1703
      %v1792 = vpop.f32.mrb[0].mxu0
      %v1793 = vadd.f32 0.0, %v1792
      %v1794 = vpop.f32.mrb[0].mxu0
      %v1795 = vpop.f32.mrb[0].mxu0
      %v1796 = vadd.f32 0.0, %v1795
      %v1797 = vpop.f32.mrb[0].mxu0
      %1798 = vmatprep.mubr.bf16.mxu0 0
      %1799 = vmatmul.mubr.bf16.gmra.mrb[0].mxu0 %v1706
      %v1800 = vpop.f32.mrb[0].mxu0
      %v1801 = vadd.f32 0.0, %v1800
      %v1802 = vpop.f32.mrb[0].mxu0
      %v1803 = vpop.f32.mrb[0].mxu0
      %v1804 = vadd.f32 0.0, %v1803
      %v1805 = vpop.f32.mrb[0].mxu0
      %1806 = vmatprep.mubr.bf16.mxu0 0
      %1807 = vmatmul.mubr.bf16.gmra.mrb[0].mxu0 %v1709
      %v1808 = vpop.f32.mrb[0].mxu0
      %v1809 = vadd.f32 0.0, %v1808
      %v1810 = vpop.f32.mrb[0].mxu0
      %v1811 = vpop.f32.mrb[0].mxu0
      %v1812 = vadd.f32 0.0, %v1811
      %v1813 = vpop.f32.mrb[0].mxu0
      %1814 = vmatprep.mubr.bf16.mxu0 0
      %1815 = vmatmul.mubr.bf16.gmra.mrb[0].mxu0 %v1712
      %v1816 = vpop.f32.mrb[0].mxu0
      %v1817 = vadd.f32 0.0, %v1816
      %v1818 = vpop.f32.mrb[0].mxu0
      %v1819 = vpop.f32.mrb[0].mxu0
      %v1820 = vadd.f32 0.0, %v1819
      %v1821 = vpop.f32.mrb[0].mxu0
      %1822 = vmatprep.mubr.bf16.mxu0 0
      %1823 = vmatmul.mubr.bf16.gmra.mrb[0].mxu0 %v1715
      %v1824 = vpop.f32.mrb[0].mxu0
      %v1825 = vadd.f32 0.0, %v1824
      %v1826 = vpop.f32.mrb[0].mxu0
      %v1827 = vpop.f32.mrb[0].mxu0
      %v1828 = vadd.f32 0.0, %v1827
      %v1829 = vpop.f32.mrb[0].mxu0
      %1830 = vmatprep.mubr.bf16.mxu0 0
      %1831 = vmatmul.mubr.bf16.gmra.mrb[0].mxu0 %v1718
      %v1832 = vpop.f32.mrb[0].mxu0
      %v1833 = vadd.f32 0.0, %v1832
      %v1834 = vpop.f32.mrb[0].mxu0
      %v1835 = vpop.f32.mrb[0].mxu0
      %v1836 = vadd.f32 0.0, %v1835
      %v1837 = vpop.f32.mrb[0].mxu0
      %1838 = vmatprep.mubr.bf16.mxu0 0
      %1839 = vmatmul.mubr.bf16.gmra.mrb[0].mxu0 %v1721
      %v1840 = vpop.f32.mrb[0].mxu0
      %v1841 = vadd.f32 0.0, %v1840
      %v1842 = vpop.f32.mrb[0].mxu0
      %v1843 = vpop.f32.mrb[0].mxu0
      %v1844 = vadd.f32 0.0, %v1843
      %v1845 = vpop.f32.mrb[0].mxu0
      %1846 = vmatprep.mubr.bf16.mxu0 0
      %1847 = vmatmul.mubr.bf16.gmra.mrb[0].mxu0 %v1724
      %v1848 = vpop.f32.mrb[0].mxu0
      %v1849 = vadd.f32 0.0, %v1848
      %v1850 = vpop.f32.mrb[0].mxu0
      %v1851 = vpop.f32.mrb[0].mxu0
      %v1852 = vadd.f32 0.0, %v1851
      %v1853 = vpop.f32.mrb[0].mxu0
      %1854 = vmatprep.mubr.bf16.mxu0 0
      %1855 = vmatmul.mubr.bf16.gmra.mrb[0].mxu0 %v1727
      %v1856 = vpop.f32.mrb[0].mxu0
      %v1857 = vadd.f32 0.0, %v1856
      %v1858 = vpop.f32.mrb[0].mxu0
      %v1859 = vpop.f32.mrb[0].mxu0
      %v1860 = vadd.f32 0.0, %v1859
      %v1861 = vpop.f32.mrb[0].mxu0
      %1862 = vmatprep.mubr.bf16.mxu0 0
      %1863 = vmatmul.mubr.bf16.gmra.mrb[0].mxu0 %v1730
      %v1864 = vpop.f32.mrb[0].mxu0
      %v1865 = vadd.f32 0.0, %v1864
      %v1866 = vpop.f32.mrb[0].mxu0
      %v1867 = vpop.f32.mrb[0].mxu0
      %v1868 = vadd.f32 0.0, %v1867
      %v1869 = vpop.f32.mrb[0].mxu0
      %1870 = vmatprep.mubr.bf16.mxu0 0
      %1871 = vmatmul.mubr.bf16.gmra.mrb[0].mxu0 %v1733
      %v1872 = vpop.f32.mrb[0].mxu0
      %v1873 = vadd.f32 0.0, %v1872
      %v1874 = vpop.f32.mrb[0].mxu0
      %v1875 = vpop.f32.mrb[0].mxu0
      %v1876 = vadd.f32 0.0, %v1875
      %v1877 = vpop.f32.mrb[0].mxu0
      %1878 = vmatprep.mubr.bf16.mxu0 0
      %1879 = vmatmul.mubr.bf16.gmra.mrb[0].mxu0 %v1736
      %v1880 = vpop.f32.mrb[0].mxu0
      %v1881 = vadd.f32 0.0, %v1880
      %v1882 = vpop.f32.mrb[0].mxu0
      %v1883 = vpop.f32.mrb[0].mxu0
      %v1884 = vadd.f32 0.0, %v1883
      %v1885 = vpop.f32.mrb[0].mxu0
      %1886 = vmatprep.mubr.bf16.mxu0 0
      %1887 = vmatmul.mubr.bf16.gmra.mrb[0].mxu0 %v1739
      %v1888 = vpop.f32.mrb[0].mxu0
      %v1889 = vadd.f32 0.0, %v1888
      %v1890 = vpop.f32.mrb[0].mxu0
      %v1891 = vpop.f32.mrb[0].mxu0
      %v1892 = vadd.f32 0.0, %v1891
      %v1893 = vpop.f32.mrb[0].mxu0
      %1894 = vmatprep.mubr.bf16.mxu0 0
      %1895 = vmatmul.mubr.bf16.gmra.mrb[0].mxu0 %v1742
      %v1896 = vpop.f32.mrb[0].mxu0
      %v1897 = vadd.f32 0.0, %v1896
      %v1898 = vpop.f32.mrb[0].mxu0
      %v1899 = vpop.f32.mrb[0].mxu0
      %v1900 = vadd.f32 0.0, %v1899
      %v1901 = vpop.f32.mrb[0].mxu0
      %1902 = vmatprep.mubr.bf16.mxu0 0
      %1903 = vmatmul.mubr.bf16.gmra.mrb[0].mxu0 %v1745
      %v1904 = vpop.f32.mrb[0].mxu0
      %v1905 = vadd.f32 0.0, %v1904
      %v1906 = vpop.f32.mrb[0].mxu0
      %v1907 = vpop.f32.mrb[0].mxu0
      %v1908 = vadd.f32 0.0, %v1907
      %v1909 = vpop.f32.mrb[0].mxu0
      %1910 = vdwg.mxu0
      %v1911 = vadd.f32 %v1549, %v1785
      %v1912 = vadd.f32 %v1552, %v1788
      %v1913 = vadd.f32 %v1557, %v1793
      %v1914 = vadd.f32 %v1560, %v1796
      %v1915 = vadd.f32 %v1565, %v1801
      %v1916 = vadd.f32 %v1568, %v1804
      %v1917 = vadd.f32 %v1573, %v1809
      %v1918 = vadd.f32 %v1576, %v1812
      %v1919 = vadd.f32 %v1581, %v1817
      %v1920 = vadd.f32 %v1584, %v1820
      %v1921 = vadd.f32 %v1589, %v1825
      %v1922 = vadd.f32 %v1592, %v1828
      %v1923 = vadd.f32 %v1597, %v1833
      %v1924 = vadd.f32 %v1600, %v1836
      %v1925 = vadd.f32 %v1605, %v1841
      %v1926 = vadd.f32 %v1608, %v1844
      %v1927 = vadd.f32 %v1613, %v1849
      %v1928 = vadd.f32 %v1616, %v1852
      %v1929 = vadd.f32 %v1621, %v1857
      %v1930 = vadd.f32 %v1624, %v1860
      %v1931 = vadd.f32 %v1629, %v1865
      %v1932 = vadd.f32 %v1632, %v1868
      %v1933 = vadd.f32 %v1637, %v1873
      %v1934 = vadd.f32 %v1640, %v1876
      %v1935 = vadd.f32 %v1645, %v1881
      %v1936 = vadd.f32 %v1648, %v1884
      %v1937 = vadd.f32 %v1653, %v1889
      %v1938 = vadd.f32 %v1656, %v1892
      %v1939 = vadd.f32 %v1661, %v1897
      %v1940 = vadd.f32 %v1664, %v1900
      %v1941 = vadd.f32 %v1669, %v1905
      %v1942 = vadd.f32 %v1672, %v1908
      %v1943 = vld [vmem:[%s4] sm:$0x1]
      %v1945 = vlaneseq
      %v1946 = vshrl.u32 %v1945, 7
      %v1947 = vsub.s32 0, %v1946
      %v1948 = vrot.slane %v1943, %v1947
      %v1950 = vmul.f32 %v1911, %v1948
      %v1951 = vmul.f32 %v1912, %v1948
      %v1952 = vmul.f32 %v1913, %v1948
      %v1953 = vmul.f32 %v1914, %v1948
      %v1954 = vmul.f32 %v1915, %v1948
      %v1955 = vmul.f32 %v1916, %v1948
      %v1956 = vmul.f32 %v1917, %v1948
      %v1957 = vmul.f32 %v1918, %v1948
      %v1958 = vmul.f32 %v1919, %v1948
      %v1959 = vmul.f32 %v1920, %v1948
      %v1960 = vmul.f32 %v1921, %v1948
      %v1961 = vmul.f32 %v1922, %v1948
      %v1962 = vmul.f32 %v1923, %v1948
      %v1963 = vmul.f32 %v1924, %v1948
      %v1964 = vmul.f32 %v1925, %v1948
      %v1965 = vmul.f32 %v1926, %v1948
      %v1966 = vmul.f32 %v1927, %v1948
      %v1967 = vmul.f32 %v1928, %v1948
      %v1968 = vmul.f32 %v1929, %v1948
      %v1969 = vmul.f32 %v1930, %v1948
      %v1970 = vmul.f32 %v1931, %v1948
      %v1971 = vmul.f32 %v1932, %v1948
      %v1972 = vmul.f32 %v1933, %v1948
      %v1973 = vmul.f32 %v1934, %v1948
      %v1974 = vmul.f32 %v1935, %v1948
      %v1975 = vmul.f32 %v1936, %v1948
      %v1976 = vmul.f32 %v1937, %v1948
      %v1977 = vmul.f32 %v1938, %v1948
      %v1978 = vmul.f32 %v1939, %v1948
      %v1979 = vmul.f32 %v1940, %v1948
      %v1980 = vmul.f32 %v1941, %v1948
      %v1981 = vmul.f32 %v1942, %v1948
      %v1982 = vld [vmem:[%s5] sm:$0x1]
      %v1984 = vlaneseq
      %v1985 = vshrl.u32 %v1984, 7
      %v1986 = vsub.s32 0, %v1985
      %v1987 = vrot.slane %v1982, %v1986
      %v1989 = vadd.f32 %v1950, %v1987
      %v1990 = vadd.f32 %v1951, %v1987
      %v1991 = vadd.f32 %v1952, %v1987
      %v1992 = vadd.f32 %v1953, %v1987
      %v1993 = vadd.f32 %v1954, %v1987
      %v1994 = vadd.f32 %v1955, %v1987
      %v1995 = vadd.f32 %v1956, %v1987
      %v1996 = vadd.f32 %v1957, %v1987
      %v1997 = vadd.f32 %v1958, %v1987
      %v1998 = vadd.f32 %v1959, %v1987
      %v1999 = vadd.f32 %v1960, %v1987
      %v2000 = vadd.f32 %v1961, %v1987
      %v2001 = vadd.f32 %v1962, %v1987
      %v2002 = vadd.f32 %v1963, %v1987
      %v2003 = vadd.f32 %v1964, %v1987
      %v2004 = vadd.f32 %v1965, %v1987
      %v2005 = vadd.f32 %v1966, %v1987
      %v2006 = vadd.f32 %v1967, %v1987
      %v2007 = vadd.f32 %v1968, %v1987
      %v2008 = vadd.f32 %v1969, %v1987
      %v2009 = vadd.f32 %v1970, %v1987
      %v2010 = vadd.f32 %v1971, %v1987
      %v2011 = vadd.f32 %v1972, %v1987
      %v2012 = vadd.f32 %v1973, %v1987
      %v2013 = vadd.f32 %v1974, %v1987
      %v2014 = vadd.f32 %v1975, %v1987
      %v2015 = vadd.f32 %v1976, %v1987
      %v2016 = vadd.f32 %v1977, %v1987
      %v2017 = vadd.f32 %v1978, %v1987
      %v2018 = vadd.f32 %v1979, %v1987
      %v2019 = vadd.f32 %v1980, %v1987
      %v2020 = vadd.f32 %v1981, %v1987
      %v2021 = vxor.u32 %v1989, 2147483648
      %v2022 = vxor.u32 %v1990, 2147483648
      %v2023 = vxor.u32 %v1991, 2147483648
      %v2024 = vxor.u32 %v1992, 2147483648
      %v2025 = vxor.u32 %v1993, 2147483648
      %v2026 = vxor.u32 %v1994, 2147483648
      %v2027 = vxor.u32 %v1995, 2147483648
      %v2028 = vxor.u32 %v1996, 2147483648
      %v2029 = vxor.u32 %v1997, 2147483648
      %v2030 = vxor.u32 %v1998, 2147483648
      %v2031 = vxor.u32 %v1999, 2147483648
      %v2032 = vxor.u32 %v2000, 2147483648
      %v2033 = vxor.u32 %v2001, 2147483648
      %v2034 = vxor.u32 %v2002, 2147483648
      %v2035 = vxor.u32 %v2003, 2147483648
      %v2036 = vxor.u32 %v2004, 2147483648
      %v2037 = vxor.u32 %v2005, 2147483648
      %v2038 = vxor.u32 %v2006, 2147483648
      %v2039 = vxor.u32 %v2007, 2147483648
      %v2040 = vxor.u32 %v2008, 2147483648
      %v2041 = vxor.u32 %v2009, 2147483648
      %v2042 = vxor.u32 %v2010, 2147483648
      %v2043 = vxor.u32 %v2011, 2147483648
      %v2044 = vxor.u32 %v2012, 2147483648
      %v2045 = vxor.u32 %v2013, 2147483648
      %v2046 = vxor.u32 %v2014, 2147483648
      %v2047 = vxor.u32 %v2015, 2147483648
      %v2048 = vxor.u32 %v2016, 2147483648
      %v2049 = vxor.u32 %v2017, 2147483648
      %v2050 = vxor.u32 %v2018, 2147483648
      %v2051 = vxor.u32 %v2019, 2147483648
      %v2052 = vxor.u32 %v2020, 2147483648
      %v2053 = vmul.f32 %v2021, 1.442695
      %v2054 = vpow.pop %v2053
      %v2055 = vmul.f32 %v2022, 1.442695
      %v2056 = vpow.pop %v2055
      %v2057 = vmul.f32 %v2023, 1.442695
      %v2058 = vpow.pop %v2057
      %v2059 = vmul.f32 %v2024, 1.442695
      %v2060 = vpow.pop %v2059
      %v2061 = vmul.f32 %v2025, 1.442695
      %v2062 = vpow.pop %v2061
      %v2063 = vmul.f32 %v2026, 1.442695
      %v2064 = vpow.pop %v2063
      %v2065 = vmul.f32 %v2027, 1.442695
      %v2066 = vpow.pop %v2065
      %v2067 = vmul.f32 %v2028, 1.442695
      %v2068 = vpow.pop %v2067
      %v2069 = vmul.f32 %v2029, 1.442695
      %v2070 = vpow.pop %v2069
      %v2071 = vmul.f32 %v2030, 1.442695
      %v2072 = vpow.pop %v2071
      %v2073 = vmul.f32 %v2031, 1.442695
      %v2074 = vpow.pop %v2073
      %v2075 = vmul.f32 %v2032, 1.442695
      %v2076 = vpow.pop %v2075
      %v2077 = vmul.f32 %v2033, 1.442695
      %v2078 = vpow.pop %v2077
      %v2079 = vmul.f32 %v2034, 1.442695
      %v2080 = vpow.pop %v2079
      %v2081 = vmul.f32 %v2035, 1.442695
      %v2082 = vpow.pop %v2081
      %v2083 = vmul.f32 %v2036, 1.442695
      %v2084 = vpow.pop %v2083
      %v2085 = vmul.f32 %v2037, 1.442695
      %v2086 = vpow.pop %v2085
      %v2087 = vmul.f32 %v2038, 1.442695
      %v2088 = vpow.pop %v2087
      %v2089 = vmul.f32 %v2039, 1.442695
      %v2090 = vpow.pop %v2089
      %v2091 = vmul.f32 %v2040, 1.442695
      %v2092 = vpow.pop %v2091
      %v2093 = vmul.f32 %v2041, 1.442695
      %v2094 = vpow.pop %v2093
      %v2095 = vmul.f32 %v2042, 1.442695
      %v2096 = vpow.pop %v2095
      %v2097 = vmul.f32 %v2043, 1.442695
      %v2098 = vpow.pop %v2097
      %v2099 = vmul.f32 %v2044, 1.442695
      %v2100 = vpow.pop %v2099
      %v2101 = vmul.f32 %v2045, 1.442695
      %v2102 = vpow.pop %v2101
      %v2103 = vmul.f32 %v2046, 1.442695
      %v2104 = vpow.pop %v2103
      %v2105 = vmul.f32 %v2047, 1.442695
      %v2106 = vpow.pop %v2105
      %v2107 = vmul.f32 %v2048, 1.442695
      %v2108 = vpow.pop %v2107
      %v2109 = vmul.f32 %v2049, 1.442695
      %v2110 = vpow.pop %v2109
      %v2111 = vmul.f32 %v2050, 1.442695
      %v2112 = vpow.pop %v2111
      %v2113 = vmul.f32 %v2051, 1.442695
      %v2114 = vpow.pop %v2113
      %v2115 = vmul.f32 %v2052, 1.442695
      %v2116 = vpow.pop %v2115
      %v2117 = vadd.f32 %v2054, 1.0
      %v2118 = vadd.f32 %v2056, 1.0
      %v2119 = vadd.f32 %v2058, 1.0
      %v2120 = vadd.f32 %v2060, 1.0
      %v2121 = vadd.f32 %v2062, 1.0
      %v2122 = vadd.f32 %v2064, 1.0
      %v2123 = vadd.f32 %v2066, 1.0
      %v2124 = vadd.f32 %v2068, 1.0
      %v2125 = vadd.f32 %v2070, 1.0
      %v2126 = vadd.f32 %v2072, 1.0
      %v2127 = vadd.f32 %v2074, 1.0
      %v2128 = vadd.f32 %v2076, 1.0
      %v2129 = vadd.f32 %v2078, 1.0
      %v2130 = vadd.f32 %v2080, 1.0
      %v2131 = vadd.f32 %v2082, 1.0
      %v2132 = vadd.f32 %v2084, 1.0
      %v2133 = vadd.f32 %v2086, 1.0
      %v2134 = vadd.f32 %v2088, 1.0
      %v2135 = vadd.f32 %v2090, 1.0
      %v2136 = vadd.f32 %v2092, 1.0
      %v2137 = vadd.f32 %v2094, 1.0
      %v2138 = vadd.f32 %v2096, 1.0
      %v2139 = vadd.f32 %v2098, 1.0
      %v2140 = vadd.f32 %v2100, 1.0
      %v2141 = vadd.f32 %v2102, 1.0
      %v2142 = vadd.f32 %v2104, 1.0
      %v2143 = vadd.f32 %v2106, 1.0
      %v2144 = vadd.f32 %v2108, 1.0
      %v2145 = vadd.f32 %v2110, 1.0
      %v2146 = vadd.f32 %v2112, 1.0
      %v2147 = vadd.f32 %v2114, 1.0
      %v2148 = vadd.f32 %v2116, 1.0
      %v2149 = vrcp.pop %v2117
      %v2150 = vmul.f32 1.0, %v2149
      %v2151 = vrcp.pop %v2118
      %v2152 = vmul.f32 1.0, %v2151
      %v2153 = vrcp.pop %v2119
      %v2154 = vmul.f32 1.0, %v2153
      %v2155 = vrcp.pop %v2120
      %v2156 = vmul.f32 1.0, %v2155
      %v2157 = vrcp.pop %v2121
      %v2158 = vmul.f32 1.0, %v2157
      %v2159 = vrcp.pop %v2122
      %v2160 = vmul.f32 1.0, %v2159
      %v2161 = vrcp.pop %v2123
      %v2162 = vmul.f32 1.0, %v2161
      %v2163 = vrcp.pop %v2124
      %v2164 = vmul.f32 1.0, %v2163
      %v2165 = vrcp.pop %v2125
      %v2166 = vmul.f32 1.0, %v2165
      %v2167 = vrcp.pop %v2126
      %v2168 = vmul.f32 1.0, %v2167
      %v2169 = vrcp.pop %v2127
      %v2170 = vmul.f32 1.0, %v2169
      %v2171 = vrcp.pop %v2128
      %v2172 = vmul.f32 1.0, %v2171
      %v2173 = vrcp.pop %v2129
      %v2174 = vmul.f32 1.0, %v2173
      %v2175 = vrcp.pop %v2130
      %v2176 = vmul.f32 1.0, %v2175
      %v2177 = vrcp.pop %v2131
      %v2178 = vmul.f32 1.0, %v2177
      %v2179 = vrcp.pop %v2132
      %v2180 = vmul.f32 1.0, %v2179
      %v2181 = vrcp.pop %v2133
      %v2182 = vmul.f32 1.0, %v2181
      %v2183 = vrcp.pop %v2134
      %v2184 = vmul.f32 1.0, %v2183
      %v2185 = vrcp.pop %v2135
      %v2186 = vmul.f32 1.0, %v2185
      %v2187 = vrcp.pop %v2136
      %v2188 = vmul.f32 1.0, %v2187
      %v2189 = vrcp.pop %v2137
      %v2190 = vmul.f32 1.0, %v2189
      %v2191 = vrcp.pop %v2138
      %v2192 = vmul.f32 1.0, %v2191
      %v2193 = vrcp.pop %v2139
      %v2194 = vmul.f32 1.0, %v2193
      %v2195 = vrcp.pop %v2140
      %v2196 = vmul.f32 1.0, %v2195
      %v2197 = vrcp.pop %v2141
      %v2198 = vmul.f32 1.0, %v2197
      %v2199 = vrcp.pop %v2142
      %v2200 = vmul.f32 1.0, %v2199
      %v2201 = vrcp.pop %v2143
      %v2202 = vmul.f32 1.0, %v2201
      %v2203 = vrcp.pop %v2144
      %v2204 = vmul.f32 1.0, %v2203
      %v2205 = vrcp.pop %v2145
      %v2206 = vmul.f32 1.0, %v2205
      %v2207 = vrcp.pop %v2146
      %v2208 = vmul.f32 1.0, %v2207
      %v2209 = vrcp.pop %v2147
      %v2210 = vmul.f32 1.0, %v2209
      %v2211 = vrcp.pop %v2148
      %v2212 = vmul.f32 1.0, %v2211
      %v2213 = vmul.f32 %v1989, %v2150
      %v2214 = vmul.f32 %v1990, %v2152
      %v2215 = vmul.f32 %v1991, %v2154
      %v2216 = vmul.f32 %v1992, %v2156
      %v2217 = vmul.f32 %v1993, %v2158
      %v2218 = vmul.f32 %v1994, %v2160
      %v2219 = vmul.f32 %v1995, %v2162
      %v2220 = vmul.f32 %v1996, %v2164
      %v2221 = vmul.f32 %v1997, %v2166
      %v2222 = vmul.f32 %v1998, %v2168
      %v2223 = vmul.f32 %v1999, %v2170
      %v2224 = vmul.f32 %v2000, %v2172
      %v2225 = vmul.f32 %v2001, %v2174
      %v2226 = vmul.f32 %v2002, %v2176
      %v2227 = vmul.f32 %v2003, %v2178
      %v2228 = vmul.f32 %v2004, %v2180
      %v2229 = vmul.f32 %v2005, %v2182
      %v2230 = vmul.f32 %v2006, %v2184
      %v2231 = vmul.f32 %v2007, %v2186
      %v2232 = vmul.f32 %v2008, %v2188
      %v2233 = vmul.f32 %v2009, %v2190
      %v2234 = vmul.f32 %v2010, %v2192
      %v2235 = vmul.f32 %v2011, %v2194
      %v2236 = vmul.f32 %v2012, %v2196
      %v2237 = vmul.f32 %v2013, %v2198
      %v2238 = vmul.f32 %v2014, %v2200
      %v2239 = vmul.f32 %v2015, %v2202
      %v2240 = vmul.f32 %v2016, %v2204
      %v2241 = vmul.f32 %v2017, %v2206
      %v2242 = vmul.f32 %v2018, %v2208
      %v2243 = vmul.f32 %v2019, %v2210
      %v2244 = vmul.f32 %v2020, %v2212
      %v2277 = vrot.slane %v2213, 7
      %v2278 = vrot.slane %v2214, 7
      %v2279 = vsel %vm732, %v2277, %v2278
      %v2280 = vrot.slane %v2215, 7
      %v2281 = vrot.slane %v2216, 7
      %v2282 = vsel %vm732, %v2280, %v2281
      %v2283 = vrot.slane %v2217, 7
      %v2284 = vrot.slane %v2218, 7
      %v2285 = vsel %vm732, %v2283, %v2284
      %v2286 = vrot.slane %v2219, 7
      %v2287 = vrot.slane %v2220, 7
      %v2288 = vsel %vm732, %v2286, %v2287
      %v2289 = vrot.slane %v2221, 7
      %v2290 = vrot.slane %v2222, 7
      %v2291 = vsel %vm732, %v2289, %v2290
      %v2292 = vrot.slane %v2223, 7
      %v2293 = vrot.slane %v2224, 7
      %v2294 = vsel %vm732, %v2292, %v2293
      %v2295 = vrot.slane %v2225, 7
      %v2296 = vrot.slane %v2226, 7
      %v2297 = vsel %vm732, %v2295, %v2296
      %v2298 = vrot.slane %v2227, 7
      %v2299 = vrot.slane %v2228, 7
      %v2300 = vsel %vm732, %v2298, %v2299
      %v2301 = vrot.slane %v2229, 7
      %v2302 = vrot.slane %v2230, 7
      %v2303 = vsel %vm732, %v2301, %v2302
      %v2304 = vrot.slane %v2231, 7
      %v2305 = vrot.slane %v2232, 7
      %v2306 = vsel %vm732, %v2304, %v2305
      %v2307 = vrot.slane %v2233, 7
      %v2308 = vrot.slane %v2234, 7
      %v2309 = vsel %vm732, %v2307, %v2308
      %v2310 = vrot.slane %v2235, 7
      %v2311 = vrot.slane %v2236, 7
      %v2312 = vsel %vm732, %v2310, %v2311
      %v2313 = vrot.slane %v2237, 7
      %v2314 = vrot.slane %v2238, 7
      %v2315 = vsel %vm732, %v2313, %v2314
      %v2316 = vrot.slane %v2239, 7
      %v2317 = vrot.slane %v2240, 7
      %v2318 = vsel %vm732, %v2316, %v2317
      %v2319 = vrot.slane %v2241, 7
      %v2320 = vrot.slane %v2242, 7
      %v2321 = vsel %vm732, %v2319, %v2320
      %v2322 = vrot.slane %v2243, 7
      %v2323 = vrot.slane %v2244, 7
      %v2324 = vsel %vm732, %v2322, %v2323
      %v2357 = vsel %vm732, 0.0, %v2277
      %v2358 = vsel %vm732, 0.0, %v2280
      %v2359 = vsel %vm732, 0.0, %v2283
      %v2360 = vsel %vm732, 0.0, %v2286
      %v2361 = vsel %vm732, 0.0, %v2289
      %v2362 = vsel %vm732, 0.0, %v2292
      %v2363 = vsel %vm732, 0.0, %v2295
      %v2364 = vsel %vm732, 0.0, %v2298
      %v2365 = vsel %vm732, 0.0, %v2301
      %v2366 = vsel %vm732, 0.0, %v2304
      %v2367 = vsel %vm732, 0.0, %v2307
      %v2368 = vsel %vm732, 0.0, %v2310
      %v2369 = vsel %vm732, 0.0, %v2313
      %v2370 = vsel %vm732, 0.0, %v2316
      %v2371 = vsel %vm732, 0.0, %v2319
      %v2372 = vsel %vm732, 0.0, %v2322
      %v2373 = vrot.slane %v2213, 1
      %v2374 = vrot.slane %v2214, 1
      %v2375 = vsel %vm829, %v2373, %v2374
      %v2376 = vrot.slane %v2215, 1
      %v2377 = vrot.slane %v2216, 1
      %v2378 = vsel %vm829, %v2376, %v2377
      %v2379 = vrot.slane %v2217, 1
      %v2380 = vrot.slane %v2218, 1
      %v2381 = vsel %vm829, %v2379, %v2380
      %v2382 = vrot.slane %v2219, 1
      %v2383 = vrot.slane %v2220, 1
      %v2384 = vsel %vm829, %v2382, %v2383
      %v2385 = vrot.slane %v2221, 1
      %v2386 = vrot.slane %v2222, 1
      %v2387 = vsel %vm829, %v2385, %v2386
      %v2388 = vrot.slane %v2223, 1
      %v2389 = vrot.slane %v2224, 1
      %v2390 = vsel %vm829, %v2388, %v2389
      %v2391 = vrot.slane %v2225, 1
      %v2392 = vrot.slane %v2226, 1
      %v2393 = vsel %vm829, %v2391, %v2392
      %v2394 = vrot.slane %v2227, 1
      %v2395 = vrot.slane %v2228, 1
      %v2396 = vsel %vm829, %v2394, %v2395
      %v2397 = vrot.slane %v2229, 1
      %v2398 = vrot.slane %v2230, 1
      %v2399 = vsel %vm829, %v2397, %v2398
      %v2400 = vrot.slane %v2231, 1
      %v2401 = vrot.slane %v2232, 1
      %v2402 = vsel %vm829, %v2400, %v2401
      %v2403 = vrot.slane %v2233, 1
      %v2404 = vrot.slane %v2234, 1
      %v2405 = vsel %vm829, %v2403, %v2404
      %v2406 = vrot.slane %v2235, 1
      %v2407 = vrot.slane %v2236, 1
      %v2408 = vsel %vm829, %v2406, %v2407
      %v2409 = vrot.slane %v2237, 1
      %v2410 = vrot.slane %v2238, 1
      %v2411 = vsel %vm829, %v2409, %v2410
      %v2412 = vrot.slane %v2239, 1
      %v2413 = vrot.slane %v2240, 1
      %v2414 = vsel %vm829, %v2412, %v2413
      %v2415 = vrot.slane %v2241, 1
      %v2416 = vrot.slane %v2242, 1
      %v2417 = vsel %vm829, %v2415, %v2416
      %v2418 = vrot.slane %v2243, 1
      %v2419 = vrot.slane %v2244, 1
      %v2420 = vsel %vm829, %v2418, %v2419
      %v2437 = vsel %vm829, %v2374, 0.0
      %v2438 = vsel %vm829, %v2377, 0.0
      %v2439 = vsel %vm829, %v2380, 0.0
      %v2440 = vsel %vm829, %v2383, 0.0
      %v2441 = vsel %vm829, %v2386, 0.0
      %v2442 = vsel %vm829, %v2389, 0.0
      %v2443 = vsel %vm829, %v2392, 0.0
      %v2444 = vsel %vm829, %v2395, 0.0
      %v2445 = vsel %vm829, %v2398, 0.0
      %v2446 = vsel %vm829, %v2401, 0.0
      %v2447 = vsel %vm829, %v2404, 0.0
      %v2448 = vsel %vm829, %v2407, 0.0
      %v2449 = vsel %vm829, %v2410, 0.0
      %v2450 = vsel %vm829, %v2413, 0.0
      %v2451 = vsel %vm829, %v2416, 0.0
      %v2452 = vsel %vm829, %v2419, 0.0
      %2453 = vrot.lane.b32.xlu0 %v2213, 8
      %v2454 = vpop.permute.xlu0 %2453
      %2455 = vrot.lane.b32.xlu0 %v2214, 8
      %v2456 = vpop.permute.xlu0 %2455
      %2457 = vrot.lane.b32.xlu0 %v2215, 8
      %v2458 = vpop.permute.xlu0 %2457
      %2459 = vrot.lane.b32.xlu0 %v2216, 8
      %v2460 = vpop.permute.xlu0 %2459
      %2461 = vrot.lane.b32.xlu0 %v2217, 8
      %v2462 = vpop.permute.xlu0 %2461
      %2463 = vrot.lane.b32.xlu0 %v2218, 8
      %v2464 = vpop.permute.xlu0 %2463
      %2465 = vrot.lane.b32.xlu0 %v2219, 8
      %v2466 = vpop.permute.xlu0 %2465
      %2467 = vrot.lane.b32.xlu0 %v2220, 8
      %v2468 = vpop.permute.xlu0 %2467
      %2469 = vrot.lane.b32.xlu0 %v2221, 8
      %v2470 = vpop.permute.xlu0 %2469
      %2471 = vrot.lane.b32.xlu0 %v2222, 8
      %v2472 = vpop.permute.xlu0 %2471
      %2473 = vrot.lane.b32.xlu0 %v2223, 8
      %v2474 = vpop.permute.xlu0 %2473
      %2475 = vrot.lane.b32.xlu0 %v2224, 8
      %v2476 = vpop.permute.xlu0 %2475
      %2477 = vrot.lane.b32.xlu0 %v2225, 8
      %v2478 = vpop.permute.xlu0 %2477
      %2479 = vrot.lane.b32.xlu0 %v2226, 8
      %v2480 = vpop.permute.xlu0 %2479
      %2481 = vrot.lane.b32.xlu0 %v2227, 8
      %v2482 = vpop.permute.xlu0 %2481
      %2483 = vrot.lane.b32.xlu0 %v2228, 8
      %v2484 = vpop.permute.xlu0 %2483
      %2485 = vrot.lane.b32.xlu0 %v2229, 8
      %v2486 = vpop.permute.xlu0 %2485
      %2487 = vrot.lane.b32.xlu0 %v2230, 8
      %v2488 = vpop.permute.xlu0 %2487
      %2489 = vrot.lane.b32.xlu0 %v2231, 8
      %v2490 = vpop.permute.xlu0 %2489
      %2491 = vrot.lane.b32.xlu0 %v2232, 8
      %v2492 = vpop.permute.xlu0 %2491
      %2493 = vrot.lane.b32.xlu0 %v2233, 8
      %v2494 = vpop.permute.xlu0 %2493
      %2495 = vrot.lane.b32.xlu0 %v2234, 8
      %v2496 = vpop.permute.xlu0 %2495
      %2497 = vrot.lane.b32.xlu0 %v2235, 8
      %v2498 = vpop.permute.xlu0 %2497
      %2499 = vrot.lane.b32.xlu0 %v2236, 8
      %v2500 = vpop.permute.xlu0 %2499
      %2501 = vrot.lane.b32.xlu0 %v2237, 8
      %v2502 = vpop.permute.xlu0 %2501
      %2503 = vrot.lane.b32.xlu0 %v2238, 8
      %v2504 = vpop.permute.xlu0 %2503
      %2505 = vrot.lane.b32.xlu0 %v2239, 8
      %v2506 = vpop.permute.xlu0 %2505
      %2507 = vrot.lane.b32.xlu0 %v2240, 8
      %v2508 = vpop.permute.xlu0 %2507
      %2509 = vrot.lane.b32.xlu0 %v2241, 8
      %v2510 = vpop.permute.xlu0 %2509
      %2511 = vrot.lane.b32.xlu0 %v2242, 8
      %v2512 = vpop.permute.xlu0 %2511
      %2513 = vrot.lane.b32.xlu0 %v2243, 8
      %v2514 = vpop.permute.xlu0 %2513
      %2515 = vrot.lane.b32.xlu0 %v2244, 8
      %v2516 = vpop.permute.xlu0 %2515
      %2565 = vrot.lane.b32.xlu0 %v2375, 16
      %v2566 = vpop.permute.xlu0 %2565
      %2567 = vrot.lane.b32.xlu0 %v2437, 16
      %v2568 = vpop.permute.xlu0 %2567
      %2569 = vrot.lane.b32.xlu0 %v2378, 16
      %v2570 = vpop.permute.xlu0 %2569
      %2571 = vrot.lane.b32.xlu0 %v2438, 16
      %v2572 = vpop.permute.xlu0 %2571
      %2573 = vrot.lane.b32.xlu0 %v2381, 16
      %v2574 = vpop.permute.xlu0 %2573
      %2575 = vrot.lane.b32.xlu0 %v2439, 16
      %v2576 = vpop.permute.xlu0 %2575
      %2577 = vrot.lane.b32.xlu0 %v2384, 16
      %v2578 = vpop.permute.xlu0 %2577
      %2579 = vrot.lane.b32.xlu0 %v2440, 16
      %v2580 = vpop.permute.xlu0 %2579
      %2581 = vrot.lane.b32.xlu0 %v2387, 16
      %v2582 = vpop.permute.xlu0 %2581
      %2583 = vrot.lane.b32.xlu0 %v2441, 16
      %v2584 = vpop.permute.xlu0 %2583
      %2585 = vrot.lane.b32.xlu0 %v2390, 16
      %v2586 = vpop.permute.xlu0 %2585
      %2587 = vrot.lane.b32.xlu0 %v2442, 16
      %v2588 = vpop.permute.xlu0 %2587
      %2589 = vrot.lane.b32.xlu0 %v2393, 16
      %v2590 = vpop.permute.xlu0 %2589
      %2591 = vrot.lane.b32.xlu0 %v2443, 16
      %v2592 = vpop.permute.xlu0 %2591
      %2593 = vrot.lane.b32.xlu0 %v2396, 16
      %v2594 = vpop.permute.xlu0 %2593
      %2595 = vrot.lane.b32.xlu0 %v2444, 16
      %v2596 = vpop.permute.xlu0 %2595
      %2597 = vrot.lane.b32.xlu0 %v2399, 16
      %v2598 = vpop.permute.xlu0 %2597
      %2599 = vrot.lane.b32.xlu0 %v2445, 16
      %v2600 = vpop.permute.xlu0 %2599
      %2601 = vrot.lane.b32.xlu0 %v2402, 16
      %v2602 = vpop.permute.xlu0 %2601
      %2603 = vrot.lane.b32.xlu0 %v2446, 16
      %v2604 = vpop.permute.xlu0 %2603
      %2605 = vrot.lane.b32.xlu0 %v2405, 16
      %v2606 = vpop.permute.xlu0 %2605
      %2607 = vrot.lane.b32.xlu0 %v2447, 16
      %v2608 = vpop.permute.xlu0 %2607
      %2609 = vrot.lane.b32.xlu0 %v2408, 16
      %v2610 = vpop.permute.xlu0 %2609
      %2611 = vrot.lane.b32.xlu0 %v2448, 16
      %v2612 = vpop.permute.xlu0 %2611
      %2613 = vrot.lane.b32.xlu0 %v2411, 16
      %v2614 = vpop.permute.xlu0 %2613
      %2615 = vrot.lane.b32.xlu0 %v2449, 16
      %v2616 = vpop.permute.xlu0 %2615
      %2617 = vrot.lane.b32.xlu0 %v2414, 16
      %v2618 = vpop.permute.xlu0 %2617
      %2619 = vrot.lane.b32.xlu0 %v2450, 16
      %v2620 = vpop.permute.xlu0 %2619
      %2621 = vrot.lane.b32.xlu0 %v2417, 16
      %v2622 = vpop.permute.xlu0 %2621
      %2623 = vrot.lane.b32.xlu0 %v2451, 16
      %v2624 = vpop.permute.xlu0 %2623
      %2625 = vrot.lane.b32.xlu0 %v2420, 16
      %v2626 = vpop.permute.xlu0 %2625
      %2627 = vrot.lane.b32.xlu0 %v2452, 16
      %v2628 = vpop.permute.xlu0 %2627
      %v2661 = vsel %vm1151, %v2357, %v2454
      %v2662 = vsel %vm1151, %v2279, %v2456
      %v2663 = vsel %vm1151, %v2358, %v2458
      %v2664 = vsel %vm1151, %v2282, %v2460
      %v2665 = vsel %vm1151, %v2359, %v2462
      %v2666 = vsel %vm1151, %v2285, %v2464
      %v2667 = vsel %vm1151, %v2360, %v2466
      %v2668 = vsel %vm1151, %v2288, %v2468
      %v2669 = vsel %vm1151, %v2361, %v2470
      %v2670 = vsel %vm1151, %v2291, %v2472
      %v2671 = vsel %vm1151, %v2362, %v2474
      %v2672 = vsel %vm1151, %v2294, %v2476
      %v2673 = vsel %vm1151, %v2363, %v2478
      %v2674 = vsel %vm1151, %v2297, %v2480
      %v2675 = vsel %vm1151, %v2364, %v2482
      %v2676 = vsel %vm1151, %v2300, %v2484
      %v2677 = vsel %vm1151, %v2365, %v2486
      %v2678 = vsel %vm1151, %v2303, %v2488
      %v2679 = vsel %vm1151, %v2366, %v2490
      %v2680 = vsel %vm1151, %v2306, %v2492
      %v2681 = vsel %vm1151, %v2367, %v2494
      %v2682 = vsel %vm1151, %v2309, %v2496
      %v2683 = vsel %vm1151, %v2368, %v2498
      %v2684 = vsel %vm1151, %v2312, %v2500
      %v2685 = vsel %vm1151, %v2369, %v2502
      %v2686 = vsel %vm1151, %v2315, %v2504
      %v2687 = vsel %vm1151, %v2370, %v2506
      %v2688 = vsel %vm1151, %v2318, %v2508
      %v2689 = vsel %vm1151, %v2371, %v2510
      %v2690 = vsel %vm1151, %v2321, %v2512
      %v2691 = vsel %vm1151, %v2372, %v2514
      %v2692 = vsel %vm1151, %v2324, %v2516
      %vm2693 = vcmask 130048
      %v2694 = vsel %vm2693, %v2661, %v2566
      %v2695 = vsel %vm2693, %v2662, %v2568
      %v2696 = vsel %vm2693, %v2663, %v2570
      %v2697 = vsel %vm2693, %v2664, %v2572
      %v2698 = vsel %vm2693, %v2665, %v2574
      %v2699 = vsel %vm2693, %v2666, %v2576
      %v2700 = vsel %vm2693, %v2667, %v2578
      %v2701 = vsel %vm2693, %v2668, %v2580
      %v2702 = vsel %vm2693, %v2669, %v2582
      %v2703 = vsel %vm2693, %v2670, %v2584
      %v2704 = vsel %vm2693, %v2671, %v2586
      %v2705 = vsel %vm2693, %v2672, %v2588
      %v2706 = vsel %vm2693, %v2673, %v2590
      %v2707 = vsel %vm2693, %v2674, %v2592
      %v2708 = vsel %vm2693, %v2675, %v2594
      %v2709 = vsel %vm2693, %v2676, %v2596
      %v2710 = vsel %vm2693, %v2677, %v2598
      %v2711 = vsel %vm2693, %v2678, %v2600
      %v2712 = vsel %vm2693, %v2679, %v2602
      %v2713 = vsel %vm2693, %v2680, %v2604
      %v2714 = vsel %vm2693, %v2681, %v2606
      %v2715 = vsel %vm2693, %v2682, %v2608
      %v2716 = vsel %vm2693, %v2683, %v2610
      %v2717 = vsel %vm2693, %v2684, %v2612
      %v2718 = vsel %vm2693, %v2685, %v2614
      %v2719 = vsel %vm2693, %v2686, %v2616
      %v2720 = vsel %vm2693, %v2687, %v2618
      %v2721 = vsel %vm2693, %v2688, %v2620
      %v2722 = vsel %vm2693, %v2689, %v2622
      %v2723 = vsel %vm2693, %v2690, %v2624
      %v2724 = vsel %vm2693, %v2691, %v2626
      %v2725 = vsel %vm2693, %v2692, %v2628
      %v2726 = vpack.c.bf16 %v2695, %v2694
      %v2727 = vpack.c.bf16 %v2697, %v2696
      %v2728 = vpack.c.bf16 %v2699, %v2698
      %v2729 = vpack.c.bf16 %v2701, %v2700
      %v2730 = vpack.c.bf16 %v2703, %v2702
      %v2731 = vpack.c.bf16 %v2705, %v2704
      %v2732 = vpack.c.bf16 %v2707, %v2706
      %v2733 = vpack.c.bf16 %v2709, %v2708
      %v2734 = vpack.c.bf16 %v2711, %v2710
      %v2735 = vpack.c.bf16 %v2713, %v2712
      %v2736 = vpack.c.bf16 %v2715, %v2714
      %v2737 = vpack.c.bf16 %v2717, %v2716
      %v2738 = vpack.c.bf16 %v2719, %v2718
      %v2739 = vpack.c.bf16 %v2721, %v2720
      %v2740 = vpack.c.bf16 %v2723, %v2722
      %v2741 = vpack.c.bf16 %v2725, %v2724
      %vm2742 = vcmask 195584
      %2743 = vst.msk [vmem:[#allocation3] sm:$0xff] %vm2742, 0
      %2744 = vst.msk [vmem:[#allocation3 + $0x88] sm:$0xff] %vm2742, 0
      %2745 = vst.msk [vmem:[#allocation3 + $0x8] sm:$0xff] %vm2742, %v2726
      %2746 = vst.msk [vmem:[#allocation3 + $0x10] sm:$0xff] %vm2742, %v2727
      %2747 = vst.msk [vmem:[#allocation3 + $0x18] sm:$0xff] %vm2742, %v2728
      %2748 = vst.msk [vmem:[#allocation3 + $0x20] sm:$0xff] %vm2742, %v2729
      %2749 = vst.msk [vmem:[#allocation3 + $0x28] sm:$0xff] %vm2742, %v2730
      %2750 = vst.msk [vmem:[#allocation3 + $0x30] sm:$0xff] %vm2742, %v2731
      %2751 = vst.msk [vmem:[#allocation3 + $0x38] sm:$0xff] %vm2742, %v2732
      %2752 = vst.msk [vmem:[#allocation3 + $0x40] sm:$0xff] %vm2742, %v2733
      %2753 = vst.msk [vmem:[#allocation3 + $0x48] sm:$0xff] %vm2742, %v2734
      %2754 = vst.msk [vmem:[#allocation3 + $0x50] sm:$0xff] %vm2742, %v2735
      %2755 = vst.msk [vmem:[#allocation3 + $0x58] sm:$0xff] %vm2742, %v2736
      %2756 = vst.msk [vmem:[#allocation3 + $0x60] sm:$0xff] %vm2742, %v2737
      %2757 = vst.msk [vmem:[#allocation3 + $0x68] sm:$0xff] %vm2742, %v2738
      %2758 = vst.msk [vmem:[#allocation3 + $0x70] sm:$0xff] %vm2742, %v2739
      %2759 = vst.msk [vmem:[#allocation3 + $0x78] sm:$0xff] %vm2742, %v2740
      %2760 = vst.msk [vmem:[#allocation3 + $0x80] sm:$0xff] %vm2742, %v2741
      %s2761 = scalar_lea.vmem %s6, 12
      %v2762 = vld [vmem:[%s2761] sm:$0xf]
      %v2763 = vld [vmem:[%s2761 + $0x4] sm:$0xf]
      %v2764 = vld [vmem:[%s2761 + $0x8] sm:$0xf]
      %v2765 = vld [vmem:[#allocation3] sm:$0xff]
      %v2766 = vld [vmem:[#allocation3 + $0x8] sm:$0xff]
      %v2767 = vld [vmem:[#allocation3 + $0x10] sm:$0xff]
      %v2768 = vld [vmem:[#allocation3 + $0x18] sm:$0xff]
      %v2769 = vld [vmem:[#allocation3 + $0x20] sm:$0xff]
      %v2770 = vld [vmem:[#allocation3 + $0x28] sm:$0xff]
      %v2771 = vld [vmem:[#allocation3 + $0x30] sm:$0xff]
      %v2772 = vld [vmem:[#allocation3 + $0x38] sm:$0xff]
      %v2773 = vld [vmem:[#allocation3 + $0x40] sm:$0xff]
      %v2774 = vld [vmem:[#allocation3 + $0x48] sm:$0xff]
      %v2775 = vld [vmem:[#allocation3 + $0x50] sm:$0xff]
      %v2776 = vld [vmem:[#allocation3 + $0x58] sm:$0xff]
      %v2777 = vld [vmem:[#allocation3 + $0x60] sm:$0xff]
      %v2778 = vld [vmem:[#allocation3 + $0x68] sm:$0xff]
      %v2779 = vld [vmem:[#allocation3 + $0x70] sm:$0xff]
      %v2780 = vld [vmem:[#allocation3 + $0x78] sm:$0xff]
      %v2781 = vld [vmem:[%s6] sm:$0xf]
      %v2782 = vld [vmem:[%s6 + $0x4] sm:$0xf]
      %v2783 = vld [vmem:[%s6 + $0x8] sm:$0xf]
      %v2787 = vunpack.c.l.b16 %v2781
      %v2788 = vunpack.c.l.b16 %v2782
      %v2789 = vunpack.c.l.b16 %v2783
      %v2790 = vpack.c.b16 %v2788, %v2787
      %v2791 = vpack.c.b16 %v2789, %v2789
      %v2794 = vsel %vm2742, %v2765, 0
      %v2797 = vsel %vm2742, %v2766, 0
      %v2800 = vsel %vm2742, %v2767, 0
      %v2803 = vsel %vm2742, %v2768, 0
      %v2806 = vsel %vm2742, %v2769, 0
      %v2809 = vsel %vm2742, %v2770, 0
      %v2812 = vsel %vm2742, %v2771, 0
      %v2815 = vsel %vm2742, %v2772, 0
      %v2818 = vsel %vm2742, %v2773, 0
      %v2821 = vsel %vm2742, %v2774, 0
      %v2824 = vsel %vm2742, %v2775, 0
      %v2827 = vsel %vm2742, %v2776, 0
      %v2830 = vsel %vm2742, %v2777, 0
      %v2833 = vsel %vm2742, %v2778, 0
      %v2836 = vsel %vm2742, %v2779, 0
      %v2839 = vsel %vm2742, %v2780, 0
      %vm2841 = vcmask 1043456
      %v2843 = vsel %vm2841, %v2791, 0
      %2845 = vmatprep.subr.bf16.mxu0 0
      %2846 = vmatpush1.bf16.msra.mxu0 %v2790
      %2847 = vmatprep.subr.bf16.mxu0 0
      %2848 = vmatpush1.bf16.msra.mxu0 %v2843
      %2849 = vmatprep.subr.bf16.mxu0 0
      %2850 = vmatpush1.bf16.msra.mxu0 0
      %2851 = vmatprep.subr.bf16.mxu0 0
      %2852 = vmatpush1.bf16.msra.mxu0 0
      %2853 = vmatprep.subr.bf16.mxu0 0
      %2854 = vmatpush1.bf16.msra.mxu0 0
      %2855 = vmatprep.subr.bf16.mxu0 0
      %2856 = vmatpush1.bf16.msra.mxu0 0
      %2857 = vmatprep.subr.bf16.mxu0 0
      %2858 = vmatpush1.bf16.msra.mxu0 0
      %2859 = vmatprep.subr.bf16.mxu0 0
      %2860 = vmatpush1.bf16.msra.mxu0 0
      %2861 = vmatprep.subr.bf16.mxu0 0
      %2862 = vmatpush1.bf16.msra.mxu0 0
      %2863 = vmatprep.subr.bf16.mxu0 0
      %2864 = vmatpush1.bf16.msra.mxu0 0
      %2865 = vmatprep.subr.bf16.mxu0 0
      %2866 = vmatpush1.bf16.msra.mxu0 0
      %2867 = vmatprep.subr.bf16.mxu0 0
      %2868 = vmatpush1.bf16.msra.mxu0 0
      %2869 = vmatprep.subr.bf16.mxu0 0
      %2870 = vmatpush1.bf16.msra.mxu0 0
      %2871 = vmatprep.subr.bf16.mxu0 0
      %2872 = vmatpush1.bf16.msra.mxu0 0
      %2873 = vmatprep.subr.bf16.mxu0 0
      %2874 = vmatpush1.bf16.msra.mxu0 0
      %2875 = vmatprep.subr.bf16.mxu0 0
      %2876 = vmatpush1.bf16.msra.mxu0 0
      %2877 = vmatprep.mubr.bf16.mxu0 0
      %2878 = vmatmul.mubr.bf16.gmra.mrb[0].mxu0 %v2794
      %v2879 = vpop.f32.mrb[0].mxu0
      %v2880 = vadd.f32 0.0, %v2879
      %v2881 = vpop.f32.mrb[0].mxu0
      %v2882 = vpop.f32.mrb[0].mxu0
      %v2883 = vadd.f32 0.0, %v2882
      %v2884 = vpop.f32.mrb[0].mxu0
      %2885 = vmatprep.mubr.bf16.mxu0 0
      %2886 = vmatmul.mubr.bf16.gmra.mrb[0].mxu0 %v2797
      %v2887 = vpop.f32.mrb[0].mxu0
      %v2888 = vadd.f32 0.0, %v2887
      %v2889 = vpop.f32.mrb[0].mxu0
      %v2890 = vpop.f32.mrb[0].mxu0
      %v2891 = vadd.f32 0.0, %v2890
      %v2892 = vpop.f32.mrb[0].mxu0
      %2893 = vmatprep.mubr.bf16.mxu0 0
      %2894 = vmatmul.mubr.bf16.gmra.mrb[0].mxu0 %v2800
      %v2895 = vpop.f32.mrb[0].mxu0
      %v2896 = vadd.f32 0.0, %v2895
      %v2897 = vpop.f32.mrb[0].mxu0
      %v2898 = vpop.f32.mrb[0].mxu0
      %v2899 = vadd.f32 0.0, %v2898
      %v2900 = vpop.f32.mrb[0].mxu0
      %2901 = vmatprep.mubr.bf16.mxu0 0
      %2902 = vmatmul.mubr.bf16.gmra.mrb[0].mxu0 %v2803
      %v2903 = vpop.f32.mrb[0].mxu0
      %v2904 = vadd.f32 0.0, %v2903
      %v2905 = vpop.f32.mrb[0].mxu0
      %v2906 = vpop.f32.mrb[0].mxu0
      %v2907 = vadd.f32 0.0, %v2906
      %v2908 = vpop.f32.mrb[0].mxu0
      %2909 = vmatprep.mubr.bf16.mxu0 0
      %2910 = vmatmul.mubr.bf16.gmra.mrb[0].mxu0 %v2806
      %v2911 = vpop.f32.mrb[0].mxu0
      %v2912 = vadd.f32 0.0, %v2911
      %v2913 = vpop.f32.mrb[0].mxu0
      %v2914 = vpop.f32.mrb[0].mxu0
      %v2915 = vadd.f32 0.0, %v2914
      %v2916 = vpop.f32.mrb[0].mxu0
      %2917 = vmatprep.mubr.bf16.mxu0 0
      %2918 = vmatmul.mubr.bf16.gmra.mrb[0].mxu0 %v2809
      %v2919 = vpop.f32.mrb[0].mxu0
      %v2920 = vadd.f32 0.0, %v2919
      %v2921 = vpop.f32.mrb[0].mxu0
      %v2922 = vpop.f32.mrb[0].mxu0
      %v2923 = vadd.f32 0.0, %v2922
      %v2924 = vpop.f32.mrb[0].mxu0
      %2925 = vmatprep.mubr.bf16.mxu0 0
      %2926 = vmatmul.mubr.bf16.gmra.mrb[0].mxu0 %v2812
      %v2927 = vpop.f32.mrb[0].mxu0
      %v2928 = vadd.f32 0.0, %v2927
      %v2929 = vpop.f32.mrb[0].mxu0
      %v2930 = vpop.f32.mrb[0].mxu0
      %v2931 = vadd.f32 0.0, %v2930
      %v2932 = vpop.f32.mrb[0].mxu0
      %2933 = vmatprep.mubr.bf16.mxu0 0
      %2934 = vmatmul.mubr.bf16.gmra.mrb[0].mxu0 %v2815
      %v2935 = vpop.f32.mrb[0].mxu0
      %v2936 = vadd.f32 0.0, %v2935
      %v2937 = vpop.f32.mrb[0].mxu0
      %v2938 = vpop.f32.mrb[0].mxu0
      %v2939 = vadd.f32 0.0, %v2938
      %v2940 = vpop.f32.mrb[0].mxu0
      %2941 = vmatprep.mubr.bf16.mxu0 0
      %2942 = vmatmul.mubr.bf16.gmra.mrb[0].mxu0 %v2818
      %v2943 = vpop.f32.mrb[0].mxu0
      %v2944 = vadd.f32 0.0, %v2943
      %v2945 = vpop.f32.mrb[0].mxu0
      %v2946 = vpop.f32.mrb[0].mxu0
      %v2947 = vadd.f32 0.0, %v2946
      %v2948 = vpop.f32.mrb[0].mxu0
      %2949 = vmatprep.mubr.bf16.mxu0 0
      %2950 = vmatmul.mubr.bf16.gmra.mrb[0].mxu0 %v2821
      %v2951 = vpop.f32.mrb[0].mxu0
      %v2952 = vadd.f32 0.0, %v2951
      %v2953 = vpop.f32.mrb[0].mxu0
      %v2954 = vpop.f32.mrb[0].mxu0
      %v2955 = vadd.f32 0.0, %v2954
      %v2956 = vpop.f32.mrb[0].mxu0
      %2957 = vmatprep.mubr.bf16.mxu0 0
      %2958 = vmatmul.mubr.bf16.gmra.mrb[0].mxu0 %v2824
      %v2959 = vpop.f32.mrb[0].mxu0
      %v2960 = vadd.f32 0.0, %v2959
      %v2961 = vpop.f32.mrb[0].mxu0
      %v2962 = vpop.f32.mrb[0].mxu0
      %v2963 = vadd.f32 0.0, %v2962
      %v2964 = vpop.f32.mrb[0].mxu0
      %2965 = vmatprep.mubr.bf16.mxu0 0
      %2966 = vmatmul.mubr.bf16.gmra.mrb[0].mxu0 %v2827
      %v2967 = vpop.f32.mrb[0].mxu0
      %v2968 = vadd.f32 0.0, %v2967
      %v2969 = vpop.f32.mrb[0].mxu0
      %v2970 = vpop.f32.mrb[0].mxu0
      %v2971 = vadd.f32 0.0, %v2970
      %v2972 = vpop.f32.mrb[0].mxu0
      %2973 = vmatprep.mubr.bf16.mxu0 0
      %2974 = vmatmul.mubr.bf16.gmra.mrb[0].mxu0 %v2830
      %v2975 = vpop.f32.mrb[0].mxu0
      %v2976 = vadd.f32 0.0, %v2975
      %v2977 = vpop.f32.mrb[0].mxu0
      %v2978 = vpop.f32.mrb[0].mxu0
      %v2979 = vadd.f32 0.0, %v2978
      %v2980 = vpop.f32.mrb[0].mxu0
      %2981 = vmatprep.mubr.bf16.mxu0 0
      %2982 = vmatmul.mubr.bf16.gmra.mrb[0].mxu0 %v2833
      %v2983 = vpop.f32.mrb[0].mxu0
      %v2984 = vadd.f32 0.0, %v2983
      %v2985 = vpop.f32.mrb[0].mxu0
      %v2986 = vpop.f32.mrb[0].mxu0
      %v2987 = vadd.f32 0.0, %v2986
      %v2988 = vpop.f32.mrb[0].mxu0
      %2989 = vmatprep.mubr.bf16.mxu0 0
      %2990 = vmatmul.mubr.bf16.gmra.mrb[0].mxu0 %v2836
      %v2991 = vpop.f32.mrb[0].mxu0
      %v2992 = vadd.f32 0.0, %v2991
      %v2993 = vpop.f32.mrb[0].mxu0
      %v2994 = vpop.f32.mrb[0].mxu0
      %v2995 = vadd.f32 0.0, %v2994
      %v2996 = vpop.f32.mrb[0].mxu0
      %2997 = vmatprep.mubr.bf16.mxu0 0
      %2998 = vmatmul.mubr.bf16.gmra.mrb[0].mxu0 %v2839
      %v2999 = vpop.f32.mrb[0].mxu0
      %v3000 = vadd.f32 0.0, %v2999
      %v3001 = vpop.f32.mrb[0].mxu0
      %v3002 = vpop.f32.mrb[0].mxu0
      %v3003 = vadd.f32 0.0, %v3002
      %v3004 = vpop.f32.mrb[0].mxu0
      %3005 = vdwg.mxu0
      %v3009 = vunpack.c.l.b16 %v2762
      %v3010 = vunpack.c.l.b16 %v2763
      %v3011 = vunpack.c.l.b16 %v2764
      %v3012 = vpack.c.b16 %v3010, %v3009
      %v3013 = vpack.c.b16 %v3011, %v3011
      %v3016 = vsel %vm2742, %v2726, 0
      %v3019 = vsel %vm2742, %v2727, 0
      %v3022 = vsel %vm2742, %v2728, 0
      %v3025 = vsel %vm2742, %v2729, 0
      %v3028 = vsel %vm2742, %v2730, 0
      %v3031 = vsel %vm2742, %v2731, 0
      %v3034 = vsel %vm2742, %v2732, 0
      %v3037 = vsel %vm2742, %v2733, 0
      %v3040 = vsel %vm2742, %v2734, 0
      %v3043 = vsel %vm2742, %v2735, 0
      %v3046 = vsel %vm2742, %v2736, 0
      %v3049 = vsel %vm2742, %v2737, 0
      %v3052 = vsel %vm2742, %v2738, 0
      %v3055 = vsel %vm2742, %v2739, 0
      %v3058 = vsel %vm2742, %v2740, 0
      %v3061 = vsel %vm2742, %v2741, 0
      %v3064 = vsel %vm2841, %v3013, 0
      %3066 = vmatprep.subr.bf16.mxu0 0
      %3067 = vmatpush1.bf16.msra.mxu0 %v3012
      %3068 = vmatprep.subr.bf16.mxu0 0
      %3069 = vmatpush1.bf16.msra.mxu0 %v3064
      %3070 = vmatprep.subr.bf16.mxu0 0
      %3071 = vmatpush1.bf16.msra.mxu0 0
      %3072 = vmatprep.subr.bf16.mxu0 0
      %3073 = vmatpush1.bf16.msra.mxu0 0
      %3074 = vmatprep.subr.bf16.mxu0 0
      %3075 = vmatpush1.bf16.msra.mxu0 0
      %3076 = vmatprep.subr.bf16.mxu0 0
      %3077 = vmatpush1.bf16.msra.mxu0 0
      %3078 = vmatprep.subr.bf16.mxu0 0
      %3079 = vmatpush1.bf16.msra.mxu0 0
      %3080 = vmatprep.subr.bf16.mxu0 0
      %3081 = vmatpush1.bf16.msra.mxu0 0
      %3082 = vmatprep.subr.bf16.mxu0 0
      %3083 = vmatpush1.bf16.msra.mxu0 0
      %3084 = vmatprep.subr.bf16.mxu0 0
      %3085 = vmatpush1.bf16.msra.mxu0 0
      %3086 = vmatprep.subr.bf16.mxu0 0
      %3087 = vmatpush1.bf16.msra.mxu0 0
      %3088 = vmatprep.subr.bf16.mxu0 0
      %3089 = vmatpush1.bf16.msra.mxu0 0
      %3090 = vmatprep.subr.bf16.mxu0 0
      %3091 = vmatpush1.bf16.msra.mxu0 0
      %3092 = vmatprep.subr.bf16.mxu0 0
      %3093 = vmatpush1.bf16.msra.mxu0 0
      %3094 = vmatprep.subr.bf16.mxu0 0
      %3095 = vmatpush1.bf16.msra.mxu0 0
      %3096 = vmatprep.subr.bf16.mxu0 0
      %3097 = vmatpush1.bf16.msra.mxu0 0
      %3098 = vmatprep.mubr.bf16.mxu0 0
      %3099 = vmatmul.mubr.bf16.gmra.mrb[0].mxu0 %v3016
      %v3100 = vpop.f32.mrb[0].mxu0
      %v3101 = vadd.f32 %v2880, %v3100
      %v3102 = vpop.f32.mrb[0].mxu0
      %v3103 = vpop.f32.mrb[0].mxu0
      %v3104 = vadd.f32 %v2883, %v3103
      %v3105 = vpop.f32.mrb[0].mxu0
      %3106 = vmatprep.mubr.bf16.mxu0 0
      %3107 = vmatmul.mubr.bf16.gmra.mrb[0].mxu0 %v3019
      %v3108 = vpop.f32.mrb[0].mxu0
      %v3109 = vadd.f32 %v2888, %v3108
      %v3110 = vpop.f32.mrb[0].mxu0
      %v3111 = vpop.f32.mrb[0].mxu0
      %v3112 = vadd.f32 %v2891, %v3111
      %v3113 = vpop.f32.mrb[0].mxu0
      %3114 = vmatprep.mubr.bf16.mxu0 0
      %3115 = vmatmul.mubr.bf16.gmra.mrb[0].mxu0 %v3022
      %v3116 = vpop.f32.mrb[0].mxu0
      %v3117 = vadd.f32 %v2896, %v3116
      %v3118 = vpop.f32.mrb[0].mxu0
      %v3119 = vpop.f32.mrb[0].mxu0
      %v3120 = vadd.f32 %v2899, %v3119
      %v3121 = vpop.f32.mrb[0].mxu0
      %3122 = vmatprep.mubr.bf16.mxu0 0
      %3123 = vmatmul.mubr.bf16.gmra.mrb[0].mxu0 %v3025
      %v3124 = vpop.f32.mrb[0].mxu0
      %v3125 = vadd.f32 %v2904, %v3124
      %v3126 = vpop.f32.mrb[0].mxu0
      %v3127 = vpop.f32.mrb[0].mxu0
      %v3128 = vadd.f32 %v2907, %v3127
      %v3129 = vpop.f32.mrb[0].mxu0
      %3130 = vmatprep.mubr.bf16.mxu0 0
      %3131 = vmatmul.mubr.bf16.gmra.mrb[0].mxu0 %v3028
      %v3132 = vpop.f32.mrb[0].mxu0
      %v3133 = vadd.f32 %v2912, %v3132
      %v3134 = vpop.f32.mrb[0].mxu0
      %v3135 = vpop.f32.mrb[0].mxu0
      %v3136 = vadd.f32 %v2915, %v3135
      %v3137 = vpop.f32.mrb[0].mxu0
      %3138 = vmatprep.mubr.bf16.mxu0 0
      %3139 = vmatmul.mubr.bf16.gmra.mrb[0].mxu0 %v3031
      %v3140 = vpop.f32.mrb[0].mxu0
      %v3141 = vadd.f32 %v2920, %v3140
      %v3142 = vpop.f32.mrb[0].mxu0
      %v3143 = vpop.f32.mrb[0].mxu0
      %v3144 = vadd.f32 %v2923, %v3143
      %v3145 = vpop.f32.mrb[0].mxu0
      %3146 = vmatprep.mubr.bf16.mxu0 0
      %3147 = vmatmul.mubr.bf16.gmra.mrb[0].mxu0 %v3034
      %v3148 = vpop.f32.mrb[0].mxu0
      %v3149 = vadd.f32 %v2928, %v3148
      %v3150 = vpop.f32.mrb[0].mxu0
      %v3151 = vpop.f32.mrb[0].mxu0
      %v3152 = vadd.f32 %v2931, %v3151
      %v3153 = vpop.f32.mrb[0].mxu0
      %3154 = vmatprep.mubr.bf16.mxu0 0
      %3155 = vmatmul.mubr.bf16.gmra.mrb[0].mxu0 %v3037
      %v3156 = vpop.f32.mrb[0].mxu0
      %v3157 = vadd.f32 %v2936, %v3156
      %v3158 = vpop.f32.mrb[0].mxu0
      %v3159 = vpop.f32.mrb[0].mxu0
      %v3160 = vadd.f32 %v2939, %v3159
      %v3161 = vpop.f32.mrb[0].mxu0
      %3162 = vmatprep.mubr.bf16.mxu0 0
      %3163 = vmatmul.mubr.bf16.gmra.mrb[0].mxu0 %v3040
      %v3164 = vpop.f32.mrb[0].mxu0
      %v3165 = vadd.f32 %v2944, %v3164
      %v3166 = vpop.f32.mrb[0].mxu0
      %v3167 = vpop.f32.mrb[0].mxu0
      %v3168 = vadd.f32 %v2947, %v3167
      %v3169 = vpop.f32.mrb[0].mxu0
      %3170 = vmatprep.mubr.bf16.mxu0 0
      %3171 = vmatmul.mubr.bf16.gmra.mrb[0].mxu0 %v3043
      %v3172 = vpop.f32.mrb[0].mxu0
      %v3173 = vadd.f32 %v2952, %v3172
      %v3174 = vpop.f32.mrb[0].mxu0
      %v3175 = vpop.f32.mrb[0].mxu0
      %v3176 = vadd.f32 %v2955, %v3175
      %v3177 = vpop.f32.mrb[0].mxu0
      %3178 = vmatprep.mubr.bf16.mxu0 0
      %3179 = vmatmul.mubr.bf16.gmra.mrb[0].mxu0 %v3046
      %v3180 = vpop.f32.mrb[0].mxu0
      %v3181 = vadd.f32 %v2960, %v3180
      %v3182 = vpop.f32.mrb[0].mxu0
      %v3183 = vpop.f32.mrb[0].mxu0
      %v3184 = vadd.f32 %v2963, %v3183
      %v3185 = vpop.f32.mrb[0].mxu0
      %3186 = vmatprep.mubr.bf16.mxu0 0
      %3187 = vmatmul.mubr.bf16.gmra.mrb[0].mxu0 %v3049
      %v3188 = vpop.f32.mrb[0].mxu0
      %v3189 = vadd.f32 %v2968, %v3188
      %v3190 = vpop.f32.mrb[0].mxu0
      %v3191 = vpop.f32.mrb[0].mxu0
      %v3192 = vadd.f32 %v2971, %v3191
      %v3193 = vpop.f32.mrb[0].mxu0
      %3194 = vmatprep.mubr.bf16.mxu0 0
      %3195 = vmatmul.mubr.bf16.gmra.mrb[0].mxu0 %v3052
      %v3196 = vpop.f32.mrb[0].mxu0
      %v3197 = vadd.f32 %v2976, %v3196
      %v3198 = vpop.f32.mrb[0].mxu0
      %v3199 = vpop.f32.mrb[0].mxu0
      %v3200 = vadd.f32 %v2979, %v3199
      %v3201 = vpop.f32.mrb[0].mxu0
      %3202 = vmatprep.mubr.bf16.mxu0 0
      %3203 = vmatmul.mubr.bf16.gmra.mrb[0].mxu0 %v3055
      %v3204 = vpop.f32.mrb[0].mxu0
      %v3205 = vadd.f32 %v2984, %v3204
      %v3206 = vpop.f32.mrb[0].mxu0
      %v3207 = vpop.f32.mrb[0].mxu0
      %v3208 = vadd.f32 %v2987, %v3207
      %v3209 = vpop.f32.mrb[0].mxu0
      %3210 = vmatprep.mubr.bf16.mxu0 0
      %3211 = vmatmul.mubr.bf16.gmra.mrb[0].mxu0 %v3058
      %v3212 = vpop.f32.mrb[0].mxu0
      %v3213 = vadd.f32 %v2992, %v3212
      %v3214 = vpop.f32.mrb[0].mxu0
      %v3215 = vpop.f32.mrb[0].mxu0
      %v3216 = vadd.f32 %v2995, %v3215
      %v3217 = vpop.f32.mrb[0].mxu0
      %3218 = vmatprep.mubr.bf16.mxu0 0
      %3219 = vmatmul.mubr.bf16.gmra.mrb[0].mxu0 %v3061
      %v3220 = vpop.f32.mrb[0].mxu0
      %v3221 = vadd.f32 %v3000, %v3220
      %v3222 = vpop.f32.mrb[0].mxu0
      %v3223 = vpop.f32.mrb[0].mxu0
      %v3224 = vadd.f32 %v3003, %v3223
      %v3225 = vpop.f32.mrb[0].mxu0
      %3226 = vdwg.mxu0
      %v3227 = vld [vmem:[#allocation3 + $0x10] sm:$0xff]
      %v3228 = vld [vmem:[#allocation3 + $0x18] sm:$0xff]
      %v3229 = vld [vmem:[#allocation3 + $0x20] sm:$0xff]
      %v3230 = vld [vmem:[#allocation3 + $0x28] sm:$0xff]
      %v3231 = vld [vmem:[#allocation3 + $0x30] sm:$0xff]
      %v3232 = vld [vmem:[#allocation3 + $0x38] sm:$0xff]
      %v3233 = vld [vmem:[#allocation3 + $0x40] sm:$0xff]
      %v3234 = vld [vmem:[#allocation3 + $0x48] sm:$0xff]
      %v3235 = vld [vmem:[#allocation3 + $0x50] sm:$0xff]
      %v3236 = vld [vmem:[#allocation3 + $0x58] sm:$0xff]
      %v3237 = vld [vmem:[#allocation3 + $0x60] sm:$0xff]
      %v3238 = vld [vmem:[#allocation3 + $0x68] sm:$0xff]
      %v3239 = vld [vmem:[#allocation3 + $0x70] sm:$0xff]
      %v3240 = vld [vmem:[#allocation3 + $0x78] sm:$0xff]
      %v3241 = vld [vmem:[#allocation3 + $0x80] sm:$0xff]
      %v3242 = vld [vmem:[#allocation3 + $0x88] sm:$0xff]
      %s3243 = scalar_lea.vmem %s6, 24
      %v3244 = vld [vmem:[%s3243] sm:$0xf]
      %v3245 = vld [vmem:[%s3243 + $0x4] sm:$0xf]
      %v3246 = vld [vmem:[%s3243 + $0x8] sm:$0xf]
      %v3250 = vunpack.c.l.b16 %v3244
      %v3251 = vunpack.c.l.b16 %v3245
      %v3252 = vunpack.c.l.b16 %v3246
      %v3253 = vpack.c.b16 %v3251, %v3250
      %v3254 = vpack.c.b16 %v3252, %v3252
      %v3257 = vsel %vm2742, %v3227, 0
      %v3260 = vsel %vm2742, %v3228, 0
      %v3263 = vsel %vm2742, %v3229, 0
      %v3266 = vsel %vm2742, %v3230, 0
      %v3269 = vsel %vm2742, %v3231, 0
      %v3272 = vsel %vm2742, %v3232, 0
      %v3275 = vsel %vm2742, %v3233, 0
      %v3278 = vsel %vm2742, %v3234, 0
      %v3281 = vsel %vm2742, %v3235, 0
      %v3284 = vsel %vm2742, %v3236, 0
      %v3287 = vsel %vm2742, %v3237, 0
      %v3290 = vsel %vm2742, %v3238, 0
      %v3293 = vsel %vm2742, %v3239, 0
      %v3296 = vsel %vm2742, %v3240, 0
      %v3299 = vsel %vm2742, %v3241, 0
      %v3302 = vsel %vm2742, %v3242, 0
      %v3305 = vsel %vm2841, %v3254, 0
      %3307 = vmatprep.subr.bf16.mxu0 0
      %3308 = vmatpush1.bf16.msra.mxu0 %v3253
      %3309 = vmatprep.subr.bf16.mxu0 0
      %3310 = vmatpush1.bf16.msra.mxu0 %v3305
      %3311 = vmatprep.subr.bf16.mxu0 0
      %3312 = vmatpush1.bf16.msra.mxu0 0
      %3313 = vmatprep.subr.bf16.mxu0 0
      %3314 = vmatpush1.bf16.msra.mxu0 0
      %3315 = vmatprep.subr.bf16.mxu0 0
      %3316 = vmatpush1.bf16.msra.mxu0 0
      %3317 = vmatprep.subr.bf16.mxu0 0
      %3318 = vmatpush1.bf16.msra.mxu0 0
      %3319 = vmatprep.subr.bf16.mxu0 0
      %3320 = vmatpush1.bf16.msra.mxu0 0
      %3321 = vmatprep.subr.bf16.mxu0 0
      %3322 = vmatpush1.bf16.msra.mxu0 0
      %3323 = vmatprep.subr.bf16.mxu0 0
      %3324 = vmatpush1.bf16.msra.mxu0 0
      %3325 = vmatprep.subr.bf16.mxu0 0
      %3326 = vmatpush1.bf16.msra.mxu0 0
      %3327 = vmatprep.subr.bf16.mxu0 0
      %3328 = vmatpush1.bf16.msra.mxu0 0
      %3329 = vmatprep.subr.bf16.mxu0 0
      %3330 = vmatpush1.bf16.msra.mxu0 0
      %3331 = vmatprep.subr.bf16.mxu0 0
      %3332 = vmatpush1.bf16.msra.mxu0 0
      %3333 = vmatprep.subr.bf16.mxu0 0
      %3334 = vmatpush1.bf16.msra.mxu0 0
      %3335 = vmatprep.subr.bf16.mxu0 0
      %3336 = vmatpush1.bf16.msra.mxu0 0
      %3337 = vmatprep.subr.bf16.mxu0 0
      %3338 = vmatpush1.bf16.msra.mxu0 0
      %3339 = vmatprep.mubr.bf16.mxu0 0
      %3340 = vmatmul.mubr.bf16.gmra.mrb[0].mxu0 %v3257
      %v3341 = vpop.f32.mrb[0].mxu0
      %v3342 = vadd.f32 0.0, %v3341
      %v3343 = vpop.f32.mrb[0].mxu0
      %v3344 = vpop.f32.mrb[0].mxu0
      %v3345 = vadd.f32 0.0, %v3344
      %v3346 = vpop.f32.mrb[0].mxu0
      %3347 = vmatprep.mubr.bf16.mxu0 0
      %3348 = vmatmul.mubr.bf16.gmra.mrb[0].mxu0 %v3260
      %v3349 = vpop.f32.mrb[0].mxu0
      %v3350 = vadd.f32 0.0, %v3349
      %v3351 = vpop.f32.mrb[0].mxu0
      %v3352 = vpop.f32.mrb[0].mxu0
      %v3353 = vadd.f32 0.0, %v3352
      %v3354 = vpop.f32.mrb[0].mxu0
      %3355 = vmatprep.mubr.bf16.mxu0 0
      %3356 = vmatmul.mubr.bf16.gmra.mrb[0].mxu0 %v3263
      %v3357 = vpop.f32.mrb[0].mxu0
      %v3358 = vadd.f32 0.0, %v3357
      %v3359 = vpop.f32.mrb[0].mxu0
      %v3360 = vpop.f32.mrb[0].mxu0
      %v3361 = vadd.f32 0.0, %v3360
      %v3362 = vpop.f32.mrb[0].mxu0
      %3363 = vmatprep.mubr.bf16.mxu0 0
      %3364 = vmatmul.mubr.bf16.gmra.mrb[0].mxu0 %v3266
      %v3365 = vpop.f32.mrb[0].mxu0
      %v3366 = vadd.f32 0.0, %v3365
      %v3367 = vpop.f32.mrb[0].mxu0
      %v3368 = vpop.f32.mrb[0].mxu0
      %v3369 = vadd.f32 0.0, %v3368
      %v3370 = vpop.f32.mrb[0].mxu0
      %3371 = vmatprep.mubr.bf16.mxu0 0
      %3372 = vmatmul.mubr.bf16.gmra.mrb[0].mxu0 %v3269
      %v3373 = vpop.f32.mrb[0].mxu0
      %v3374 = vadd.f32 0.0, %v3373
      %v3375 = vpop.f32.mrb[0].mxu0
      %v3376 = vpop.f32.mrb[0].mxu0
      %v3377 = vadd.f32 0.0, %v3376
      %v3378 = vpop.f32.mrb[0].mxu0
      %3379 = vmatprep.mubr.bf16.mxu0 0
      %3380 = vmatmul.mubr.bf16.gmra.mrb[0].mxu0 %v3272
      %v3381 = vpop.f32.mrb[0].mxu0
      %v3382 = vadd.f32 0.0, %v3381
      %v3383 = vpop.f32.mrb[0].mxu0
      %v3384 = vpop.f32.mrb[0].mxu0
      %v3385 = vadd.f32 0.0, %v3384
      %v3386 = vpop.f32.mrb[0].mxu0
      %3387 = vmatprep.mubr.bf16.mxu0 0
      %3388 = vmatmul.mubr.bf16.gmra.mrb[0].mxu0 %v3275
      %v3389 = vpop.f32.mrb[0].mxu0
      %v3390 = vadd.f32 0.0, %v3389
      %v3391 = vpop.f32.mrb[0].mxu0
      %v3392 = vpop.f32.mrb[0].mxu0
      %v3393 = vadd.f32 0.0, %v3392
      %v3394 = vpop.f32.mrb[0].mxu0
      %3395 = vmatprep.mubr.bf16.mxu0 0
      %3396 = vmatmul.mubr.bf16.gmra.mrb[0].mxu0 %v3278
      %v3397 = vpop.f32.mrb[0].mxu0
      %v3398 = vadd.f32 0.0, %v3397
      %v3399 = vpop.f32.mrb[0].mxu0
      %v3400 = vpop.f32.mrb[0].mxu0
      %v3401 = vadd.f32 0.0, %v3400
      %v3402 = vpop.f32.mrb[0].mxu0
      %3403 = vmatprep.mubr.bf16.mxu0 0
      %3404 = vmatmul.mubr.bf16.gmra.mrb[0].mxu0 %v3281
      %v3405 = vpop.f32.mrb[0].mxu0
      %v3406 = vadd.f32 0.0, %v3405
      %v3407 = vpop.f32.mrb[0].mxu0
      %v3408 = vpop.f32.mrb[0].mxu0
      %v3409 = vadd.f32 0.0, %v3408
      %v3410 = vpop.f32.mrb[0].mxu0
      %3411 = vmatprep.mubr.bf16.mxu0 0
      %3412 = vmatmul.mubr.bf16.gmra.mrb[0].mxu0 %v3284
      %v3413 = vpop.f32.mrb[0].mxu0
      %v3414 = vadd.f32 0.0, %v3413
      %v3415 = vpop.f32.mrb[0].mxu0
      %v3416 = vpop.f32.mrb[0].mxu0
      %v3417 = vadd.f32 0.0, %v3416
      %v3418 = vpop.f32.mrb[0].mxu0
      %3419 = vmatprep.mubr.bf16.mxu0 0
      %3420 = vmatmul.mubr.bf16.gmra.mrb[0].mxu0 %v3287
      %v3421 = vpop.f32.mrb[0].mxu0
      %v3422 = vadd.f32 0.0, %v3421
      %v3423 = vpop.f32.mrb[0].mxu0
      %v3424 = vpop.f32.mrb[0].mxu0
      %v3425 = vadd.f32 0.0, %v3424
      %v3426 = vpop.f32.mrb[0].mxu0
      %3427 = vmatprep.mubr.bf16.mxu0 0
      %3428 = vmatmul.mubr.bf16.gmra.mrb[0].mxu0 %v3290
      %v3429 = vpop.f32.mrb[0].mxu0
      %v3430 = vadd.f32 0.0, %v3429
      %v3431 = vpop.f32.mrb[0].mxu0
      %v3432 = vpop.f32.mrb[0].mxu0
      %v3433 = vadd.f32 0.0, %v3432
      %v3434 = vpop.f32.mrb[0].mxu0
      %3435 = vmatprep.mubr.bf16.mxu0 0
      %3436 = vmatmul.mubr.bf16.gmra.mrb[0].mxu0 %v3293
      %v3437 = vpop.f32.mrb[0].mxu0
      %v3438 = vadd.f32 0.0, %v3437
      %v3439 = vpop.f32.mrb[0].mxu0
      %v3440 = vpop.f32.mrb[0].mxu0
      %v3441 = vadd.f32 0.0, %v3440
      %v3442 = vpop.f32.mrb[0].mxu0
      %3443 = vmatprep.mubr.bf16.mxu0 0
      %3444 = vmatmul.mubr.bf16.gmra.mrb[0].mxu0 %v3296
      %v3445 = vpop.f32.mrb[0].mxu0
      %v3446 = vadd.f32 0.0, %v3445
      %v3447 = vpop.f32.mrb[0].mxu0
      %v3448 = vpop.f32.mrb[0].mxu0
      %v3449 = vadd.f32 0.0, %v3448
      %v3450 = vpop.f32.mrb[0].mxu0
      %3451 = vmatprep.mubr.bf16.mxu0 0
      %3452 = vmatmul.mubr.bf16.gmra.mrb[0].mxu0 %v3299
      %v3453 = vpop.f32.mrb[0].mxu0
      %v3454 = vadd.f32 0.0, %v3453
      %v3455 = vpop.f32.mrb[0].mxu0
      %v3456 = vpop.f32.mrb[0].mxu0
      %v3457 = vadd.f32 0.0, %v3456
      %v3458 = vpop.f32.mrb[0].mxu0
      %3459 = vmatprep.mubr.bf16.mxu0 0
      %3460 = vmatmul.mubr.bf16.gmra.mrb[0].mxu0 %v3302
      %v3461 = vpop.f32.mrb[0].mxu0
      %v3462 = vadd.f32 0.0, %v3461
      %v3463 = vpop.f32.mrb[0].mxu0
      %v3464 = vpop.f32.mrb[0].mxu0
      %v3465 = vadd.f32 0.0, %v3464
      %v3466 = vpop.f32.mrb[0].mxu0
      %3467 = vdwg.mxu0
      %v3468 = vadd.f32 %v3101, %v3342
      %v3469 = vadd.f32 %v3104, %v3345
      %v3470 = vadd.f32 %v3109, %v3350
      %v3471 = vadd.f32 %v3112, %v3353
      %v3472 = vadd.f32 %v3117, %v3358
      %v3473 = vadd.f32 %v3120, %v3361
      %v3474 = vadd.f32 %v3125, %v3366
      %v3475 = vadd.f32 %v3128, %v3369
      %v3476 = vadd.f32 %v3133, %v3374
      %v3477 = vadd.f32 %v3136, %v3377
      %v3478 = vadd.f32 %v3141, %v3382
      %v3479 = vadd.f32 %v3144, %v3385
      %v3480 = vadd.f32 %v3149, %v3390
      %v3481 = vadd.f32 %v3152, %v3393
      %v3482 = vadd.f32 %v3157, %v3398
      %v3483 = vadd.f32 %v3160, %v3401
      %v3484 = vadd.f32 %v3165, %v3406
      %v3485 = vadd.f32 %v3168, %v3409
      %v3486 = vadd.f32 %v3173, %v3414
      %v3487 = vadd.f32 %v3176, %v3417
      %v3488 = vadd.f32 %v3181, %v3422
      %v3489 = vadd.f32 %v3184, %v3425
      %v3490 = vadd.f32 %v3189, %v3430
      %v3491 = vadd.f32 %v3192, %v3433
      %v3492 = vadd.f32 %v3197, %v3438
      %v3493 = vadd.f32 %v3200, %v3441
      %v3494 = vadd.f32 %v3205, %v3446
      %v3495 = vadd.f32 %v3208, %v3449
      %v3496 = vadd.f32 %v3213, %v3454
      %v3497 = vadd.f32 %v3216, %v3457
      %v3498 = vadd.f32 %v3221, %v3462
      %v3499 = vadd.f32 %v3224, %v3465
      %v3500 = vld [vmem:[%s7] sm:$0x3]
      %v3533 = vunpack.c.l.b16 %v334
      %v3534 = vunpack.c.l.b16 %v335
      %v3535 = vunpack.c.l.b16 %v336
      %v3536 = vunpack.c.l.b16 %v337
      %v3537 = vunpack.c.l.b16 %v338
      %v3538 = vunpack.c.l.b16 %v339
      %v3539 = vunpack.c.l.b16 %v340
      %v3540 = vunpack.c.l.b16 %v341
      %v3541 = vunpack.c.l.b16 %v342
      %v3542 = vunpack.c.l.b16 %v343
      %v3543 = vunpack.c.l.b16 %v344
      %v3544 = vunpack.c.l.b16 %v345
      %v3545 = vunpack.c.l.b16 %v346
      %v3546 = vunpack.c.l.b16 %v347
      %v3547 = vunpack.c.l.b16 %v348
      %v3548 = vunpack.c.l.b16 %v349
      %v3549 = vunpack.c.l.b16 %v350
      %v3550 = vunpack.c.l.b16 %v351
      %v3551 = vunpack.c.l.b16 %v352
      %v3552 = vunpack.c.l.b16 %v353
      %v3553 = vunpack.c.l.b16 %v354
      %v3554 = vunpack.c.l.b16 %v355
      %v3555 = vunpack.c.l.b16 %v356
      %v3556 = vunpack.c.l.b16 %v357
      %v3557 = vunpack.c.l.b16 %v358
      %v3558 = vunpack.c.l.b16 %v359
      %v3559 = vunpack.c.l.b16 %v360
      %v3560 = vunpack.c.l.b16 %v361
      %v3561 = vunpack.c.l.b16 %v362
      %v3562 = vunpack.c.l.b16 %v363
      %v3563 = vunpack.c.l.b16 %v364
      %v3564 = vunpack.c.l.b16 %v365
      %v3565 = vpack.c.b16 %v3534, %v3533
      %v3566 = vpack.c.b16 %v3536, %v3535
      %v3567 = vpack.c.b16 %v3538, %v3537
      %v3568 = vpack.c.b16 %v3540, %v3539
      %v3569 = vpack.c.b16 %v3542, %v3541
      %v3570 = vpack.c.b16 %v3544, %v3543
      %v3571 = vpack.c.b16 %v3546, %v3545
      %v3572 = vpack.c.b16 %v3548, %v3547
      %v3573 = vpack.c.b16 %v3550, %v3549
      %v3574 = vpack.c.b16 %v3552, %v3551
      %v3575 = vpack.c.b16 %v3554, %v3553
      %v3576 = vpack.c.b16 %v3556, %v3555
      %v3577 = vpack.c.b16 %v3558, %v3557
      %v3578 = vpack.c.b16 %v3560, %v3559
      %v3579 = vpack.c.b16 %v3562, %v3561
      %v3580 = vpack.c.b16 %v3564, %v3563
      %v3582 = vsel %vm1118, %v3565, 0
      %v3585 = vsel %vm1118, %v3566, 0
      %v3588 = vsel %vm1118, %v3567, 0
      %v3591 = vsel %vm1118, %v3568, 0
      %v3594 = vsel %vm1118, %v3569, 0
      %v3597 = vsel %vm1118, %v3570, 0
      %v3600 = vsel %vm1118, %v3571, 0
      %v3603 = vsel %vm1118, %v3572, 0
      %v3606 = vsel %vm1118, %v3573, 0
      %v3609 = vsel %vm1118, %v3574, 0
      %v3612 = vsel %vm1118, %v3575, 0
      %v3615 = vsel %vm1118, %v3576, 0
      %v3618 = vsel %vm1118, %v3577, 0
      %v3621 = vsel %vm1118, %v3578, 0
      %v3624 = vsel %vm1118, %v3579, 0
      %v3627 = vsel %vm1118, %v3580, 0
      %vm3629 = vcmask 1041408
      %v3631 = vsel %vm3629, %v3500, 0
      %3633 = vmatprep.subr.bf16.mxu0 0
      %3634 = vmatpush1.bf16.msra.mxu0 %v3631
      %3635 = vmatprep.subr.bf16.mxu0 0
      %3636 = vmatpush1.bf16.msra.mxu0 0
      %3637 = vmatprep.subr.bf16.mxu0 0
      %3638 = vmatpush1.bf16.msra.mxu0 0
      %3639 = vmatprep.subr.bf16.mxu0 0
      %3640 = vmatpush1.bf16.msra.mxu0 0
      %3641 = vmatprep.subr.bf16.mxu0 0
      %3642 = vmatpush1.bf16.msra.mxu0 0
      %3643 = vmatprep.subr.bf16.mxu0 0
      %3644 = vmatpush1.bf16.msra.mxu0 0
      %3645 = vmatprep.subr.bf16.mxu0 0
      %3646 = vmatpush1.bf16.msra.mxu0 0
      %3647 = vmatprep.subr.bf16.mxu0 0
      %3648 = vmatpush1.bf16.msra.mxu0 0
      %3649 = vmatprep.subr.bf16.mxu0 0
      %3650 = vmatpush1.bf16.msra.mxu0 0
      %3651 = vmatprep.subr.bf16.mxu0 0
      %3652 = vmatpush1.bf16.msra.mxu0 0
      %3653 = vmatprep.subr.bf16.mxu0 0
      %3654 = vmatpush1.bf16.msra.mxu0 0
      %3655 = vmatprep.subr.bf16.mxu0 0
      %3656 = vmatpush1.bf16.msra.mxu0 0
      %3657 = vmatprep.subr.bf16.mxu0 0
      %3658 = vmatpush1.bf16.msra.mxu0 0
      %3659 = vmatprep.subr.bf16.mxu0 0
      %3660 = vmatpush1.bf16.msra.mxu0 0
      %3661 = vmatprep.subr.bf16.mxu0 0
      %3662 = vmatpush1.bf16.msra.mxu0 0
      %3663 = vmatprep.subr.bf16.mxu0 0
      %3664 = vmatpush1.bf16.msra.mxu0 0
      %3665 = vmatprep.mubr.bf16.mxu0 0
      %3666 = vmatmul.mubr.bf16.gmra.mrb[0].mxu0 %v3582
      %v3667 = vpop.f32.mrb[0].mxu0
      %v3668 = vadd.f32 0.0, %v3667
      %v3669 = vpop.f32.mrb[0].mxu0
      %v3670 = vpop.f32.mrb[0].mxu0
      %v3671 = vadd.f32 0.0, %v3670
      %v3672 = vpop.f32.mrb[0].mxu0
      %3673 = vmatprep.mubr.bf16.mxu0 0
      %3674 = vmatmul.mubr.bf16.gmra.mrb[0].mxu0 %v3585
      %v3675 = vpop.f32.mrb[0].mxu0
      %v3676 = vadd.f32 0.0, %v3675
      %v3677 = vpop.f32.mrb[0].mxu0
      %v3678 = vpop.f32.mrb[0].mxu0
      %v3679 = vadd.f32 0.0, %v3678
      %v3680 = vpop.f32.mrb[0].mxu0
      %3681 = vmatprep.mubr.bf16.mxu0 0
      %3682 = vmatmul.mubr.bf16.gmra.mrb[0].mxu0 %v3588
      %v3683 = vpop.f32.mrb[0].mxu0
      %v3684 = vadd.f32 0.0, %v3683
      %v3685 = vpop.f32.mrb[0].mxu0
      %v3686 = vpop.f32.mrb[0].mxu0
      %v3687 = vadd.f32 0.0, %v3686
      %v3688 = vpop.f32.mrb[0].mxu0
      %3689 = vmatprep.mubr.bf16.mxu0 0
      %3690 = vmatmul.mubr.bf16.gmra.mrb[0].mxu0 %v3591
      %v3691 = vpop.f32.mrb[0].mxu0
      %v3692 = vadd.f32 0.0, %v3691
      %v3693 = vpop.f32.mrb[0].mxu0
      %v3694 = vpop.f32.mrb[0].mxu0
      %v3695 = vadd.f32 0.0, %v3694
      %v3696 = vpop.f32.mrb[0].mxu0
      %3697 = vmatprep.mubr.bf16.mxu0 0
      %3698 = vmatmul.mubr.bf16.gmra.mrb[0].mxu0 %v3594
      %v3699 = vpop.f32.mrb[0].mxu0
      %v3700 = vadd.f32 0.0, %v3699
      %v3701 = vpop.f32.mrb[0].mxu0
      %v3702 = vpop.f32.mrb[0].mxu0
      %v3703 = vadd.f32 0.0, %v3702
      %v3704 = vpop.f32.mrb[0].mxu0
      %3705 = vmatprep.mubr.bf16.mxu0 0
      %3706 = vmatmul.mubr.bf16.gmra.mrb[0].mxu0 %v3597
      %v3707 = vpop.f32.mrb[0].mxu0
      %v3708 = vadd.f32 0.0, %v3707
      %v3709 = vpop.f32.mrb[0].mxu0
      %v3710 = vpop.f32.mrb[0].mxu0
      %v3711 = vadd.f32 0.0, %v3710
      %v3712 = vpop.f32.mrb[0].mxu0
      %3713 = vmatprep.mubr.bf16.mxu0 0
      %3714 = vmatmul.mubr.bf16.gmra.mrb[0].mxu0 %v3600
      %v3715 = vpop.f32.mrb[0].mxu0
      %v3716 = vadd.f32 0.0, %v3715
      %v3717 = vpop.f32.mrb[0].mxu0
      %v3718 = vpop.f32.mrb[0].mxu0
      %v3719 = vadd.f32 0.0, %v3718
      %v3720 = vpop.f32.mrb[0].mxu0
      %3721 = vmatprep.mubr.bf16.mxu0 0
      %3722 = vmatmul.mubr.bf16.gmra.mrb[0].mxu0 %v3603
      %v3723 = vpop.f32.mrb[0].mxu0
      %v3724 = vadd.f32 0.0, %v3723
      %v3725 = vpop.f32.mrb[0].mxu0
      %v3726 = vpop.f32.mrb[0].mxu0
      %v3727 = vadd.f32 0.0, %v3726
      %v3728 = vpop.f32.mrb[0].mxu0
      %3729 = vmatprep.mubr.bf16.mxu0 0
      %3730 = vmatmul.mubr.bf16.gmra.mrb[0].mxu0 %v3606
      %v3731 = vpop.f32.mrb[0].mxu0
      %v3732 = vadd.f32 0.0, %v3731
      %v3733 = vpop.f32.mrb[0].mxu0
      %v3734 = vpop.f32.mrb[0].mxu0
      %v3735 = vadd.f32 0.0, %v3734
      %v3736 = vpop.f32.mrb[0].mxu0
      %3737 = vmatprep.mubr.bf16.mxu0 0
      %3738 = vmatmul.mubr.bf16.gmra.mrb[0].mxu0 %v3609
      %v3739 = vpop.f32.mrb[0].mxu0
      %v3740 = vadd.f32 0.0, %v3739
      %v3741 = vpop.f32.mrb[0].mxu0
      %v3742 = vpop.f32.mrb[0].mxu0
      %v3743 = vadd.f32 0.0, %v3742
      %v3744 = vpop.f32.mrb[0].mxu0
      %3745 = vmatprep.mubr.bf16.mxu0 0
      %3746 = vmatmul.mubr.bf16.gmra.mrb[0].mxu0 %v3612
      %v3747 = vpop.f32.mrb[0].mxu0
      %v3748 = vadd.f32 0.0, %v3747
      %v3749 = vpop.f32.mrb[0].mxu0
      %v3750 = vpop.f32.mrb[0].mxu0
      %v3751 = vadd.f32 0.0, %v3750
      %v3752 = vpop.f32.mrb[0].mxu0
      %3753 = vmatprep.mubr.bf16.mxu0 0
      %3754 = vmatmul.mubr.bf16.gmra.mrb[0].mxu0 %v3615
      %v3755 = vpop.f32.mrb[0].mxu0
      %v3756 = vadd.f32 0.0, %v3755
      %v3757 = vpop.f32.mrb[0].mxu0
      %v3758 = vpop.f32.mrb[0].mxu0
      %v3759 = vadd.f32 0.0, %v3758
      %v3760 = vpop.f32.mrb[0].mxu0
      %3761 = vmatprep.mubr.bf16.mxu0 0
      %3762 = vmatmul.mubr.bf16.gmra.mrb[0].mxu0 %v3618
      %v3763 = vpop.f32.mrb[0].mxu0
      %v3764 = vadd.f32 0.0, %v3763
      %v3765 = vpop.f32.mrb[0].mxu0
      %v3766 = vpop.f32.mrb[0].mxu0
      %v3767 = vadd.f32 0.0, %v3766
      %v3768 = vpop.f32.mrb[0].mxu0
      %3769 = vmatprep.mubr.bf16.mxu0 0
      %3770 = vmatmul.mubr.bf16.gmra.mrb[0].mxu0 %v3621
      %v3771 = vpop.f32.mrb[0].mxu0
      %v3772 = vadd.f32 0.0, %v3771
      %v3773 = vpop.f32.mrb[0].mxu0
      %v3774 = vpop.f32.mrb[0].mxu0
      %v3775 = vadd.f32 0.0, %v3774
      %v3776 = vpop.f32.mrb[0].mxu0
      %3777 = vmatprep.mubr.bf16.mxu0 0
      %3778 = vmatmul.mubr.bf16.gmra.mrb[0].mxu0 %v3624
      %v3779 = vpop.f32.mrb[0].mxu0
      %v3780 = vadd.f32 0.0, %v3779
      %v3781 = vpop.f32.mrb[0].mxu0
      %v3782 = vpop.f32.mrb[0].mxu0
      %v3783 = vadd.f32 0.0, %v3782
      %v3784 = vpop.f32.mrb[0].mxu0
      %3785 = vmatprep.mubr.bf16.mxu0 0
      %3786 = vmatmul.mubr.bf16.gmra.mrb[0].mxu0 %v3627
      %v3787 = vpop.f32.mrb[0].mxu0
      %v3788 = vadd.f32 0.0, %v3787
      %v3789 = vpop.f32.mrb[0].mxu0
      %v3790 = vpop.f32.mrb[0].mxu0
      %v3791 = vadd.f32 0.0, %v3790
      %v3792 = vpop.f32.mrb[0].mxu0
      %3793 = vdwg.mxu0
      %v3794 = vadd.f32 %v3468, %v3668
      %v3795 = vadd.f32 %v3469, %v3671
      %v3796 = vadd.f32 %v3470, %v3676
      %v3797 = vadd.f32 %v3471, %v3679
      %v3798 = vadd.f32 %v3472, %v3684
      %v3799 = vadd.f32 %v3473, %v3687
      %v3800 = vadd.f32 %v3474, %v3692
      %v3801 = vadd.f32 %v3475, %v3695
      %v3802 = vadd.f32 %v3476, %v3700
      %v3803 = vadd.f32 %v3477, %v3703
      %v3804 = vadd.f32 %v3478, %v3708
      %v3805 = vadd.f32 %v3479, %v3711
      %v3806 = vadd.f32 %v3480, %v3716
      %v3807 = vadd.f32 %v3481, %v3719
      %v3808 = vadd.f32 %v3482, %v3724
      %v3809 = vadd.f32 %v3483, %v3727
      %v3810 = vadd.f32 %v3484, %v3732
      %v3811 = vadd.f32 %v3485, %v3735
      %v3812 = vadd.f32 %v3486, %v3740
      %v3813 = vadd.f32 %v3487, %v3743
      %v3814 = vadd.f32 %v3488, %v3748
      %v3815 = vadd.f32 %v3489, %v3751
      %v3816 = vadd.f32 %v3490, %v3756
      %v3817 = vadd.f32 %v3491, %v3759
      %v3818 = vadd.f32 %v3492, %v3764
      %v3819 = vadd.f32 %v3493, %v3767
      %v3820 = vadd.f32 %v3494, %v3772
      %v3821 = vadd.f32 %v3495, %v3775
      %v3822 = vadd.f32 %v3496, %v3780
      %v3823 = vadd.f32 %v3497, %v3783
      %v3824 = vadd.f32 %v3498, %v3788
      %v3825 = vadd.f32 %v3499, %v3791
      %v3826 = vld [vmem:[%s8] sm:$0x1]
      %v3828 = vlaneseq
      %v3829 = vshrl.u32 %v3828, 7
      %v3830 = vsub.s32 0, %v3829
      %v3831 = vrot.slane %v3826, %v3830
      %v3833 = vadd.f32 %v3794, %v3831
      %v3834 = vadd.f32 %v3795, %v3831
      %v3835 = vadd.f32 %v3796, %v3831
      %v3836 = vadd.f32 %v3797, %v3831
      %v3837 = vadd.f32 %v3798, %v3831
      %v3838 = vadd.f32 %v3799, %v3831
      %v3839 = vadd.f32 %v3800, %v3831
      %v3840 = vadd.f32 %v3801, %v3831
      %v3841 = vadd.f32 %v3802, %v3831
      %v3842 = vadd.f32 %v3803, %v3831
      %v3843 = vadd.f32 %v3804, %v3831
      %v3844 = vadd.f32 %v3805, %v3831
      %v3845 = vadd.f32 %v3806, %v3831
      %v3846 = vadd.f32 %v3807, %v3831
      %v3847 = vadd.f32 %v3808, %v3831
      %v3848 = vadd.f32 %v3809, %v3831
      %v3849 = vadd.f32 %v3810, %v3831
      %v3850 = vadd.f32 %v3811, %v3831
      %v3851 = vadd.f32 %v3812, %v3831
      %v3852 = vadd.f32 %v3813, %v3831
      %v3853 = vadd.f32 %v3814, %v3831
      %v3854 = vadd.f32 %v3815, %v3831
      %v3855 = vadd.f32 %v3816, %v3831
      %v3856 = vadd.f32 %v3817, %v3831
      %v3857 = vadd.f32 %v3818, %v3831
      %v3858 = vadd.f32 %v3819, %v3831
      %v3859 = vadd.f32 %v3820, %v3831
      %v3860 = vadd.f32 %v3821, %v3831
      %v3861 = vadd.f32 %v3822, %v3831
      %v3862 = vadd.f32 %v3823, %v3831
      %v3863 = vadd.f32 %v3824, %v3831
      %v3864 = vadd.f32 %v3825, %v3831
      %v3881 = vrot.slane %v3835, 7
      %vm3882 = vcmask 1041409
      %v3883 = vsel %vm3882, %v3881, %v3833
      %v3884 = vrot.slane %v3837, 6
      %vm3885 = vcmask 1042434
      %v3886 = vsel %vm3885, %v3884, %v3883
      %v3887 = vrot.slane %v3839, 5
      %vm3888 = vcmask 1043459
      %v3889 = vsel %vm3888, %v3887, %v3886
      %v3890 = vrot.slane %v3841, 4
      %vm3891 = vcmask 1044484
      %v3892 = vsel %vm3891, %v3890, %v3889
      %v3893 = vrot.slane %v3843, 3
      %vm3894 = vcmask 1045509
      %v3895 = vsel %vm3894, %v3893, %v3892
      %v3896 = vrot.slane %v3845, 2
      %vm3897 = vcmask 1046534
      %v3898 = vsel %vm3897, %v3896, %v3895
      %v3899 = vrot.slane %v3847, 1
      %vm3900 = vcmask 1047559
      %v3901 = vsel %vm3900, %v3899, %v3898
      %v3902 = vrot.slane %v3851, 7
      %v3903 = vsel %vm3882, %v3902, %v3849
      %v3904 = vrot.slane %v3853, 6
      %v3905 = vsel %vm3885, %v3904, %v3903
      %v3906 = vrot.slane %v3855, 5
      %v3907 = vsel %vm3888, %v3906, %v3905
      %v3908 = vrot.slane %v3857, 4
      %v3909 = vsel %vm3891, %v3908, %v3907
      %v3910 = vrot.slane %v3859, 3
      %v3911 = vsel %vm3894, %v3910, %v3909
      %v3912 = vrot.slane %v3861, 2
      %v3913 = vsel %vm3897, %v3912, %v3911
      %v3914 = vrot.slane %v3863, 1
      %v3915 = vsel %vm3900, %v3914, %v3913
      %v3918 = vrot.slane %v3833, 1
      %v3919 = vsel %vm3882, %v3835, %v3918
      %v3920 = vrot.slane %v3837, 7
      %v3921 = vsel %vm3885, %v3920, %v3919
      %v3922 = vrot.slane %v3839, 6
      %v3923 = vsel %vm3888, %v3922, %v3921
      %v3924 = vrot.slane %v3841, 5
      %v3925 = vsel %vm3891, %v3924, %v3923
      %v3926 = vrot.slane %v3843, 4
      %v3927 = vsel %vm3894, %v3926, %v3925
      %v3928 = vrot.slane %v3845, 3
      %v3929 = vsel %vm3897, %v3928, %v3927
      %v3930 = vrot.slane %v3847, 2
      %v3931 = vsel %vm3900, %v3930, %v3929
      %v3932 = vrot.slane %v3849, 1
      %v3933 = vsel %vm3882, %v3851, %v3932
      %v3934 = vrot.slane %v3853, 7
      %v3935 = vsel %vm3885, %v3934, %v3933
      %v3936 = vrot.slane %v3855, 6
      %v3937 = vsel %vm3888, %v3936, %v3935
      %v3938 = vrot.slane %v3857, 5
      %v3939 = vsel %vm3891, %v3938, %v3937
      %v3940 = vrot.slane %v3859, 4
      %v3941 = vsel %vm3894, %v3940, %v3939
      %v3942 = vrot.slane %v3861, 3
      %v3943 = vsel %vm3897, %v3942, %v3941
      %v3944 = vrot.slane %v3863, 2
      %v3945 = vsel %vm3900, %v3944, %v3943
      %3946 = vrot.lane.b32.xlu0 %v3931, 8
      %v3947 = vpop.permute.xlu0 %3946
      %3948 = vrot.lane.b32.xlu0 %v3945, 8
      %v3949 = vpop.permute.xlu0 %3948
      %v3952 = vrot.slane %v3833, 2
      %v3953 = vrot.slane %v3835, 1
      %v3954 = vsel %vm3882, %v3953, %v3952
      %v3955 = vsel %vm3885, %v3837, %v3954
      %v3956 = vrot.slane %v3839, 7
      %v3957 = vsel %vm3888, %v3956, %v3955
      %v3958 = vrot.slane %v3841, 6
      %v3959 = vsel %vm3891, %v3958, %v3957
      %v3960 = vrot.slane %v3843, 5
      %v3961 = vsel %vm3894, %v3960, %v3959
      %v3962 = vrot.slane %v3845, 4
      %v3963 = vsel %vm3897, %v3962, %v3961
      %v3964 = vrot.slane %v3847, 3
      %v3965 = vsel %vm3900, %v3964, %v3963
      %v3966 = vrot.slane %v3849, 2
      %v3967 = vrot.slane %v3851, 1
      %v3968 = vsel %vm3882, %v3967, %v3966
      %v3969 = vsel %vm3885, %v3853, %v3968
      %v3970 = vrot.slane %v3855, 7
      %v3971 = vsel %vm3888, %v3970, %v3969
      %v3972 = vrot.slane %v3857, 6
      %v3973 = vsel %vm3891, %v3972, %v3971
      %v3974 = vrot.slane %v3859, 5
      %v3975 = vsel %vm3894, %v3974, %v3973
      %v3976 = vrot.slane %v3861, 4
      %v3977 = vsel %vm3897, %v3976, %v3975
      %v3978 = vrot.slane %v3863, 3
      %v3979 = vsel %vm3900, %v3978, %v3977
      %3980 = vrot.lane.b32.xlu0 %v3965, 16
      %v3981 = vpop.permute.xlu0 %3980
      %3982 = vrot.lane.b32.xlu0 %v3979, 16
      %v3983 = vpop.permute.xlu0 %3982
      %v3986 = vrot.slane %v3833, 3
      %v3987 = vrot.slane %v3835, 2
      %v3988 = vsel %vm3882, %v3987, %v3986
      %v3989 = vrot.slane %v3837, 1
      %v3990 = vsel %vm3885, %v3989, %v3988
      %v3991 = vsel %vm3888, %v3839, %v3990
      %v3992 = vrot.slane %v3841, 7
      %v3993 = vsel %vm3891, %v3992, %v3991
      %v3994 = vrot.slane %v3843, 6
      %v3995 = vsel %vm3894, %v3994, %v3993
      %v3996 = vrot.slane %v3845, 5
      %v3997 = vsel %vm3897, %v3996, %v3995
      %v3998 = vrot.slane %v3847, 4
      %v3999 = vsel %vm3900, %v3998, %v3997
      %v4000 = vrot.slane %v3849, 3
      %v4001 = vrot.slane %v3851, 2
      %v4002 = vsel %vm3882, %v4001, %v4000
      %v4003 = vrot.slane %v3853, 1
      %v4004 = vsel %vm3885, %v4003, %v4002
      %v4005 = vsel %vm3888, %v3855, %v4004
      %v4006 = vrot.slane %v3857, 7
      %v4007 = vsel %vm3891, %v4006, %v4005
      %v4008 = vrot.slane %v3859, 6
      %v4009 = vsel %vm3894, %v4008, %v4007
      %v4010 = vrot.slane %v3861, 5
      %v4011 = vsel %vm3897, %v4010, %v4009
      %v4012 = vrot.slane %v3863, 4
      %v4013 = vsel %vm3900, %v4012, %v4011
      %4014 = vrot.lane.b32.xlu0 %v3999, 24
      %v4015 = vpop.permute.xlu0 %4014
      %4016 = vrot.lane.b32.xlu0 %v4013, 24
      %v4017 = vpop.permute.xlu0 %4016
      %v4020 = vrot.slane %v3833, 4
      %v4021 = vrot.slane %v3835, 3
      %v4022 = vsel %vm3882, %v4021, %v4020
      %v4023 = vrot.slane %v3837, 2
      %v4024 = vsel %vm3885, %v4023, %v4022
      %v4025 = vrot.slane %v3839, 1
      %v4026 = vsel %vm3888, %v4025, %v4024
      %v4027 = vsel %vm3891, %v3841, %v4026
      %v4028 = vrot.slane %v3843, 7
      %v4029 = vsel %vm3894, %v4028, %v4027
      %v4030 = vrot.slane %v3845, 6
      %v4031 = vsel %vm3897, %v4030, %v4029
      %v4032 = vrot.slane %v3847, 5
      %v4033 = vsel %vm3900, %v4032, %v4031
      %v4034 = vrot.slane %v3849, 4
      %v4035 = vrot.slane %v3851, 3
      %v4036 = vsel %vm3882, %v4035, %v4034
      %v4037 = vrot.slane %v3853, 2
      %v4038 = vsel %vm3885, %v4037, %v4036
      %v4039 = vrot.slane %v3855, 1
      %v4040 = vsel %vm3888, %v4039, %v4038
      %v4041 = vsel %vm3891, %v3857, %v4040
      %v4042 = vrot.slane %v3859, 7
      %v4043 = vsel %vm3894, %v4042, %v4041
      %v4044 = vrot.slane %v3861, 6
      %v4045 = vsel %vm3897, %v4044, %v4043
      %v4046 = vrot.slane %v3863, 5
      %v4047 = vsel %vm3900, %v4046, %v4045
      %4048 = vrot.lane.b32.xlu0 %v4033, 32
      %v4049 = vpop.permute.xlu0 %4048
      %4050 = vrot.lane.b32.xlu0 %v4047, 32
      %v4051 = vpop.permute.xlu0 %4050
      %v4054 = vrot.slane %v3833, 5
      %v4055 = vrot.slane %v3835, 4
      %v4056 = vsel %vm3882, %v4055, %v4054
      %v4057 = vrot.slane %v3837, 3
      %v4058 = vsel %vm3885, %v4057, %v4056
      %v4059 = vrot.slane %v3839, 2
      %v4060 = vsel %vm3888, %v4059, %v4058
      %v4061 = vrot.slane %v3841, 1
      %v4062 = vsel %vm3891, %v4061, %v4060
      %v4063 = vsel %vm3894, %v3843, %v4062
      %v4064 = vrot.slane %v3845, 7
      %v4065 = vsel %vm3897, %v4064, %v4063
      %v4066 = vrot.slane %v3847, 6
      %v4067 = vsel %vm3900, %v4066, %v4065
      %v4068 = vrot.slane %v3849, 5
      %v4069 = vrot.slane %v3851, 4
      %v4070 = vsel %vm3882, %v4069, %v4068
      %v4071 = vrot.slane %v3853, 3
      %v4072 = vsel %vm3885, %v4071, %v4070
      %v4073 = vrot.slane %v3855, 2
      %v4074 = vsel %vm3888, %v4073, %v4072
      %v4075 = vrot.slane %v3857, 1
      %v4076 = vsel %vm3891, %v4075, %v4074
      %v4077 = vsel %vm3894, %v3859, %v4076
      %v4078 = vrot.slane %v3861, 7
      %v4079 = vsel %vm3897, %v4078, %v4077
      %v4080 = vrot.slane %v3863, 6
      %v4081 = vsel %vm3900, %v4080, %v4079
      %4082 = vrot.lane.b32.xlu0 %v4067, 40
      %v4083 = vpop.permute.xlu0 %4082
      %4084 = vrot.lane.b32.xlu0 %v4081, 40
      %v4085 = vpop.permute.xlu0 %4084
      %v4088 = vrot.slane %v3833, 6
      %v4089 = vrot.slane %v3835, 5
      %v4090 = vsel %vm3882, %v4089, %v4088
      %v4091 = vrot.slane %v3837, 4
      %v4092 = vsel %vm3885, %v4091, %v4090
      %v4093 = vrot.slane %v3839, 3
      %v4094 = vsel %vm3888, %v4093, %v4092
      %v4095 = vrot.slane %v3841, 2
      %v4096 = vsel %vm3891, %v4095, %v4094
      %v4097 = vrot.slane %v3843, 1
      %v4098 = vsel %vm3894, %v4097, %v4096
      %v4099 = vsel %vm3897, %v3845, %v4098
      %v4100 = vrot.slane %v3847, 7
      %v4101 = vsel %vm3900, %v4100, %v4099
      %v4102 = vrot.slane %v3849, 6
      %v4103 = vrot.slane %v3851, 5
      %v4104 = vsel %vm3882, %v4103, %v4102
      %v4105 = vrot.slane %v3853, 4
      %v4106 = vsel %vm3885, %v4105, %v4104
      %v4107 = vrot.slane %v3855, 3
      %v4108 = vsel %vm3888, %v4107, %v4106
      %v4109 = vrot.slane %v3857, 2
      %v4110 = vsel %vm3891, %v4109, %v4108
      %v4111 = vrot.slane %v3859, 1
      %v4112 = vsel %vm3894, %v4111, %v4110
      %v4113 = vsel %vm3897, %v3861, %v4112
      %v4114 = vrot.slane %v3863, 7
      %v4115 = vsel %vm3900, %v4114, %v4113
      %4116 = vrot.lane.b32.xlu0 %v4101, 48
      %v4117 = vpop.permute.xlu0 %4116
      %4118 = vrot.lane.b32.xlu0 %v4115, 48
      %v4119 = vpop.permute.xlu0 %4118
      %v4122 = vrot.slane %v3833, 7
      %v4123 = vrot.slane %v3835, 6
      %v4124 = vsel %vm3882, %v4123, %v4122
      %v4125 = vrot.slane %v3837, 5
      %v4126 = vsel %vm3885, %v4125, %v4124
      %v4127 = vrot.slane %v3839, 4
      %v4128 = vsel %vm3888, %v4127, %v4126
      %v4129 = vrot.slane %v3841, 3
      %v4130 = vsel %vm3891, %v4129, %v4128
      %v4131 = vrot.slane %v3843, 2
      %v4132 = vsel %vm3894, %v4131, %v4130
      %v4133 = vrot.slane %v3845, 1
      %v4134 = vsel %vm3897, %v4133, %v4132
      %v4135 = vsel %vm3900, %v3847, %v4134
      %v4136 = vrot.slane %v3849, 7
      %v4137 = vrot.slane %v3851, 6
      %v4138 = vsel %vm3882, %v4137, %v4136
      %v4139 = vrot.slane %v3853, 5
      %v4140 = vsel %vm3885, %v4139, %v4138
      %v4141 = vrot.slane %v3855, 4
      %v4142 = vsel %vm3888, %v4141, %v4140
      %v4143 = vrot.slane %v3857, 3
      %v4144 = vsel %vm3891, %v4143, %v4142
      %v4145 = vrot.slane %v3859, 2
      %v4146 = vsel %vm3894, %v4145, %v4144
      %v4147 = vrot.slane %v3861, 1
      %v4148 = vsel %vm3897, %v4147, %v4146
      %v4149 = vsel %vm3900, %v3863, %v4148
      %4150 = vrot.lane.b32.xlu0 %v4135, 56
      %v4151 = vpop.permute.xlu0 %4150
      %4152 = vrot.lane.b32.xlu0 %v4149, 56
      %v4153 = vpop.permute.xlu0 %4152
      %v4172 = vrot.slane %v3836, 7
      %v4173 = vsel %vm3882, %v4172, %v3834
      %v4174 = vrot.slane %v3838, 6
      %v4175 = vsel %vm3885, %v4174, %v4173
      %v4176 = vrot.slane %v3840, 5
      %v4177 = vsel %vm3888, %v4176, %v4175
      %v4178 = vrot.slane %v3842, 4
      %v4179 = vsel %vm3891, %v4178, %v4177
      %v4180 = vrot.slane %v3844, 3
      %v4181 = vsel %vm3894, %v4180, %v4179
      %v4182 = vrot.slane %v3846, 2
      %v4183 = vsel %vm3897, %v4182, %v4181
      %v4184 = vrot.slane %v3848, 1
      %v4185 = vsel %vm3900, %v4184, %v4183
      %v4186 = vrot.slane %v3852, 7
      %v4187 = vsel %vm3882, %v4186, %v3850
      %v4188 = vrot.slane %v3854, 6
      %v4189 = vsel %vm3885, %v4188, %v4187
      %v4190 = vrot.slane %v3856, 5
      %v4191 = vsel %vm3888, %v4190, %v4189
      %v4192 = vrot.slane %v3858, 4
      %v4193 = vsel %vm3891, %v4192, %v4191
      %v4194 = vrot.slane %v3860, 3
      %v4195 = vsel %vm3894, %v4194, %v4193
      %v4196 = vrot.slane %v3862, 2
      %v4197 = vsel %vm3897, %v4196, %v4195
      %v4198 = vrot.slane %v3864, 1
      %v4199 = vsel %vm3900, %v4198, %v4197
      %4200 = vrot.lane.b32.xlu0 %v4185, 64
      %v4201 = vpop.permute.xlu0 %4200
      %4202 = vrot.lane.b32.xlu0 %v4199, 64
      %v4203 = vpop.permute.xlu0 %4202
      %v4206 = vrot.slane %v3834, 1
      %v4207 = vsel %vm3882, %v3836, %v4206
      %v4208 = vrot.slane %v3838, 7
      %v4209 = vsel %vm3885, %v4208, %v4207
      %v4210 = vrot.slane %v3840, 6
      %v4211 = vsel %vm3888, %v4210, %v4209
      %v4212 = vrot.slane %v3842, 5
      %v4213 = vsel %vm3891, %v4212, %v4211
      %v4214 = vrot.slane %v3844, 4
      %v4215 = vsel %vm3894, %v4214, %v4213
      %v4216 = vrot.slane %v3846, 3
      %v4217 = vsel %vm3897, %v4216, %v4215
      %v4218 = vrot.slane %v3848, 2
      %v4219 = vsel %vm3900, %v4218, %v4217
      %v4220 = vrot.slane %v3850, 1
      %v4221 = vsel %vm3882, %v3852, %v4220
      %v4222 = vrot.slane %v3854, 7
      %v4223 = vsel %vm3885, %v4222, %v4221
      %v4224 = vrot.slane %v3856, 6
      %v4225 = vsel %vm3888, %v4224, %v4223
      %v4226 = vrot.slane %v3858, 5
      %v4227 = vsel %vm3891, %v4226, %v4225
      %v4228 = vrot.slane %v3860, 4
      %v4229 = vsel %vm3894, %v4228, %v4227
      %v4230 = vrot.slane %v3862, 3
      %v4231 = vsel %vm3897, %v4230, %v4229
      %v4232 = vrot.slane %v3864, 2
      %v4233 = vsel %vm3900, %v4232, %v4231
      %4234 = vrot.lane.b32.xlu0 %v4219, 72
      %v4235 = vpop.permute.xlu0 %4234
      %4236 = vrot.lane.b32.xlu0 %v4233, 72
      %v4237 = vpop.permute.xlu0 %4236
      %v4240 = vrot.slane %v3834, 2
      %v4241 = vrot.slane %v3836, 1
      %v4242 = vsel %vm3882, %v4241, %v4240
      %v4243 = vsel %vm3885, %v3838, %v4242
      %v4244 = vrot.slane %v3840, 7
      %v4245 = vsel %vm3888, %v4244, %v4243
      %v4246 = vrot.slane %v3842, 6
      %v4247 = vsel %vm3891, %v4246, %v4245
      %v4248 = vrot.slane %v3844, 5
      %v4249 = vsel %vm3894, %v4248, %v4247
      %v4250 = vrot.slane %v3846, 4
      %v4251 = vsel %vm3897, %v4250, %v4249
      %v4252 = vrot.slane %v3848, 3
      %v4253 = vsel %vm3900, %v4252, %v4251
      %v4254 = vrot.slane %v3850, 2
      %v4255 = vrot.slane %v3852, 1
      %v4256 = vsel %vm3882, %v4255, %v4254
      %v4257 = vsel %vm3885, %v3854, %v4256
      %v4258 = vrot.slane %v3856, 7
      %v4259 = vsel %vm3888, %v4258, %v4257
      %v4260 = vrot.slane %v3858, 6
      %v4261 = vsel %vm3891, %v4260, %v4259
      %v4262 = vrot.slane %v3860, 5
      %v4263 = vsel %vm3894, %v4262, %v4261
      %v4264 = vrot.slane %v3862, 4
      %v4265 = vsel %vm3897, %v4264, %v4263
      %v4266 = vrot.slane %v3864, 3
      %v4267 = vsel %vm3900, %v4266, %v4265
      %4268 = vrot.lane.b32.xlu0 %v4253, 80
      %v4269 = vpop.permute.xlu0 %4268
      %4270 = vrot.lane.b32.xlu0 %v4267, 80
      %v4271 = vpop.permute.xlu0 %4270
      %v4274 = vrot.slane %v3834, 3
      %v4275 = vrot.slane %v3836, 2
      %v4276 = vsel %vm3882, %v4275, %v4274
      %v4277 = vrot.slane %v3838, 1
      %v4278 = vsel %vm3885, %v4277, %v4276
      %v4279 = vsel %vm3888, %v3840, %v4278
      %v4280 = vrot.slane %v3842, 7
      %v4281 = vsel %vm3891, %v4280, %v4279
      %v4282 = vrot.slane %v3844, 6
      %v4283 = vsel %vm3894, %v4282, %v4281
      %v4284 = vrot.slane %v3846, 5
      %v4285 = vsel %vm3897, %v4284, %v4283
      %v4286 = vrot.slane %v3848, 4
      %v4287 = vsel %vm3900, %v4286, %v4285
      %v4288 = vrot.slane %v3850, 3
      %v4289 = vrot.slane %v3852, 2
      %v4290 = vsel %vm3882, %v4289, %v4288
      %v4291 = vrot.slane %v3854, 1
      %v4292 = vsel %vm3885, %v4291, %v4290
      %v4293 = vsel %vm3888, %v3856, %v4292
      %v4294 = vrot.slane %v3858, 7
      %v4295 = vsel %vm3891, %v4294, %v4293
      %v4296 = vrot.slane %v3860, 6
      %v4297 = vsel %vm3894, %v4296, %v4295
      %v4298 = vrot.slane %v3862, 5
      %v4299 = vsel %vm3897, %v4298, %v4297
      %v4300 = vrot.slane %v3864, 4
      %v4301 = vsel %vm3900, %v4300, %v4299
      %4302 = vrot.lane.b32.xlu0 %v4287, 88
      %v4303 = vpop.permute.xlu0 %4302
      %4304 = vrot.lane.b32.xlu0 %v4301, 88
      %v4305 = vpop.permute.xlu0 %4304
      %v4308 = vrot.slane %v3834, 4
      %v4309 = vrot.slane %v3836, 3
      %v4310 = vsel %vm3882, %v4309, %v4308
      %v4311 = vrot.slane %v3838, 2
      %v4312 = vsel %vm3885, %v4311, %v4310
      %v4313 = vrot.slane %v3840, 1
      %v4314 = vsel %vm3888, %v4313, %v4312
      %v4315 = vsel %vm3891, %v3842, %v4314
      %v4316 = vrot.slane %v3844, 7
      %v4317 = vsel %vm3894, %v4316, %v4315
      %v4318 = vrot.slane %v3846, 6
      %v4319 = vsel %vm3897, %v4318, %v4317
      %v4320 = vrot.slane %v3848, 5
      %v4321 = vsel %vm3900, %v4320, %v4319
      %v4322 = vrot.slane %v3850, 4
      %v4323 = vrot.slane %v3852, 3
      %v4324 = vsel %vm3882, %v4323, %v4322
      %v4325 = vrot.slane %v3854, 2
      %v4326 = vsel %vm3885, %v4325, %v4324
      %v4327 = vrot.slane %v3856, 1
      %v4328 = vsel %vm3888, %v4327, %v4326
      %v4329 = vsel %vm3891, %v3858, %v4328
      %v4330 = vrot.slane %v3860, 7
      %v4331 = vsel %vm3894, %v4330, %v4329
      %v4332 = vrot.slane %v3862, 6
      %v4333 = vsel %vm3897, %v4332, %v4331
      %v4334 = vrot.slane %v3864, 5
      %v4335 = vsel %vm3900, %v4334, %v4333
      %4336 = vrot.lane.b32.xlu0 %v4321, 96
      %v4337 = vpop.permute.xlu0 %4336
      %4338 = vrot.lane.b32.xlu0 %v4335, 96
      %v4339 = vpop.permute.xlu0 %4338
      %v4342 = vrot.slane %v3834, 5
      %v4343 = vrot.slane %v3836, 4
      %v4344 = vsel %vm3882, %v4343, %v4342
      %v4345 = vrot.slane %v3838, 3
      %v4346 = vsel %vm3885, %v4345, %v4344
      %v4347 = vrot.slane %v3840, 2
      %v4348 = vsel %vm3888, %v4347, %v4346
      %v4349 = vrot.slane %v3842, 1
      %v4350 = vsel %vm3891, %v4349, %v4348
      %v4351 = vsel %vm3894, %v3844, %v4350
      %v4352 = vrot.slane %v3846, 7
      %v4353 = vsel %vm3897, %v4352, %v4351
      %v4354 = vrot.slane %v3848, 6
      %v4355 = vsel %vm3900, %v4354, %v4353
      %v4356 = vrot.slane %v3850, 5
      %v4357 = vrot.slane %v3852, 4
      %v4358 = vsel %vm3882, %v4357, %v4356
      %v4359 = vrot.slane %v3854, 3
      %v4360 = vsel %vm3885, %v4359, %v4358
      %v4361 = vrot.slane %v3856, 2
      %v4362 = vsel %vm3888, %v4361, %v4360
      %v4363 = vrot.slane %v3858, 1
      %v4364 = vsel %vm3891, %v4363, %v4362
      %v4365 = vsel %vm3894, %v3860, %v4364
      %v4366 = vrot.slane %v3862, 7
      %v4367 = vsel %vm3897, %v4366, %v4365
      %v4368 = vrot.slane %v3864, 6
      %v4369 = vsel %vm3900, %v4368, %v4367
      %4370 = vrot.lane.b32.xlu0 %v4355, 104
      %v4371 = vpop.permute.xlu0 %4370
      %4372 = vrot.lane.b32.xlu0 %v4369, 104
      %v4373 = vpop.permute.xlu0 %4372
      %v4376 = vrot.slane %v3834, 6
      %v4377 = vrot.slane %v3836, 5
      %v4378 = vsel %vm3882, %v4377, %v4376
      %v4379 = vrot.slane %v3838, 4
      %v4380 = vsel %vm3885, %v4379, %v4378
      %v4381 = vrot.slane %v3840, 3
      %v4382 = vsel %vm3888, %v4381, %v4380
      %v4383 = vrot.slane %v3842, 2
      %v4384 = vsel %vm3891, %v4383, %v4382
      %v4385 = vrot.slane %v3844, 1
      %v4386 = vsel %vm3894, %v4385, %v4384
      %v4387 = vsel %vm3897, %v3846, %v4386
      %v4388 = vrot.slane %v3848, 7
      %v4389 = vsel %vm3900, %v4388, %v4387
      %v4390 = vrot.slane %v3850, 6
      %v4391 = vrot.slane %v3852, 5
      %v4392 = vsel %vm3882, %v4391, %v4390
      %v4393 = vrot.slane %v3854, 4
      %v4394 = vsel %vm3885, %v4393, %v4392
      %v4395 = vrot.slane %v3856, 3
      %v4396 = vsel %vm3888, %v4395, %v4394
      %v4397 = vrot.slane %v3858, 2
      %v4398 = vsel %vm3891, %v4397, %v4396
      %v4399 = vrot.slane %v3860, 1
      %v4400 = vsel %vm3894, %v4399, %v4398
      %v4401 = vsel %vm3897, %v3862, %v4400
      %v4402 = vrot.slane %v3864, 7
      %v4403 = vsel %vm3900, %v4402, %v4401
      %4404 = vrot.lane.b32.xlu0 %v4389, 112
      %v4405 = vpop.permute.xlu0 %4404
      %4406 = vrot.lane.b32.xlu0 %v4403, 112
      %v4407 = vpop.permute.xlu0 %4406
      %v4410 = vrot.slane %v3834, 7
      %v4411 = vrot.slane %v3836, 6
      %v4412 = vsel %vm3882, %v4411, %v4410
      %v4413 = vrot.slane %v3838, 5
      %v4414 = vsel %vm3885, %v4413, %v4412
      %v4415 = vrot.slane %v3840, 4
      %v4416 = vsel %vm3888, %v4415, %v4414
      %v4417 = vrot.slane %v3842, 3
      %v4418 = vsel %vm3891, %v4417, %v4416
      %v4419 = vrot.slane %v3844, 2
      %v4420 = vsel %vm3894, %v4419, %v4418
      %v4421 = vrot.slane %v3846, 1
      %v4422 = vsel %vm3897, %v4421, %v4420
      %v4423 = vsel %vm3900, %v3848, %v4422
      %v4424 = vrot.slane %v3850, 7
      %v4425 = vrot.slane %v3852, 6
      %v4426 = vsel %vm3882, %v4425, %v4424
      %v4427 = vrot.slane %v3854, 5
      %v4428 = vsel %vm3885, %v4427, %v4426
      %v4429 = vrot.slane %v3856, 4
      %v4430 = vsel %vm3888, %v4429, %v4428
      %v4431 = vrot.slane %v3858, 3
      %v4432 = vsel %vm3891, %v4431, %v4430
      %v4433 = vrot.slane %v3860, 2
      %v4434 = vsel %vm3894, %v4433, %v4432
      %v4435 = vrot.slane %v3862, 1
      %v4436 = vsel %vm3897, %v4435, %v4434
      %v4437 = vsel %vm3900, %v3864, %v4436
      %4438 = vrot.lane.b32.xlu0 %v4423, 120
      %v4439 = vpop.permute.xlu0 %4438
      %4440 = vrot.lane.b32.xlu0 %v4437, 120
      %v4441 = vpop.permute.xlu0 %4440
      %v4444 = vsel %vm1151, %v3901, %v3947
      %v4445 = vsel %vm1151, %v3915, %v3949
      %v4446 = vsel %vm2693, %v4444, %v3981
      %v4447 = vsel %vm2693, %v4445, %v3983
      %v4448 = vsel %vm2742, %v4446, %v4015
      %v4449 = vsel %vm2742, %v4447, %v4017
      %vm4450 = vcmask 261120
      %v4451 = vsel %vm4450, %v4448, %v4049
      %v4452 = vsel %vm4450, %v4449, %v4051
      %vm4453 = vcmask 326656
      %v4454 = vsel %vm4453, %v4451, %v4083
      %v4455 = vsel %vm4453, %v4452, %v4085
      %vm4456 = vcmask 392192
      %v4457 = vsel %vm4456, %v4454, %v4117
      %v4458 = vsel %vm4456, %v4455, %v4119
      %vm4459 = vcmask 457728
      %v4460 = vsel %vm4459, %v4457, %v4151
      %v4461 = vsel %vm4459, %v4458, %v4153
      %vm4462 = vcmask 523264
      %v4463 = vsel %vm4462, %v4460, %v4201
      %v4464 = vsel %vm4462, %v4461, %v4203
      %vm4465 = vcmask 588800
      %v4466 = vsel %vm4465, %v4463, %v4235
      %v4467 = vsel %vm4465, %v4464, %v4237
      %vm4468 = vcmask 654336
      %v4469 = vsel %vm4468, %v4466, %v4269
      %v4470 = vsel %vm4468, %v4467, %v4271
      %vm4471 = vcmask 719872
      %v4472 = vsel %vm4471, %v4469, %v4303
      %v4473 = vsel %vm4471, %v4470, %v4305
      %vm4474 = vcmask 785408
      %v4475 = vsel %vm4474, %v4472, %v4337
      %v4476 = vsel %vm4474, %v4473, %v4339
      %vm4477 = vcmask 850944
      %v4478 = vsel %vm4477, %v4475, %v4371
      %v4479 = vsel %vm4477, %v4476, %v4373
      %vm4480 = vcmask 916480
      %v4481 = vsel %vm4480, %v4478, %v4405
      %v4482 = vsel %vm4480, %v4479, %v4407
      %vm4483 = vcmask 982016
      %v4484 = vsel %vm4483, %v4481, %v4439
      %v4485 = vsel %vm4483, %v4482, %v4441
      %4486 = vst [vmem:[%s332] sm:$0xff] %v4484
      %4487 = vst [vmem:[%s332 + $0x8] sm:$0xff] %v4485
      %p4488 = scmp.lt.s32.totalorder %s20, 1
      %s4489 = scalar_select %p4488, %s20, 1
      %s4490 = smul.addr %s4489, 2
      %s4491 = smul.addr %s4490, 8
      %s4492 = scalar_lea.vmem %s9, %s4491
      // Predicated region
      $region57: #{resnet_block_forward.1} parent=55 // pred_check
        %p4493 = pneg %p232
      $region58: #{resnet_block_forward.1} parent=55 // pred_check_branch
        %4495 = sbr.rel (%p4493) target = $region60
      $region59: #{resnet_block_forward.1} parent=55 // pred_region
        _
      $region60: #{resnet_block_forward.1} parent=55 // pred_fallthru
        _
    $region56: #{resnet_block_forward.1} parent=5 // pred_fallthru
      _
    %p4496 = scmp.le.s32.totalorder 2, %s15
    // Predicated region
    $region61: #{resnet_block_forward.1} parent=5 // pred_check
      %p4497 = pneg %p4496
    $region62: #{resnet_block_forward.1} parent=5 // pred_check_branch
      %4499 = sbr.rel (%p4497) target = $region64
    $region63: #{resnet_block_forward.1} parent=5 // pred_region
      %s4500 = ssub.s32 %s15, 2
      // Predicated region
      $region65: #{resnet_block_forward.1} parent=63 // pred_check
        %p4501 = pneg %p238
      $region66: #{resnet_block_forward.1} parent=63 // pred_check_branch
        %4503 = sbr.rel (%p4501) target = $region68
      $region67: #{resnet_block_forward.1} parent=63 // pred_region
        %p4504 = scmp.lt.s32.totalorder %s21, 1
        %s4505 = scalar_select %p4504, %s21, 1
        %s4506 = smul.addr %s4505, 2
        %s4507 = smul.addr %s4506, 8
        %s4508 = scalar_lea.vmem %s9, %s4507
      $region68: #{resnet_block_forward.1} parent=63 // pred_fallthru
        _
    $region64: #{resnet_block_forward.1} parent=5 // pred_fallthru
      _
  $region6: #{resnet_block_forward.1} parent=0 // loop_footer
    %s19 = sadd.s32 1, %s15
  $region7: #{resnet_block_forward.1} parent=0 // loop_footer_branch
    %14 = sbr.rel target = $region3
  $region8: #{resnet_block_forward.1} parent=0 // loop_exit
    _

</llo_original>
